<compile_context>
chip_gen: v5e
topology: v5e:2x2
jax: 0.10.0
libtpu: 0.0.40
codegen_flags: <defaults>
</compile_context>

<pallas_src>
import jax
import jax.numpy as jnp
from jax.experimental import pallas as pl
from jax.experimental.pallas import tpu as pltpu


D_IN = 784  # flattened 28x28 MNIST


def skip_ae_kernel(x_ref,
                   w1_ref, b1_ref,
                   w2_ref, b2_ref,
                   w34_ref, b34_ref,
                   w5_ref, b5_ref,
                   w6_ref, b6_ref,
                   o_ref):
    cd = w1_ref.dtype                       # matmul operand dtype (bf16 or f32)
    x = x_ref[...].astype(cd)                                        # (tb, 784)

    # encoder
    x1 = jnp.maximum(
        jnp.dot(x, w1_ref[...], preferred_element_type=jnp.float32)
        + b1_ref[...], 0.0)                                          # (tb, 256)
    x2 = jnp.maximum(
        jnp.dot(x1.astype(cd), w2_ref[...], preferred_element_type=jnp.float32)
        + b2_ref[...], 0.0)                                          # (tb, 128)

    # fused encoder_3 + decoder_1 (exact: no nonlinearity between them),
    # then first skip connection.
    d1 = jnp.maximum(
        jnp.dot(x2.astype(cd), w34_ref[...], preferred_element_type=jnp.float32)
        + b34_ref[...], 0.0) + x2                                    # (tb, 128)

    # decoder with second skip connection
    d2 = jnp.maximum(
        jnp.dot(d1.astype(cd), w5_ref[...], preferred_element_type=jnp.float32)
        + b5_ref[...], 0.0) + x1                                     # (tb, 256)
    logits = (jnp.dot(d2.astype(cd), w6_ref[...],
                      preferred_element_type=jnp.float32)
              + b6_ref[...])                                         # (tb, 784)

    # sigmoid(z) == 0.5 * (tanh(z/2) + 1): single EUP op per vreg.
    o_ref[...] = (0.5 * (jnp.tanh(0.5 * logits) + 1.0)).astype(o_ref.dtype)


def _prepare_params(params, compute_dtype):
    """Fuse the 128->10->128 pair; cast matmul operands, keep biases in f32."""
    (w1, b1, w2, b2, w3, b3, w4, b4, w5, b5, w6, b6) = params

    # exact algebraic fusion of encoder_3 and decoder_1 (done in f32)
    w34 = w3 @ w4                  # (128, 128)
    b34 = b3 @ w4 + b4             # (1, 128)

    weights = [w1.astype(compute_dtype), w2.astype(compute_dtype),
               w34.astype(compute_dtype), w5.astype(compute_dtype),
               w6.astype(compute_dtype)]
    biases = [b1, b2, b34, b5, b6]          # biases stay f32
    return weights, biases


def _pick_tb(B):
    """Largest power-of-two tile (<=512) dividing B that leaves >= 2 grid
    steps (DMA/compute overlap + v7x dual-TensorCore sharding)."""
    tb = B
    for t in (512, 256, 128, 64, 32, 16, 8):
        if B % t == 0:
            tb = t
            if B // t >= 2:
                break
    return tb


def skip_ae_forward(x, params, *, tb=None,
                    compute_dtype=jnp.bfloat16, out_dtype=jnp.float32):
    B, d = x.shape
    assert d == D_IN, "expected flattened 28x28 MNIST input"
    if tb is None:
        tb = _pick_tb(B)
    assert B % tb == 0 and (tb % 8 == 0 or tb == B), "bad batch tile"

    weights, biases = _prepare_params(params, compute_dtype)

    args = [x]
    in_specs = [pl.BlockSpec((tb, D_IN), lambda i: (i, 0))]
    for w, b in zip(weights, biases):
        args += [w, b]
        # constant index_map: whole weight/bias stays resident in VMEM
        in_specs += [pl.BlockSpec(w.shape, lambda i: (0, 0)),
                     pl.BlockSpec(b.shape, lambda i: (0, 0))]

    flops = 2 * B * sum(int(w.shape[0]) * int(w.shape[1]) for w in weights)
    bytes_accessed = (x.size * x.dtype.itemsize                       # input
                      + B * D_IN * jnp.dtype(out_dtype).itemsize      # output
                      + sum(a.size * a.dtype.itemsize for a in args[1:]))

    return pl.pallas_call(
        skip_ae_kernel,
        out_shape=jax.ShapeDtypeStruct((B, D_IN), out_dtype),
        grid=(B // tb,),
        in_specs=in_specs,
        out_specs=pl.BlockSpec((tb, D_IN), lambda i: (i, 0)),
        compiler_params=pltpu.CompilerParams(
            dimension_semantics=("parallel",)),
        cost_estimate=pl.CostEstimate(
            flops=flops,
            transcendentals=B * D_IN,        # one tanh per output element
            bytes_accessed=bytes_accessed),
    )(*args)


def init_params(key):
    """Deterministic init mimicking PyTorch Linear default (uniform +-1/sqrt(fan_in)).
    Weights stored as (in, out); biases as (1, out)."""
    dims = [(784, 256), (256, 128), (128, 10), (10, 128), (128, 256), (256, 784)]
    params = []
    keys = jax.random.split(key, 2 * len(dims))
    for li, (fan_in, fan_out) in enumerate(dims):
        bound = 1.0 / (fan_in ** 0.5)
        w = jax.random.uniform(keys[2 * li], (fan_in, fan_out),
                               minval=-bound, maxval=bound, dtype=jnp.float32)
        b = jax.random.uniform(keys[2 * li + 1], (1, fan_out),
                               minval=-bound, maxval=bound, dtype=jnp.float32)
        params.extend([w, b])
    return tuple(params)


def skip_ae_reference(x, params):
    """Unfused f32 reference matching the PyTorch forward exactly."""
    (w1, b1, w2, b2, w3, b3, w4, b4, w5, b5, w6, b6) = params
    x1 = jax.nn.relu(x @ w1 + b1)
    x2 = jax.nn.relu(x1 @ w2 + b2)
    encoded = x2 @ w3 + b3
    d1 = jax.nn.relu(encoded @ w4 + b4) + x2
    d2 = jax.nn.relu(d1 @ w5 + b5) + x1
    return jax.nn.sigmoid(d2 @ w6 + b6)


if __name__ == "__main__":
    key = jax.random.PRNGKey(0)
    k_x, k_p = jax.random.split(key)

    B = 256                          # small smoke-test batch; grid=(2,) with tb=128
    x = jax.random.uniform(k_x, (B, 784), dtype=jnp.float32)
    params = init_params(k_p)

    ref = skip_ae_reference(x, params)

    # f32 matmul path: tight check (fusion is exact up to fp reassociation)
    out_f32 = jax.block_until_ready(
        skip_ae_forward(x, params, compute_dtype=jnp.float32))
    assert out_f32.shape == (B, 784)
    assert jnp.allclose(out_f32, ref, atol=1e-4, rtol=1e-4), "f32 mismatch vs reference"

    # default bf16 matmul-operand path (fast MXU); loose tolerance
    out = jax.block_until_ready(skip_ae_forward(x, params))
    assert out.shape == (B, 784)
    assert float(jnp.max(jnp.abs(out - ref))) < 1e-1, "bf16 mismatch vs reference"

    print("KERNEL_OK")
</pallas_src>

<mosaic_0001>
module attributes {stable_mosaic.version = 11 : i64} {
  func.func @skip_ae_kernel(%arg0: i32, %arg1: memref<128x784xf32, #tpu.memory_space<vmem>>, %arg2: memref<784x256xf32, #tpu.memory_space<vmem>>, %arg3: memref<1x256xf32, #tpu.memory_space<vmem>>, %arg4: memref<256x128xf32, #tpu.memory_space<vmem>>, %arg5: memref<1x128xf32, #tpu.memory_space<vmem>>, %arg6: memref<128x128xf32, #tpu.memory_space<vmem>>, %arg7: memref<1x128xf32, #tpu.memory_space<vmem>>, %arg8: memref<128x256xf32, #tpu.memory_space<vmem>>, %arg9: memref<1x256xf32, #tpu.memory_space<vmem>>, %arg10: memref<256x784xf32, #tpu.memory_space<vmem>>, %arg11: memref<1x784xf32, #tpu.memory_space<vmem>>, %arg12: memref<128x784xf32, #tpu.memory_space<vmem>>) attributes {dimension_semantics = [#tpu.dimension_semantics<parallel>], iteration_bounds = array<i64: 2>, scalar_prefetch = 0 : i64, scratch_operands = 0 : i64, tpu.core_type = #tpu.core_type<tc>, window_params = [{transform_indices = @transform_0, window_bounds = array<i64: 128, 784>}, {pipeline_mode = #tpu.pipeline_mode<synchronous>, transform_indices = @transform_1, window_bounds = array<i64: 784, 256>}, {pipeline_mode = #tpu.pipeline_mode<synchronous>, transform_indices = @transform_2, window_bounds = array<i64: 1, 256>}, {pipeline_mode = #tpu.pipeline_mode<synchronous>, transform_indices = @transform_3, window_bounds = array<i64: 256, 128>}, {pipeline_mode = #tpu.pipeline_mode<synchronous>, transform_indices = @transform_4, window_bounds = array<i64: 1, 128>}, {pipeline_mode = #tpu.pipeline_mode<synchronous>, transform_indices = @transform_5, window_bounds = array<i64: 128, 128>}, {pipeline_mode = #tpu.pipeline_mode<synchronous>, transform_indices = @transform_6, window_bounds = array<i64: 1, 128>}, {pipeline_mode = #tpu.pipeline_mode<synchronous>, transform_indices = @transform_7, window_bounds = array<i64: 128, 256>}, {pipeline_mode = #tpu.pipeline_mode<synchronous>, transform_indices = @transform_8, window_bounds = array<i64: 1, 256>}, {pipeline_mode = #tpu.pipeline_mode<synchronous>, transform_indices = @transform_9, window_bounds = array<i64: 256, 784>}, {pipeline_mode = #tpu.pipeline_mode<synchronous>, transform_indices = @transform_10, window_bounds = array<i64: 1, 784>}, {transform_indices = @transform_11, window_bounds = array<i64: 128, 784>}]} {
    %c0 = arith.constant 0 : index
    %c0_0 = arith.constant 0 : index
    %0 = vector.load %arg1[%c0, %c0_0] : memref<128x784xf32, #tpu.memory_space<vmem>>, vector<128x784xf32>
    %c0_1 = arith.constant 0 : index
    %c0_2 = arith.constant 0 : index
    %1 = vector.load %arg2[%c0_1, %c0_2] : memref<784x256xf32, #tpu.memory_space<vmem>>, vector<784x256xf32>
    %cst = arith.constant dense<0.000000e+00> : vector<128x256xf32>
    %2 = tpu.matmul %0, %1, %cst {dimension_numbers = #tpu.dot_dimension_numbers<[1], [0], [0], [1], [0, 0, 1, 1], [], []>} : vector<128x784xf32>, vector<784x256xf32>, vector<128x256xf32> -> vector<128x256xf32>
    %c0_3 = arith.constant 0 : index
    %c0_4 = arith.constant 0 : index
    %3 = vector.load %arg3[%c0_3, %c0_4] : memref<1x256xf32, #tpu.memory_space<vmem>>, vector<1x256xf32>
    %4 = vector.broadcast %3 : vector<1x256xf32> to vector<128x256xf32>
    %5 = arith.addf %2, %4 : vector<128x256xf32>
    %cst_5 = arith.constant 0.000000e+00 : f32
    %6 = vector.broadcast %cst_5 : f32 to vector<128x256xf32>
    %7 = arith.maximumf %5, %6 : vector<128x256xf32>
    %c0_6 = arith.constant 0 : index
    %c0_7 = arith.constant 0 : index
    %8 = vector.load %arg4[%c0_6, %c0_7] : memref<256x128xf32, #tpu.memory_space<vmem>>, vector<256x128xf32>
    %cst_8 = arith.constant dense<0.000000e+00> : vector<128x128xf32>
    %9 = tpu.matmul %7, %8, %cst_8 {dimension_numbers = #tpu.dot_dimension_numbers<[1], [0], [0], [1], [0, 0, 1, 1], [], []>} : vector<128x256xf32>, vector<256x128xf32>, vector<128x128xf32> -> vector<128x128xf32>
    %c0_9 = arith.constant 0 : index
    %c0_10 = arith.constant 0 : index
    %10 = vector.load %arg5[%c0_9, %c0_10] : memref<1x128xf32, #tpu.memory_space<vmem>>, vector<1x128xf32>
    %11 = vector.broadcast %10 : vector<1x128xf32> to vector<128x128xf32>
    %12 = arith.addf %9, %11 : vector<128x128xf32>
    %cst_11 = arith.constant 0.000000e+00 : f32
    %13 = vector.broadcast %cst_11 : f32 to vector<128x128xf32>
    %14 = arith.maximumf %12, %13 : vector<128x128xf32>
    %c0_12 = arith.constant 0 : index
    %c0_13 = arith.constant 0 : index
    %15 = vector.load %arg6[%c0_12, %c0_13] : memref<128x128xf32, #tpu.memory_space<vmem>>, vector<128x128xf32>
    %cst_14 = arith.constant dense<0.000000e+00> : vector<128x128xf32>
    %16 = tpu.matmul %14, %15, %cst_14 {dimension_numbers = #tpu.dot_dimension_numbers<[1], [0], [0], [1], [0, 0, 1, 1], [], []>} : vector<128x128xf32>, vector<128x128xf32>, vector<128x128xf32> -> vector<128x128xf32>
    %c0_15 = arith.constant 0 : index
    %c0_16 = arith.constant 0 : index
    %17 = vector.load %arg7[%c0_15, %c0_16] : memref<1x128xf32, #tpu.memory_space<vmem>>, vector<1x128xf32>
    %18 = vector.broadcast %17 : vector<1x128xf32> to vector<128x128xf32>
    %19 = arith.addf %16, %18 : vector<128x128xf32>
    %cst_17 = arith.constant 0.000000e+00 : f32
    %20 = vector.broadcast %cst_17 : f32 to vector<128x128xf32>
    %21 = arith.maximumf %19, %20 : vector<128x128xf32>
    %22 = arith.addf %21, %14 : vector<128x128xf32>
    %c0_18 = arith.constant 0 : index
    %c0_19 = arith.constant 0 : index
    %23 = vector.load %arg8[%c0_18, %c0_19] : memref<128x256xf32, #tpu.memory_space<vmem>>, vector<128x256xf32>
    %cst_20 = arith.constant dense<0.000000e+00> : vector<128x256xf32>
    %24 = tpu.matmul %22, %23, %cst_20 {dimension_numbers = #tpu.dot_dimension_numbers<[1], [0], [0], [1], [0, 0, 1, 1], [], []>} : vector<128x128xf32>, vector<128x256xf32>, vector<128x256xf32> -> vector<128x256xf32>
    %c0_21 = arith.constant 0 : index
    %c0_22 = arith.constant 0 : index
    %25 = vector.load %arg9[%c0_21, %c0_22] : memref<1x256xf32, #tpu.memory_space<vmem>>, vector<1x256xf32>
    %26 = vector.broadcast %25 : vector<1x256xf32> to vector<128x256xf32>
    %27 = arith.addf %24, %26 : vector<128x256xf32>
    %cst_23 = arith.constant 0.000000e+00 : f32
    %28 = vector.broadcast %cst_23 : f32 to vector<128x256xf32>
    %29 = arith.maximumf %27, %28 : vector<128x256xf32>
    %30 = arith.addf %29, %7 : vector<128x256xf32>
    %c0_24 = arith.constant 0 : index
    %c0_25 = arith.constant 0 : index
    %31 = vector.load %arg10[%c0_24, %c0_25] : memref<256x784xf32, #tpu.memory_space<vmem>>, vector<256x784xf32>
    %cst_26 = arith.constant dense<0.000000e+00> : vector<128x784xf32>
    %32 = tpu.matmul %30, %31, %cst_26 {dimension_numbers = #tpu.dot_dimension_numbers<[1], [0], [0], [1], [0, 0, 1, 1], [], []>} : vector<128x256xf32>, vector<256x784xf32>, vector<128x784xf32> -> vector<128x784xf32>
    %c0_27 = arith.constant 0 : index
    %c0_28 = arith.constant 0 : index
    %33 = vector.load %arg11[%c0_27, %c0_28] : memref<1x784xf32, #tpu.memory_space<vmem>>, vector<1x784xf32>
    %34 = vector.broadcast %33 : vector<1x784xf32> to vector<128x784xf32>
    %35 = arith.addf %32, %34 : vector<128x784xf32>
    %cst_29 = arith.constant 5.000000e-01 : f32
    %36 = vector.broadcast %cst_29 : f32 to vector<128x784xf32>
    %37 = arith.mulf %36, %35 : vector<128x784xf32>
    %38 = math.tanh %37 : vector<128x784xf32>
    %cst_30 = arith.constant 1.000000e+00 : f32
    %39 = vector.broadcast %cst_30 : f32 to vector<128x784xf32>
    %40 = arith.addf %38, %39 : vector<128x784xf32>
    %cst_31 = arith.constant 5.000000e-01 : f32
    %41 = vector.broadcast %cst_31 : f32 to vector<128x784xf32>
    %42 = arith.mulf %41, %40 : vector<128x784xf32>
    %c0_32 = arith.constant 0 : index
    %c0_33 = arith.constant 0 : index
    %43 = vector.load %arg12[%c0_32, %c0_33] : memref<128x784xf32, #tpu.memory_space<vmem>>, vector<128x784xf32>
    tpu.vector_store %arg12[%c0_32, %c0_33], %42 {strides = array<i32>} : memref<128x784xf32, #tpu.memory_space<vmem>>, vector<128x784xf32>,
    return
  }
  func.func @transform_0(%arg0: i32) -> (i32, i32) {
    %c0_i32 = arith.constant 0 : i32
    %c0_i32_0 = arith.constant 0 : i32
    return %arg0, %c0_i32 : i32, i32
  }
  func.func @transform_1(%arg0: i32) -> (i32, i32) {
    %c0_i32 = arith.constant 0 : i32
    %c0_i32_0 = arith.constant 0 : i32
    %c0_i32_1 = arith.constant 0 : i32
    return %c0_i32, %c0_i32_0 : i32, i32
  }
  func.func @transform_2(%arg0: i32) -> (i32, i32) {
    %c0_i32 = arith.constant 0 : i32
    %c0_i32_0 = arith.constant 0 : i32
    %c0_i32_1 = arith.constant 0 : i32
    return %c0_i32, %c0_i32_0 : i32, i32
  }
  func.func @transform_3(%arg0: i32) -> (i32, i32) {
    %c0_i32 = arith.constant 0 : i32
    %c0_i32_0 = arith.constant 0 : i32
    %c0_i32_1 = arith.constant 0 : i32
    return %c0_i32, %c0_i32_0 : i32, i32
  }
  func.func @transform_4(%arg0: i32) -> (i32, i32) {
    %c0_i32 = arith.constant 0 : i32
    %c0_i32_0 = arith.constant 0 : i32
    %c0_i32_1 = arith.constant 0 : i32
    return %c0_i32, %c0_i32_0 : i32, i32
  }
  func.func @transform_5(%arg0: i32) -> (i32, i32) {
    %c0_i32 = arith.constant 0 : i32
    %c0_i32_0 = arith.constant 0 : i32
    %c0_i32_1 = arith.constant 0 : i32
    return %c0_i32, %c0_i32_0 : i32, i32
  }
  func.func @transform_6(%arg0: i32) -> (i32, i32) {
    %c0_i32 = arith.constant 0 : i32
    %c0_i32_0 = arith.constant 0 : i32
    %c0_i32_1 = arith.constant 0 : i32
    return %c0_i32, %c0_i32_0 : i32, i32
  }
  func.func @transform_7(%arg0: i32) -> (i32, i32) {
    %c0_i32 = arith.constant 0 : i32
    %c0_i32_0 = arith.constant 0 : i32
    %c0_i32_1 = arith.constant 0 : i32
    return %c0_i32, %c0_i32_0 : i32, i32
  }
  func.func @transform_8(%arg0: i32) -> (i32, i32) {
    %c0_i32 = arith.constant 0 : i32
    %c0_i32_0 = arith.constant 0 : i32
    %c0_i32_1 = arith.constant 0 : i32
    return %c0_i32, %c0_i32_0 : i32, i32
  }
  func.func @transform_9(%arg0: i32) -> (i32, i32) {
    %c0_i32 = arith.constant 0 : i32
    %c0_i32_0 = arith.constant 0 : i32
    %c0_i32_1 = arith.constant 0 : i32
    return %c0_i32, %c0_i32_0 : i32, i32
  }
  func.func @transform_10(%arg0: i32) -> (i32, i32) {
    %c0_i32 = arith.constant 0 : i32
    %c0_i32_0 = arith.constant 0 : i32
    %c0_i32_1 = arith.constant 0 : i32
    return %c0_i32, %c0_i32_0 : i32, i32
  }
  func.func @transform_11(%arg0: i32) -> (i32, i32) {
    %c0_i32 = arith.constant 0 : i32
    %c0_i32_0 = arith.constant 0 : i32
    return %arg0, %c0_i32 : i32, i32
  }
}

</mosaic_0001>

<llo_original>
// kernel: tpu_custom_call.1
$region0: #{tpu_custom_call.1}
  #allocation0 [shape = 'u32[]', space=smem, size = 0x4, offset = 0x4, fixed_abs, tag = 'smem constant byte address 0x4 - core index']
  #allocation1 [shape = 'u32[72,128]{1,0:T(1,128)}', space=vmem, size = 0x9000, scoped, tag = 'internal scratch']
  %s0 = inlined_call_operand.vmem [shape: f32[256,784], index: 0, kind: input, shape index: {}]
  %s1 = inlined_call_operand.vmem [shape: f32[784,256], index: 1, kind: input, shape index: {}]
  %s2 = inlined_call_operand.vmem [shape: f32[1,256], index: 2, kind: input, shape index: {}]
  %s3 = inlined_call_operand.vmem [shape: f32[256,128], index: 3, kind: input, shape index: {}]
  %s4 = inlined_call_operand.vmem [shape: f32[1,128], index: 4, kind: input, shape index: {}]
  %s5 = inlined_call_operand.vmem [shape: f32[128,128], index: 5, kind: input, shape index: {}]
  %s6 = inlined_call_operand.vmem [shape: f32[1,128], index: 6, kind: input, shape index: {}]
  %s7 = inlined_call_operand.vmem [shape: f32[128,256], index: 7, kind: input, shape index: {}]
  %s8 = inlined_call_operand.vmem [shape: f32[1,256], index: 8, kind: input, shape index: {}]
  %s9 = inlined_call_operand.vmem [shape: f32[256,784], index: 9, kind: input, shape index: {}]
  %s10 = inlined_call_operand.vmem [shape: f32[1,784], index: 10, kind: input, shape index: {}]
  %s11 = inlined_call_operand.vmem [shape: f32[256,784], index: 11, kind: output, shape index: {}]
  %s12 = sld [smem:[#allocation0]]
  $region77: #{tpu_custom_call.1} parent=0
    _
  %s14 = ssub.s32 1, %s12
  %s15 = scalar_select 0, %s14, %s12
  loop: start=0, step=1, limit=4
  $region2: #{tpu_custom_call.1} parent=0 // loop_pre_header
    _
  $region3: #{tpu_custom_call.1} parent=0 // loop_header
    %s17 = sphi 0, %s21
    %p18 = scmp.ge.s32.totalorder %s17, 4
    %s27 = sphi 0, %s29
    %s30 = sphi 0, %s27
    %s31 = sphi 0, %s30
    %s47 = sphi 0, %s31
    %s51 = sphi 0, %s51
    %s53 = sphi 0, %s51
    %s54 = sphi 0, %s53
    %s68 = sphi 0, %s54
    %s72 = sphi 0, %s72
    %s74 = sphi 0, %s72
    %s75 = sphi 0, %s74
    %s89 = sphi 0, %s75
    %s93 = sphi 0, %s93
    %s95 = sphi 0, %s93
    %s96 = sphi 0, %s95
    %s110 = sphi 0, %s96
    %s114 = sphi 0, %s114
    %s116 = sphi 0, %s114
    %s117 = sphi 0, %s116
    %s131 = sphi 0, %s117
    %s135 = sphi 0, %s135
    %s137 = sphi 0, %s135
    %s138 = sphi 0, %s137
    %s152 = sphi 0, %s138
    %s156 = sphi 0, %s156
    %s158 = sphi 0, %s156
    %s159 = sphi 0, %s158
    %s173 = sphi 0, %s159
    %s177 = sphi 0, %s177
    %s179 = sphi 0, %s177
    %s180 = sphi 0, %s179
    %s194 = sphi 0, %s180
    %s198 = sphi 0, %s198
    %s200 = sphi 0, %s198
    %s201 = sphi 0, %s200
    %s215 = sphi 0, %s201
    %s219 = sphi 0, %s219
    %s221 = sphi 0, %s219
    %s222 = sphi 0, %s221
    %s236 = sphi 0, %s222
    %s240 = sphi 0, %s240
    %s242 = sphi 0, %s240
    %s243 = sphi 0, %s242
    %s257 = sphi 0, %s243
    %s263 = sphi 0, %s265
    %s266 = sphi 0, %s263
    %s267 = sphi 0, %s266
    %s283 = sphi 0, %s267
  $region4: #{tpu_custom_call.1} parent=0 // loop_header_branch
    %20 = sbr.rel (%p18) target = $region8
  $region5: #{tpu_custom_call.1} parent=0 // loop_body
    %s22 = ssub.s32 %s17, 1
    %s23 = ssub.s32 %s17, 2
    %s24 = sadd.s32 %s17, 1
    %s25 = ssub.s32 %s17, %s24
    %p26 = scmp.eq.s32.totalorder %s25, 0
    %s28 = sadd.s32 %s27, 1
    %s29 = scalar_select %p26, %s27, %s28
    %p32 = pneg %p26
    %p33 = scmp.eq.s32.totalorder %s17, 1
    %p34 = por %p32, %p33
    %p35 = scmp.ne.s32.totalorder %s27, %s30
    %p36 = scmp.eq.s32.totalorder %s17, 0
    %p37 = por %p35, %p36
    %p38 = scmp.ne.s32.totalorder %s27, %s30
    %p39 = scmp.eq.s32.totalorder %s22, 1
    %p40 = por %p38, %p39
    %p41 = scmp.ne.s32.totalorder %s30, %s31
    %p42 = scmp.eq.s32.totalorder %s22, 0
    %p43 = por %p41, %p42
    %p44 = scmp.ne.s32.totalorder %s30, %s31
    %p45 = scmp.eq.s32.totalorder %s23, 1
    %p46 = por %p44, %p45
    %p48 = scmp.ne.s32.totalorder %s31, %s47
    %p49 = scmp.eq.s32.totalorder %s23, 0
    %p50 = por %p48, %p49
    %s52 = sadd.s32 %s51, 1
    %p55 = scmp.eq.s32.totalorder %s17, 1
    %p56 = scmp.ne.s32.totalorder %s51, %s53
    %p57 = scmp.eq.s32.totalorder %s17, 0
    %p58 = por %p56, %p57
    %p59 = scmp.ne.s32.totalorder %s51, %s53
    %p60 = scmp.eq.s32.totalorder %s22, 1
    %p61 = por %p59, %p60
    %p62 = scmp.ne.s32.totalorder %s53, %s54
    %p63 = scmp.eq.s32.totalorder %s22, 0
    %p64 = por %p62, %p63
    %p65 = scmp.ne.s32.totalorder %s53, %s54
    %p66 = scmp.eq.s32.totalorder %s23, 1
    %p67 = por %p65, %p66
    %p69 = scmp.ne.s32.totalorder %s54, %s68
    %p70 = scmp.eq.s32.totalorder %s23, 0
    %p71 = por %p69, %p70
    %s73 = sadd.s32 %s72, 1
    %p76 = scmp.eq.s32.totalorder %s17, 1
    %p77 = scmp.ne.s32.totalorder %s72, %s74
    %p78 = scmp.eq.s32.totalorder %s17, 0
    %p79 = por %p77, %p78
    %p80 = scmp.ne.s32.totalorder %s72, %s74
    %p81 = scmp.eq.s32.totalorder %s22, 1
    %p82 = por %p80, %p81
    %p83 = scmp.ne.s32.totalorder %s74, %s75
    %p84 = scmp.eq.s32.totalorder %s22, 0
    %p85 = por %p83, %p84
    %p86 = scmp.ne.s32.totalorder %s74, %s75
    %p87 = scmp.eq.s32.totalorder %s23, 1
    %p88 = por %p86, %p87
    %p90 = scmp.ne.s32.totalorder %s75, %s89
    %p91 = scmp.eq.s32.totalorder %s23, 0
    %p92 = por %p90, %p91
    %s94 = sadd.s32 %s93, 1
    %p97 = scmp.eq.s32.totalorder %s17, 1
    %p98 = scmp.ne.s32.totalorder %s93, %s95
    %p99 = scmp.eq.s32.totalorder %s17, 0
    %p100 = por %p98, %p99
    %p101 = scmp.ne.s32.totalorder %s93, %s95
    %p102 = scmp.eq.s32.totalorder %s22, 1
    %p103 = por %p101, %p102
    %p104 = scmp.ne.s32.totalorder %s95, %s96
    %p105 = scmp.eq.s32.totalorder %s22, 0
    %p106 = por %p104, %p105
    %p107 = scmp.ne.s32.totalorder %s95, %s96
    %p108 = scmp.eq.s32.totalorder %s23, 1
    %p109 = por %p107, %p108
    %p111 = scmp.ne.s32.totalorder %s96, %s110
    %p112 = scmp.eq.s32.totalorder %s23, 0
    %p113 = por %p111, %p112
    %s115 = sadd.s32 %s114, 1
    %p118 = scmp.eq.s32.totalorder %s17, 1
    %p119 = scmp.ne.s32.totalorder %s114, %s116
    %p120 = scmp.eq.s32.totalorder %s17, 0
    %p121 = por %p119, %p120
    %p122 = scmp.ne.s32.totalorder %s114, %s116
    %p123 = scmp.eq.s32.totalorder %s22, 1
    %p124 = por %p122, %p123
    %p125 = scmp.ne.s32.totalorder %s116, %s117
    %p126 = scmp.eq.s32.totalorder %s22, 0
    %p127 = por %p125, %p126
    %p128 = scmp.ne.s32.totalorder %s116, %s117
    %p129 = scmp.eq.s32.totalorder %s23, 1
    %p130 = por %p128, %p129
    %p132 = scmp.ne.s32.totalorder %s117, %s131
    %p133 = scmp.eq.s32.totalorder %s23, 0
    %p134 = por %p132, %p133
    %s136 = sadd.s32 %s135, 1
    %p139 = scmp.eq.s32.totalorder %s17, 1
    %p140 = scmp.ne.s32.totalorder %s135, %s137
    %p141 = scmp.eq.s32.totalorder %s17, 0
    %p142 = por %p140, %p141
    %p143 = scmp.ne.s32.totalorder %s135, %s137
    %p144 = scmp.eq.s32.totalorder %s22, 1
    %p145 = por %p143, %p144
    %p146 = scmp.ne.s32.totalorder %s137, %s138
    %p147 = scmp.eq.s32.totalorder %s22, 0
    %p148 = por %p146, %p147
    %p149 = scmp.ne.s32.totalorder %s137, %s138
    %p150 = scmp.eq.s32.totalorder %s23, 1
    %p151 = por %p149, %p150
    %p153 = scmp.ne.s32.totalorder %s138, %s152
    %p154 = scmp.eq.s32.totalorder %s23, 0
    %p155 = por %p153, %p154
    %s157 = sadd.s32 %s156, 1
    %p160 = scmp.eq.s32.totalorder %s17, 1
    %p161 = scmp.ne.s32.totalorder %s156, %s158
    %p162 = scmp.eq.s32.totalorder %s17, 0
    %p163 = por %p161, %p162
    %p164 = scmp.ne.s32.totalorder %s156, %s158
    %p165 = scmp.eq.s32.totalorder %s22, 1
    %p166 = por %p164, %p165
    %p167 = scmp.ne.s32.totalorder %s158, %s159
    %p168 = scmp.eq.s32.totalorder %s22, 0
    %p169 = por %p167, %p168
    %p170 = scmp.ne.s32.totalorder %s158, %s159
    %p171 = scmp.eq.s32.totalorder %s23, 1
    %p172 = por %p170, %p171
    %p174 = scmp.ne.s32.totalorder %s159, %s173
    %p175 = scmp.eq.s32.totalorder %s23, 0
    %p176 = por %p174, %p175
    %s178 = sadd.s32 %s177, 1
    %p181 = scmp.eq.s32.totalorder %s17, 1
    %p182 = scmp.ne.s32.totalorder %s177, %s179
    %p183 = scmp.eq.s32.totalorder %s17, 0
    %p184 = por %p182, %p183
    %p185 = scmp.ne.s32.totalorder %s177, %s179
    %p186 = scmp.eq.s32.totalorder %s22, 1
    %p187 = por %p185, %p186
    %p188 = scmp.ne.s32.totalorder %s179, %s180
    %p189 = scmp.eq.s32.totalorder %s22, 0
    %p190 = por %p188, %p189
    %p191 = scmp.ne.s32.totalorder %s179, %s180
    %p192 = scmp.eq.s32.totalorder %s23, 1
    %p193 = por %p191, %p192
    %p195 = scmp.ne.s32.totalorder %s180, %s194
    %p196 = scmp.eq.s32.totalorder %s23, 0
    %p197 = por %p195, %p196
    %s199 = sadd.s32 %s198, 1
    %p202 = scmp.eq.s32.totalorder %s17, 1
    %p203 = scmp.ne.s32.totalorder %s198, %s200
    %p204 = scmp.eq.s32.totalorder %s17, 0
    %p205 = por %p203, %p204
    %p206 = scmp.ne.s32.totalorder %s198, %s200
    %p207 = scmp.eq.s32.totalorder %s22, 1
    %p208 = por %p206, %p207
    %p209 = scmp.ne.s32.totalorder %s200, %s201
    %p210 = scmp.eq.s32.totalorder %s22, 0
    %p211 = por %p209, %p210
    %p212 = scmp.ne.s32.totalorder %s200, %s201
    %p213 = scmp.eq.s32.totalorder %s23, 1
    %p214 = por %p212, %p213
    %p216 = scmp.ne.s32.totalorder %s201, %s215
    %p217 = scmp.eq.s32.totalorder %s23, 0
    %p218 = por %p216, %p217
    %s220 = sadd.s32 %s219, 1
    %p223 = scmp.eq.s32.totalorder %s17, 1
    %p224 = scmp.ne.s32.totalorder %s219, %s221
    %p225 = scmp.eq.s32.totalorder %s17, 0
    %p226 = por %p224, %p225
    %p227 = scmp.ne.s32.totalorder %s219, %s221
    %p228 = scmp.eq.s32.totalorder %s22, 1
    %p229 = por %p227, %p228
    %p230 = scmp.ne.s32.totalorder %s221, %s222
    %p231 = scmp.eq.s32.totalorder %s22, 0
    %p232 = por %p230, %p231
    %p233 = scmp.ne.s32.totalorder %s221, %s222
    %p234 = scmp.eq.s32.totalorder %s23, 1
    %p235 = por %p233, %p234
    %p237 = scmp.ne.s32.totalorder %s222, %s236
    %p238 = scmp.eq.s32.totalorder %s23, 0
    %p239 = por %p237, %p238
    %s241 = sadd.s32 %s240, 1
    %p244 = scmp.eq.s32.totalorder %s17, 1
    %p245 = scmp.ne.s32.totalorder %s240, %s242
    %p246 = scmp.eq.s32.totalorder %s17, 0
    %p247 = por %p245, %p246
    %p248 = scmp.ne.s32.totalorder %s240, %s242
    %p249 = scmp.eq.s32.totalorder %s22, 1
    %p250 = por %p248, %p249
    %p251 = scmp.ne.s32.totalorder %s242, %s243
    %p252 = scmp.eq.s32.totalorder %s22, 0
    %p253 = por %p251, %p252
    %p254 = scmp.ne.s32.totalorder %s242, %s243
    %p255 = scmp.eq.s32.totalorder %s23, 1
    %p256 = por %p254, %p255
    %p258 = scmp.ne.s32.totalorder %s243, %s257
    %p259 = scmp.eq.s32.totalorder %s23, 0
    %p260 = por %p258, %p259
    %s261 = ssub.s32 %s17, %s24
    %p262 = scmp.eq.s32.totalorder %s261, 0
    %s264 = sadd.s32 %s263, 1
    %s265 = scalar_select %p262, %s263, %s264
    %p268 = pneg %p262
    %p269 = scmp.eq.s32.totalorder %s17, 1
    %p270 = por %p268, %p269
    %p271 = scmp.ne.s32.totalorder %s263, %s266
    %p272 = scmp.eq.s32.totalorder %s17, 0
    %p273 = por %p271, %p272
    %p274 = scmp.ne.s32.totalorder %s263, %s266
    %p275 = scmp.eq.s32.totalorder %s22, 1
    %p276 = por %p274, %p275
    %p277 = scmp.ne.s32.totalorder %s266, %s267
    %p278 = scmp.eq.s32.totalorder %s22, 0
    %p279 = por %p277, %p278
    %p280 = scmp.ne.s32.totalorder %s266, %s267
    %p281 = scmp.eq.s32.totalorder %s23, 1
    %p282 = por %p280, %p281
    %p284 = scmp.ne.s32.totalorder %s267, %s283
    %p285 = scmp.eq.s32.totalorder %s23, 0
    %p286 = por %p284, %p285
    %p287 = scmp.le.s32.totalorder 1, %s17
    %p288 = scmp.lt.s32.totalorder %s17, 3
    %p289 = pnand %p287, %p288
    %p290 = pneg %p289
    // Predicated region
    $region9: #{tpu_custom_call.1} parent=5 // pred_check
      _
    $region10: #{tpu_custom_call.1} parent=5 // pred_check_branch
      %292 = sbr.rel (%p289) target = $region12
    $region11: #{tpu_custom_call.1} parent=5 // pred_region
      %s293 = ssub.s32 %s17, 1
      // Predicated region
      $region13: #{tpu_custom_call.1} parent=11 // pred_check
        %p294 = pneg %p64
      $region14: #{tpu_custom_call.1} parent=11 // pred_check_branch
        %296 = sbr.rel (%p294) target = $region16
      $region15: #{tpu_custom_call.1} parent=11 // pred_region
        _
      $region16: #{tpu_custom_call.1} parent=11 // pred_fallthru
        _
      // Predicated region
      $region17: #{tpu_custom_call.1} parent=11 // pred_check
        %p297 = pneg %p85
      $region18: #{tpu_custom_call.1} parent=11 // pred_check_branch
        %299 = sbr.rel (%p297) target = $region20
      $region19: #{tpu_custom_call.1} parent=11 // pred_region
        _
      $region20: #{tpu_custom_call.1} parent=11 // pred_fallthru
        _
      // Predicated region
      $region21: #{tpu_custom_call.1} parent=11 // pred_check
        %p300 = pneg %p106
      $region22: #{tpu_custom_call.1} parent=11 // pred_check_branch
        %302 = sbr.rel (%p300) target = $region24
      $region23: #{tpu_custom_call.1} parent=11 // pred_region
        _
      $region24: #{tpu_custom_call.1} parent=11 // pred_fallthru
        _
      // Predicated region
      $region25: #{tpu_custom_call.1} parent=11 // pred_check
        %p303 = pneg %p127
      $region26: #{tpu_custom_call.1} parent=11 // pred_check_branch
        %305 = sbr.rel (%p303) target = $region28
      $region27: #{tpu_custom_call.1} parent=11 // pred_region
        _
      $region28: #{tpu_custom_call.1} parent=11 // pred_fallthru
        _
      // Predicated region
      $region29: #{tpu_custom_call.1} parent=11 // pred_check
        %p306 = pneg %p148
      $region30: #{tpu_custom_call.1} parent=11 // pred_check_branch
        %308 = sbr.rel (%p306) target = $region32
      $region31: #{tpu_custom_call.1} parent=11 // pred_region
        _
      $region32: #{tpu_custom_call.1} parent=11 // pred_fallthru
        _
      // Predicated region
      $region33: #{tpu_custom_call.1} parent=11 // pred_check
        %p309 = pneg %p169
      $region34: #{tpu_custom_call.1} parent=11 // pred_check_branch
        %311 = sbr.rel (%p309) target = $region36
      $region35: #{tpu_custom_call.1} parent=11 // pred_region
        _
      $region36: #{tpu_custom_call.1} parent=11 // pred_fallthru
        _
      // Predicated region
      $region37: #{tpu_custom_call.1} parent=11 // pred_check
        %p312 = pneg %p190
      $region38: #{tpu_custom_call.1} parent=11 // pred_check_branch
        %314 = sbr.rel (%p312) target = $region40
      $region39: #{tpu_custom_call.1} parent=11 // pred_region
        _
      $region40: #{tpu_custom_call.1} parent=11 // pred_fallthru
        _
      // Predicated region
      $region41: #{tpu_custom_call.1} parent=11 // pred_check
        %p315 = pneg %p211
      $region42: #{tpu_custom_call.1} parent=11 // pred_check_branch
        %317 = sbr.rel (%p315) target = $region44
      $region43: #{tpu_custom_call.1} parent=11 // pred_region
        _
      $region44: #{tpu_custom_call.1} parent=11 // pred_fallthru
        _
      // Predicated region
      $region45: #{tpu_custom_call.1} parent=11 // pred_check
        %p318 = pneg %p232
      $region46: #{tpu_custom_call.1} parent=11 // pred_check_branch
        %320 = sbr.rel (%p318) target = $region48
      $region47: #{tpu_custom_call.1} parent=11 // pred_region
        _
      $region48: #{tpu_custom_call.1} parent=11 // pred_fallthru
        _
      // Predicated region
      $region49: #{tpu_custom_call.1} parent=11 // pred_check
        %p321 = pneg %p253
      $region50: #{tpu_custom_call.1} parent=11 // pred_check_branch
        %323 = sbr.rel (%p321) target = $region52
      $region51: #{tpu_custom_call.1} parent=11 // pred_region
        _
      $region52: #{tpu_custom_call.1} parent=11 // pred_fallthru
        _
    $region12: #{tpu_custom_call.1} parent=5 // pred_fallthru
      _
    %p324 = scmp.lt.s32.totalorder %s17, 2
    // Predicated region
    $region53: #{tpu_custom_call.1} parent=5 // pred_check
      %p325 = pneg %p324
    $region54: #{tpu_custom_call.1} parent=5 // pred_check_branch
      %327 = sbr.rel (%p325) target = $region56
    $region55: #{tpu_custom_call.1} parent=5 // pred_region
      // Predicated region
      $region57: #{tpu_custom_call.1} parent=55 // pred_check
        %p328 = pneg %p37
      $region58: #{tpu_custom_call.1} parent=55 // pred_check_branch
        %330 = sbr.rel (%p328) target = $region60
      $region59: #{tpu_custom_call.1} parent=55 // pred_region
        %s331 = smul.u32 16, %s17
        %p332 = scmp.lt.s32.totalorder %s331, 31
        %s333 = scalar_select %p332, %s331, 31
        %s334 = smul.addr %s333, 7
        %s335 = smul.addr %s334, 8
        %s336 = scalar_lea.vmem %s0, %s335
        %s337 = smul.u32 16, %s17
      $region60: #{tpu_custom_call.1} parent=55 // pred_fallthru
        _
    $region56: #{tpu_custom_call.1} parent=5 // pred_fallthru
      _
    %p338 = scmp.le.s32.totalorder 1, %s17
    %p339 = scmp.lt.s32.totalorder %s17, 3
    %p340 = pnand %p338, %p339
    %p341 = pneg %p340
    // Predicated region
    $region61: #{tpu_custom_call.1} parent=5 // pred_check
      _
    $region62: #{tpu_custom_call.1} parent=5 // pred_check_branch
      %343 = sbr.rel (%p340) target = $region64
    $region63: #{tpu_custom_call.1} parent=5 // pred_region
      %s344 = ssub.s32 %s17, 1
      %s345 = smul.u32 16, %s22
      %p346 = scmp.lt.s32.totalorder %s345, 31
      %s347 = scalar_select %p346, %s345, 31
      %s348 = smul.addr %s347, 7
      %s349 = smul.addr %s348, 8
      %s350 = scalar_lea.vmem %s0, %s349
      %p351 = pneg %p43
      %p352 = pneg %p40
      %p353 = pneg %p64
      %p354 = pneg %p61
      %p355 = pneg %p85
      %p356 = pneg %p82
      %p357 = pneg %p106
      %p358 = pneg %p103
      %p359 = pneg %p127
      %p360 = pneg %p124
      %p361 = pneg %p148
      %p362 = pneg %p145
      %p363 = pneg %p169
      %p364 = pneg %p166
      %p365 = pneg %p190
      %p366 = pneg %p187
      %p367 = pneg %p211
      %p368 = pneg %p208
      %p369 = pneg %p232
      %p370 = pneg %p229
      %p371 = pneg %p253
      %p372 = pneg %p250
      %p373 = pneg %p279
      %p374 = pneg %p276
      %s375 = smul.u32 16, %s22
      %p376 = scmp.lt.s32.totalorder %s375, 31
      %s377 = scalar_select %p376, %s375, 31
      %s378 = smul.addr %s377, 7
      %s379 = smul.addr %s378, 8
      %s380 = scalar_lea.vmem %s11, %s379
      %s381 = smul.u32 16, %s22
      %p382 = scmp.lt.s32.totalorder %s381, 31
      %s383 = scalar_select %p382, %s381, 31
      %s384 = smul.addr %s383, 7
      %s385 = smul.addr %s384, 8
      %s386 = scalar_lea.vmem %s0, %s385
      %s387 = smul.u32 16, %s22
      %s388 = smul.u32 16, %s22
      %p389 = scmp.lt.s32.totalorder %s388, 31
      %s390 = scalar_select %p389, %s388, 31
      %s391 = smul.addr %s390, 7
      %s392 = smul.addr %s391, 8
      %s393 = scalar_lea.vmem %s11, %s392
      %s394 = smul.u32 16, %s22
      %v395 = vld [vmem:[%s386] sm:$0xff]
      %v396 = vld [vmem:[%s386 + $0x8] sm:$0xff]
      %v397 = vld [vmem:[%s386 + $0x10] sm:$0xff]
      %v398 = vld [vmem:[%s386 + $0x18] sm:$0xff]
      %v399 = vld [vmem:[%s386 + $0x20] sm:$0xff]
      %v400 = vld [vmem:[%s386 + $0x28] sm:$0xff]
      %v401 = vld [vmem:[%s386 + $0x30] sm:$0xff]
      %v402 = vld [vmem:[%s386 + $0x38] sm:$0xff]
      %v403 = vld [vmem:[%s386 + $0x40] sm:$0xff]
      %v404 = vld [vmem:[%s386 + $0x48] sm:$0xff]
      %v405 = vld [vmem:[%s386 + $0x50] sm:$0xff]
      %v406 = vld [vmem:[%s386 + $0x58] sm:$0xff]
      %v407 = vld [vmem:[%s386 + $0x60] sm:$0xff]
      %v408 = vld [vmem:[%s386 + $0x68] sm:$0xff]
      %v409 = vld [vmem:[%s386 + $0x70] sm:$0xff]
      %v410 = vld [vmem:[%s386 + $0x78] sm:$0xff]
      %v411 = vld [vmem:[%s386 + $0x80] sm:$0xff]
      %v412 = vld [vmem:[%s386 + $0x88] sm:$0xff]
      %v413 = vld [vmem:[%s386 + $0x90] sm:$0xff]
      %v414 = vld [vmem:[%s386 + $0x98] sm:$0xff]
      %v415 = vld [vmem:[%s386 + $0xa0] sm:$0xff]
      %v416 = vld [vmem:[%s386 + $0xa8] sm:$0xff]
      %v417 = vld [vmem:[%s386 + $0xb0] sm:$0xff]
      %v418 = vld [vmem:[%s386 + $0xb8] sm:$0xff]
      %v419 = vld [vmem:[%s386 + $0xc0] sm:$0xff]
      %v420 = vld [vmem:[%s386 + $0xc8] sm:$0xff]
      %v421 = vld [vmem:[%s386 + $0xd0] sm:$0xff]
      %v422 = vld [vmem:[%s386 + $0xd8] sm:$0xff]
      %v423 = vld [vmem:[%s386 + $0xe0] sm:$0xff]
      %v424 = vld [vmem:[%s386 + $0xe8] sm:$0xff]
      %v425 = vld [vmem:[%s386 + $0xf0] sm:$0xff]
      %v426 = vld [vmem:[%s386 + $0xf8] sm:$0xff]
      %v427 = vld [vmem:[%s386 + $0x100] sm:$0xff]
      %v428 = vld [vmem:[%s386 + $0x108] sm:$0xff]
      %v429 = vld [vmem:[%s386 + $0x110] sm:$0xff]
      %v430 = vld [vmem:[%s386 + $0x118] sm:$0xff]
      %v431 = vld [vmem:[%s386 + $0x120] sm:$0xff]
      %v432 = vld [vmem:[%s386 + $0x128] sm:$0xff]
      %v433 = vld [vmem:[%s386 + $0x130] sm:$0xff]
      %v434 = vld [vmem:[%s386 + $0x138] sm:$0xff]
      %v435 = vld [vmem:[%s386 + $0x140] sm:$0xff]
      %v436 = vld [vmem:[%s386 + $0x148] sm:$0xff]
      %v437 = vld [vmem:[%s386 + $0x150] sm:$0xff]
      %v438 = vld [vmem:[%s386 + $0x158] sm:$0xff]
      %v439 = vld [vmem:[%s386 + $0x160] sm:$0xff]
      %v440 = vld [vmem:[%s386 + $0x168] sm:$0xff]
      %v441 = vld [vmem:[%s386 + $0x170] sm:$0xff]
      %v442 = vld [vmem:[%s386 + $0x178] sm:$0xff]
      %v443 = vld [vmem:[%s386 + $0x180] sm:$0xff]
      %v444 = vld [vmem:[%s386 + $0x188] sm:$0xff]
      %v445 = vld [vmem:[%s386 + $0x190] sm:$0xff]
      %v446 = vld [vmem:[%s386 + $0x198] sm:$0xff]
      %v447 = vld [vmem:[%s386 + $0x1a0] sm:$0xff]
      %v448 = vld [vmem:[%s386 + $0x1a8] sm:$0xff]
      %v449 = vld [vmem:[%s386 + $0x1b0] sm:$0xff]
      %v450 = vld [vmem:[%s386 + $0x1b8] sm:$0xff]
      %v451 = vld [vmem:[%s386 + $0x1c0] sm:$0xff]
      %v452 = vld [vmem:[%s386 + $0x1c8] sm:$0xff]
      %v453 = vld [vmem:[%s386 + $0x1d0] sm:$0xff]
      %v454 = vld [vmem:[%s386 + $0x1d8] sm:$0xff]
      %v455 = vld [vmem:[%s386 + $0x1e0] sm:$0xff]
      %v456 = vld [vmem:[%s386 + $0x1e8] sm:$0xff]
      %v457 = vld [vmem:[%s386 + $0x1f0] sm:$0xff]
      %v458 = vld [vmem:[%s386 + $0x1f8] sm:$0xff]
      %v459 = vld [vmem:[%s386 + $0x200] sm:$0xff]
      %v460 = vld [vmem:[%s386 + $0x208] sm:$0xff]
      %v461 = vld [vmem:[%s386 + $0x210] sm:$0xff]
      %v462 = vld [vmem:[%s386 + $0x218] sm:$0xff]
      %v463 = vld [vmem:[%s386 + $0x220] sm:$0xff]
      %v464 = vld [vmem:[%s386 + $0x228] sm:$0xff]
      %v465 = vld [vmem:[%s386 + $0x230] sm:$0xff]
      %v466 = vld [vmem:[%s386 + $0x238] sm:$0xff]
      %v467 = vld [vmem:[%s386 + $0x240] sm:$0xff]
      %v468 = vld [vmem:[%s386 + $0x248] sm:$0xff]
      %v469 = vld [vmem:[%s386 + $0x250] sm:$0xff]
      %v470 = vld [vmem:[%s386 + $0x258] sm:$0xff]
      %v471 = vld [vmem:[%s386 + $0x260] sm:$0xff]
      %v472 = vld [vmem:[%s386 + $0x268] sm:$0xff]
      %v473 = vld [vmem:[%s386 + $0x270] sm:$0xff]
      %v474 = vld [vmem:[%s386 + $0x278] sm:$0xff]
      %v475 = vld [vmem:[%s386 + $0x280] sm:$0xff]
      %v476 = vld [vmem:[%s386 + $0x288] sm:$0xff]
      %v477 = vld [vmem:[%s386 + $0x290] sm:$0xff]
      %v478 = vld [vmem:[%s386 + $0x298] sm:$0xff]
      %v479 = vld [vmem:[%s386 + $0x2a0] sm:$0xff]
      %v480 = vld [vmem:[%s386 + $0x2a8] sm:$0xff]
      %v481 = vld [vmem:[%s386 + $0x2b0] sm:$0xff]
      %v482 = vld [vmem:[%s386 + $0x2b8] sm:$0xff]
      %v483 = vld [vmem:[%s386 + $0x2c0] sm:$0xff]
      %v484 = vld [vmem:[%s386 + $0x2c8] sm:$0xff]
      %v485 = vld [vmem:[%s386 + $0x2d0] sm:$0xff]
      %v486 = vld [vmem:[%s386 + $0x2d8] sm:$0xff]
      %v487 = vld [vmem:[%s386 + $0x2e0] sm:$0xff]
      %v488 = vld [vmem:[%s386 + $0x2e8] sm:$0xff]
      %v489 = vld [vmem:[%s386 + $0x2f0] sm:$0xff]
      %v490 = vld [vmem:[%s386 + $0x2f8] sm:$0xff]
      %v491 = vld [vmem:[%s386 + $0x300] sm:$0xff]
      %v492 = vld [vmem:[%s386 + $0x308] sm:$0xff]
      %v493 = vld [vmem:[%s386 + $0x310] sm:$0xff]
      %v494 = vld [vmem:[%s386 + $0x318] sm:$0xff]
      %v495 = vld [vmem:[%s386 + $0x320] sm:$0xff]
      %v496 = vld [vmem:[%s386 + $0x328] sm:$0xff]
      %v497 = vld [vmem:[%s386 + $0x330] sm:$0xff]
      %v498 = vld [vmem:[%s386 + $0x338] sm:$0xff]
      %v499 = vld [vmem:[%s386 + $0x340] sm:$0xff]
      %v500 = vld [vmem:[%s386 + $0x348] sm:$0xff]
      %v501 = vld [vmem:[%s386 + $0x350] sm:$0xff]
      %v502 = vld [vmem:[%s386 + $0x358] sm:$0xff]
      %v503 = vld [vmem:[%s386 + $0x360] sm:$0xff]
      %v504 = vld [vmem:[%s386 + $0x368] sm:$0xff]
      %v505 = vld [vmem:[%s386 + $0x370] sm:$0xff]
      %v506 = vld [vmem:[%s386 + $0x378] sm:$0xff]
      %v507 = vld [vmem:[%s1] sm:$0xff]
      %v508 = vld [vmem:[%s1 + $0x8] sm:$0xff]
      %v509 = vld [vmem:[%s1 + $0x10] sm:$0xff]
      %v510 = vld [vmem:[%s1 + $0x18] sm:$0xff]
      %v511 = vld [vmem:[%s1 + $0x20] sm:$0xff]
      %v512 = vld [vmem:[%s1 + $0x28] sm:$0xff]
      %v513 = vld [vmem:[%s1 + $0x30] sm:$0xff]
      %v514 = vld [vmem:[%s1 + $0x38] sm:$0xff]
      %v515 = vld [vmem:[%s1 + $0x40] sm:$0xff]
      %v516 = vld [vmem:[%s1 + $0x48] sm:$0xff]
      %v517 = vld [vmem:[%s1 + $0x50] sm:$0xff]
      %v518 = vld [vmem:[%s1 + $0x58] sm:$0xff]
      %v519 = vld [vmem:[%s1 + $0x60] sm:$0xff]
      %v520 = vld [vmem:[%s1 + $0x68] sm:$0xff]
      %v521 = vld [vmem:[%s1 + $0x70] sm:$0xff]
      %v522 = vld [vmem:[%s1 + $0x78] sm:$0xff]
      %v523 = vld [vmem:[%s1 + $0x80] sm:$0xff]
      %v524 = vld [vmem:[%s1 + $0x88] sm:$0xff]
      %v525 = vld [vmem:[%s1 + $0x90] sm:$0xff]
      %v526 = vld [vmem:[%s1 + $0x98] sm:$0xff]
      %v527 = vld [vmem:[%s1 + $0xa0] sm:$0xff]
      %v528 = vld [vmem:[%s1 + $0xa8] sm:$0xff]
      %v529 = vld [vmem:[%s1 + $0xb0] sm:$0xff]
      %v530 = vld [vmem:[%s1 + $0xb8] sm:$0xff]
      %v531 = vld [vmem:[%s1 + $0xc0] sm:$0xff]
      %v532 = vld [vmem:[%s1 + $0xc8] sm:$0xff]
      %v533 = vld [vmem:[%s1 + $0xd0] sm:$0xff]
      %v534 = vld [vmem:[%s1 + $0xd8] sm:$0xff]
      %v535 = vld [vmem:[%s1 + $0xe0] sm:$0xff]
      %v536 = vld [vmem:[%s1 + $0xe8] sm:$0xff]
      %v537 = vld [vmem:[%s1 + $0xf0] sm:$0xff]
      %v538 = vld [vmem:[%s1 + $0xf8] sm:$0xff]
      %v539 = vld [vmem:[%s1 + $0x100] sm:$0xff]
      %v540 = vld [vmem:[%s1 + $0x108] sm:$0xff]
      %v541 = vld [vmem:[%s1 + $0x110] sm:$0xff]
      %v542 = vld [vmem:[%s1 + $0x118] sm:$0xff]
      %v543 = vld [vmem:[%s1 + $0x120] sm:$0xff]
      %v544 = vld [vmem:[%s1 + $0x128] sm:$0xff]
      %v545 = vld [vmem:[%s1 + $0x130] sm:$0xff]
      %v546 = vld [vmem:[%s1 + $0x138] sm:$0xff]
      %v547 = vld [vmem:[%s1 + $0x140] sm:$0xff]
      %v548 = vld [vmem:[%s1 + $0x148] sm:$0xff]
      %v549 = vld [vmem:[%s1 + $0x150] sm:$0xff]
      %v550 = vld [vmem:[%s1 + $0x158] sm:$0xff]
      %v551 = vld [vmem:[%s1 + $0x160] sm:$0xff]
      %v552 = vld [vmem:[%s1 + $0x168] sm:$0xff]
      %v553 = vld [vmem:[%s1 + $0x170] sm:$0xff]
      %v554 = vld [vmem:[%s1 + $0x178] sm:$0xff]
      %v555 = vld [vmem:[%s1 + $0x180] sm:$0xff]
      %v556 = vld [vmem:[%s1 + $0x188] sm:$0xff]
      %v557 = vld [vmem:[%s1 + $0x190] sm:$0xff]
      %v558 = vld [vmem:[%s1 + $0x198] sm:$0xff]
      %v559 = vld [vmem:[%s1 + $0x1a0] sm:$0xff]
      %v560 = vld [vmem:[%s1 + $0x1a8] sm:$0xff]
      %v561 = vld [vmem:[%s1 + $0x1b0] sm:$0xff]
      %v562 = vld [vmem:[%s1 + $0x1b8] sm:$0xff]
      %v563 = vld [vmem:[%s1 + $0x1c0] sm:$0xff]
      %v564 = vld [vmem:[%s1 + $0x1c8] sm:$0xff]
      %v565 = vld [vmem:[%s1 + $0x1d0] sm:$0xff]
      %v566 = vld [vmem:[%s1 + $0x1d8] sm:$0xff]
      %v567 = vld [vmem:[%s1 + $0x1e0] sm:$0xff]
      %v568 = vld [vmem:[%s1 + $0x1e8] sm:$0xff]
      %v569 = vld [vmem:[%s1 + $0x1f0] sm:$0xff]
      %v570 = vld [vmem:[%s1 + $0x1f8] sm:$0xff]
      %v571 = vld [vmem:[%s1 + $0x200] sm:$0xff]
      %v572 = vld [vmem:[%s1 + $0x208] sm:$0xff]
      %v573 = vld [vmem:[%s1 + $0x210] sm:$0xff]
      %v574 = vld [vmem:[%s1 + $0x218] sm:$0xff]
      %v575 = vld [vmem:[%s1 + $0x220] sm:$0xff]
      %v576 = vld [vmem:[%s1 + $0x228] sm:$0xff]
      %v577 = vld [vmem:[%s1 + $0x230] sm:$0xff]
      %v578 = vld [vmem:[%s1 + $0x238] sm:$0xff]
      %v579 = vld [vmem:[%s1 + $0x240] sm:$0xff]
      %v580 = vld [vmem:[%s1 + $0x248] sm:$0xff]
      %v581 = vld [vmem:[%s1 + $0x250] sm:$0xff]
      %v582 = vld [vmem:[%s1 + $0x258] sm:$0xff]
      %v583 = vld [vmem:[%s1 + $0x260] sm:$0xff]
      %v584 = vld [vmem:[%s1 + $0x268] sm:$0xff]
      %v585 = vld [vmem:[%s1 + $0x270] sm:$0xff]
      %v586 = vld [vmem:[%s1 + $0x278] sm:$0xff]
      %v587 = vld [vmem:[%s1 + $0x280] sm:$0xff]
      %v588 = vld [vmem:[%s1 + $0x288] sm:$0xff]
      %v589 = vld [vmem:[%s1 + $0x290] sm:$0xff]
      %v590 = vld [vmem:[%s1 + $0x298] sm:$0xff]
      %v591 = vld [vmem:[%s1 + $0x2a0] sm:$0xff]
      %v592 = vld [vmem:[%s1 + $0x2a8] sm:$0xff]
      %v593 = vld [vmem:[%s1 + $0x2b0] sm:$0xff]
      %v594 = vld [vmem:[%s1 + $0x2b8] sm:$0xff]
      %v595 = vld [vmem:[%s1 + $0x2c0] sm:$0xff]
      %v596 = vld [vmem:[%s1 + $0x2c8] sm:$0xff]
      %v597 = vld [vmem:[%s1 + $0x2d0] sm:$0xff]
      %v598 = vld [vmem:[%s1 + $0x2d8] sm:$0xff]
      %v599 = vld [vmem:[%s1 + $0x2e0] sm:$0xff]
      %v600 = vld [vmem:[%s1 + $0x2e8] sm:$0xff]
      %v601 = vld [vmem:[%s1 + $0x2f0] sm:$0xff]
      %v602 = vld [vmem:[%s1 + $0x2f8] sm:$0xff]
      %v603 = vld [vmem:[%s1 + $0x300] sm:$0xff]
      %v604 = vld [vmem:[%s1 + $0x308] sm:$0xff]
      %v605 = vld [vmem:[%s1 + $0x310] sm:$0xff]
      %v606 = vld [vmem:[%s1 + $0x318] sm:$0xff]
      %v607 = vld [vmem:[%s1 + $0x320] sm:$0xff]
      %v608 = vld [vmem:[%s1 + $0x328] sm:$0xff]
      %v609 = vld [vmem:[%s1 + $0x330] sm:$0xff]
      %v610 = vld [vmem:[%s1 + $0x338] sm:$0xff]
      %v611 = vld [vmem:[%s1 + $0x340] sm:$0xff]
      %v612 = vld [vmem:[%s1 + $0x348] sm:$0xff]
      %v613 = vld [vmem:[%s1 + $0x350] sm:$0xff]
      %v614 = vld [vmem:[%s1 + $0x358] sm:$0xff]
      %v615 = vld [vmem:[%s1 + $0x360] sm:$0xff]
      %v616 = vld [vmem:[%s1 + $0x368] sm:$0xff]
      %v617 = vld [vmem:[%s1 + $0x370] sm:$0xff]
      %v618 = vld [vmem:[%s1 + $0x378] sm:$0xff]
      %v619 = vld [vmem:[%s1 + $0x380] sm:$0xff]
      %v620 = vld [vmem:[%s1 + $0x388] sm:$0xff]
      %v621 = vld [vmem:[%s1 + $0x390] sm:$0xff]
      %v622 = vld [vmem:[%s1 + $0x398] sm:$0xff]
      %v623 = vld [vmem:[%s1 + $0x3a0] sm:$0xff]
      %v624 = vld [vmem:[%s1 + $0x3a8] sm:$0xff]
      %v625 = vld [vmem:[%s1 + $0x3b0] sm:$0xff]
      %v626 = vld [vmem:[%s1 + $0x3b8] sm:$0xff]
      %v627 = vld [vmem:[%s1 + $0x3c0] sm:$0xff]
      %v628 = vld [vmem:[%s1 + $0x3c8] sm:$0xff]
      %v629 = vld [vmem:[%s1 + $0x3d0] sm:$0xff]
      %v630 = vld [vmem:[%s1 + $0x3d8] sm:$0xff]
      %v631 = vld [vmem:[%s1 + $0x3e0] sm:$0xff]
      %v632 = vld [vmem:[%s1 + $0x3e8] sm:$0xff]
      %v633 = vld [vmem:[%s1 + $0x3f0] sm:$0xff]
      %v634 = vld [vmem:[%s1 + $0x3f8] sm:$0xff]
      %v635 = vld [vmem:[%s1 + $0x400] sm:$0xff]
      %v636 = vld [vmem:[%s1 + $0x408] sm:$0xff]
      %v637 = vld [vmem:[%s1 + $0x410] sm:$0xff]
      %v638 = vld [vmem:[%s1 + $0x418] sm:$0xff]
      %v639 = vld [vmem:[%s1 + $0x420] sm:$0xff]
      %v640 = vld [vmem:[%s1 + $0x428] sm:$0xff]
      %v641 = vld [vmem:[%s1 + $0x430] sm:$0xff]
      %v642 = vld [vmem:[%s1 + $0x438] sm:$0xff]
      %v643 = vld [vmem:[%s1 + $0x440] sm:$0xff]
      %v644 = vld [vmem:[%s1 + $0x448] sm:$0xff]
      %v645 = vld [vmem:[%s1 + $0x450] sm:$0xff]
      %v646 = vld [vmem:[%s1 + $0x458] sm:$0xff]
      %v647 = vld [vmem:[%s1 + $0x460] sm:$0xff]
      %v648 = vld [vmem:[%s1 + $0x468] sm:$0xff]
      %v649 = vld [vmem:[%s1 + $0x470] sm:$0xff]
      %v650 = vld [vmem:[%s1 + $0x478] sm:$0xff]
      %v651 = vld [vmem:[%s1 + $0x480] sm:$0xff]
      %v652 = vld [vmem:[%s1 + $0x488] sm:$0xff]
      %v653 = vld [vmem:[%s1 + $0x490] sm:$0xff]
      %v654 = vld [vmem:[%s1 + $0x498] sm:$0xff]
      %v655 = vld [vmem:[%s1 + $0x4a0] sm:$0xff]
      %v656 = vld [vmem:[%s1 + $0x4a8] sm:$0xff]
      %v657 = vld [vmem:[%s1 + $0x4b0] sm:$0xff]
      %v658 = vld [vmem:[%s1 + $0x4b8] sm:$0xff]
      %v659 = vld [vmem:[%s1 + $0x4c0] sm:$0xff]
      %v660 = vld [vmem:[%s1 + $0x4c8] sm:$0xff]
      %v661 = vld [vmem:[%s1 + $0x4d0] sm:$0xff]
      %v662 = vld [vmem:[%s1 + $0x4d8] sm:$0xff]
      %v663 = vld [vmem:[%s1 + $0x4e0] sm:$0xff]
      %v664 = vld [vmem:[%s1 + $0x4e8] sm:$0xff]
      %v665 = vld [vmem:[%s1 + $0x4f0] sm:$0xff]
      %v666 = vld [vmem:[%s1 + $0x4f8] sm:$0xff]
      %v667 = vld [vmem:[%s1 + $0x500] sm:$0xff]
      %v668 = vld [vmem:[%s1 + $0x508] sm:$0xff]
      %v669 = vld [vmem:[%s1 + $0x510] sm:$0xff]
      %v670 = vld [vmem:[%s1 + $0x518] sm:$0xff]
      %v671 = vld [vmem:[%s1 + $0x520] sm:$0xff]
      %v672 = vld [vmem:[%s1 + $0x528] sm:$0xff]
      %v673 = vld [vmem:[%s1 + $0x530] sm:$0xff]
      %v674 = vld [vmem:[%s1 + $0x538] sm:$0xff]
      %v675 = vld [vmem:[%s1 + $0x540] sm:$0xff]
      %v676 = vld [vmem:[%s1 + $0x548] sm:$0xff]
      %v677 = vld [vmem:[%s1 + $0x550] sm:$0xff]
      %v678 = vld [vmem:[%s1 + $0x558] sm:$0xff]
      %v679 = vld [vmem:[%s1 + $0x560] sm:$0xff]
      %v680 = vld [vmem:[%s1 + $0x568] sm:$0xff]
      %v681 = vld [vmem:[%s1 + $0x570] sm:$0xff]
      %v682 = vld [vmem:[%s1 + $0x578] sm:$0xff]
      %v683 = vld [vmem:[%s1 + $0x580] sm:$0xff]
      %v684 = vld [vmem:[%s1 + $0x588] sm:$0xff]
      %v685 = vld [vmem:[%s1 + $0x590] sm:$0xff]
      %v686 = vld [vmem:[%s1 + $0x598] sm:$0xff]
      %v687 = vld [vmem:[%s1 + $0x5a0] sm:$0xff]
      %v688 = vld [vmem:[%s1 + $0x5a8] sm:$0xff]
      %v689 = vld [vmem:[%s1 + $0x5b0] sm:$0xff]
      %v690 = vld [vmem:[%s1 + $0x5b8] sm:$0xff]
      %v691 = vld [vmem:[%s1 + $0x5c0] sm:$0xff]
      %v692 = vld [vmem:[%s1 + $0x5c8] sm:$0xff]
      %v693 = vld [vmem:[%s1 + $0x5d0] sm:$0xff]
      %v694 = vld [vmem:[%s1 + $0x5d8] sm:$0xff]
      %v695 = vld [vmem:[%s1 + $0x5e0] sm:$0xff]
      %v696 = vld [vmem:[%s1 + $0x5e8] sm:$0xff]
      %v697 = vld [vmem:[%s1 + $0x5f0] sm:$0xff]
      %v698 = vld [vmem:[%s1 + $0x5f8] sm:$0xff]
      %v699 = vld [vmem:[%s1 + $0x600] sm:$0xff]
      %v700 = vld [vmem:[%s1 + $0x608] sm:$0xff]
      %v701 = vld [vmem:[%s1 + $0x610] sm:$0xff]
      %v702 = vld [vmem:[%s1 + $0x618] sm:$0xff]
      %v703 = vld [vmem:[%s2] sm:$0x3]
      %v705 = vperm.slane %v703, 0
      %v706 = vperm.slane %v703, 1
      %vm709 = vcmask 130048
      %v711 = vsel %vm709, %v401, 0
      %v714 = vsel %vm709, %v408, 0
      %v717 = vsel %vm709, %v415, 0
      %v720 = vsel %vm709, %v422, 0
      %v723 = vsel %vm709, %v429, 0
      %v726 = vsel %vm709, %v436, 0
      %v729 = vsel %vm709, %v443, 0
      %v732 = vsel %vm709, %v450, 0
      %v735 = vsel %vm709, %v457, 0
      %v738 = vsel %vm709, %v464, 0
      %v741 = vsel %vm709, %v471, 0
      %v744 = vsel %vm709, %v478, 0
      %v747 = vsel %vm709, %v485, 0
      %v750 = vsel %vm709, %v492, 0
      %v753 = vsel %vm709, %v499, 0
      %v756 = vsel %vm709, %v506, 0
      %758 = vmatpush.msra.mxu0 %v537
      %759 = vmatpush.msra.mxu0 %v535
      %760 = vmatpush.msra.mxu0 %v533
      %761 = vmatpush.msra.mxu0 %v531
      %762 = vmatpush.msra.mxu0 %v529
      %763 = vmatpush.msra.mxu0 %v527
      %764 = vmatpush.msra.mxu0 %v525
      %765 = vmatpush.msra.mxu0 %v523
      %766 = vmatpush.msra.mxu0 %v521
      %767 = vmatpush.msra.mxu0 %v519
      %768 = vmatpush.msra.mxu0 %v517
      %769 = vmatpush.msra.mxu0 %v515
      %770 = vmatpush.msra.mxu0 %v513
      %771 = vmatpush.msra.mxu0 %v511
      %772 = vmatpush.msra.mxu0 %v509
      %773 = vmatpush.msra.mxu0 %v507
      %774 = vmatmul.f32.gmra.mxu0 %v395
      %v775 = vpop.f32.mrf.mxu0
      %v776 = vadd.f32 %v705, %v775
      %777 = vmatmul.f32.gmra.mxu0 %v402
      %v778 = vpop.f32.mrf.mxu0
      %v779 = vadd.f32 %v705, %v778
      %780 = vmatmul.f32.gmra.mxu0 %v409
      %v781 = vpop.f32.mrf.mxu0
      %v782 = vadd.f32 %v705, %v781
      %783 = vmatmul.f32.gmra.mxu0 %v416
      %v784 = vpop.f32.mrf.mxu0
      %v785 = vadd.f32 %v705, %v784
      %786 = vmatmul.f32.gmra.mxu0 %v423
      %v787 = vpop.f32.mrf.mxu0
      %v788 = vadd.f32 %v705, %v787
      %789 = vmatmul.f32.gmra.mxu0 %v430
      %v790 = vpop.f32.mrf.mxu0
      %v791 = vadd.f32 %v705, %v790
      %792 = vmatmul.f32.gmra.mxu0 %v437
      %v793 = vpop.f32.mrf.mxu0
      %v794 = vadd.f32 %v705, %v793
      %795 = vmatmul.f32.gmra.mxu0 %v444
      %v796 = vpop.f32.mrf.mxu0
      %v797 = vadd.f32 %v705, %v796
      %798 = vmatmul.f32.gmra.mxu0 %v451
      %v799 = vpop.f32.mrf.mxu0
      %v800 = vadd.f32 %v705, %v799
      %801 = vmatmul.f32.gmra.mxu0 %v458
      %v802 = vpop.f32.mrf.mxu0
      %v803 = vadd.f32 %v705, %v802
      %804 = vmatmul.f32.gmra.mxu0 %v465
      %v805 = vpop.f32.mrf.mxu0
      %v806 = vadd.f32 %v705, %v805
      %807 = vmatmul.f32.gmra.mxu0 %v472
      %v808 = vpop.f32.mrf.mxu0
      %v809 = vadd.f32 %v705, %v808
      %810 = vmatmul.f32.gmra.mxu0 %v479
      %v811 = vpop.f32.mrf.mxu0
      %v812 = vadd.f32 %v705, %v811
      %813 = vmatmul.f32.gmra.mxu0 %v486
      %v814 = vpop.f32.mrf.mxu0
      %v815 = vadd.f32 %v705, %v814
      %816 = vmatmul.f32.gmra.mxu0 %v493
      %v817 = vpop.f32.mrf.mxu0
      %v818 = vadd.f32 %v705, %v817
      %819 = vmatmul.f32.gmra.mxu0 %v500
      %v820 = vpop.f32.mrf.mxu0
      %v821 = vadd.f32 %v705, %v820
      %822 = vdwg.mxu0
      %823 = vmatpush.msra.mxu0 %v569
      %824 = vmatpush.msra.mxu0 %v567
      %825 = vmatpush.msra.mxu0 %v565
      %826 = vmatpush.msra.mxu0 %v563
      %827 = vmatpush.msra.mxu0 %v561
      %828 = vmatpush.msra.mxu0 %v559
      %829 = vmatpush.msra.mxu0 %v557
      %830 = vmatpush.msra.mxu0 %v555
      %831 = vmatpush.msra.mxu0 %v553
      %832 = vmatpush.msra.mxu0 %v551
      %833 = vmatpush.msra.mxu0 %v549
      %834 = vmatpush.msra.mxu0 %v547
      %835 = vmatpush.msra.mxu0 %v545
      %836 = vmatpush.msra.mxu0 %v543
      %837 = vmatpush.msra.mxu0 %v541
      %838 = vmatpush.msra.mxu0 %v539
      %839 = vmatmul.f32.gmra.mxu0 %v396
      %v840 = vpop.f32.mrf.mxu0
      %v841 = vadd.f32 %v776, %v840
      %842 = vmatmul.f32.gmra.mxu0 %v403
      %v843 = vpop.f32.mrf.mxu0
      %v844 = vadd.f32 %v779, %v843
      %845 = vmatmul.f32.gmra.mxu0 %v410
      %v846 = vpop.f32.mrf.mxu0
      %v847 = vadd.f32 %v782, %v846
      %848 = vmatmul.f32.gmra.mxu0 %v417
      %v849 = vpop.f32.mrf.mxu0
      %v850 = vadd.f32 %v785, %v849
      %851 = vmatmul.f32.gmra.mxu0 %v424
      %v852 = vpop.f32.mrf.mxu0
      %v853 = vadd.f32 %v788, %v852
      %854 = vmatmul.f32.gmra.mxu0 %v431
      %v855 = vpop.f32.mrf.mxu0
      %v856 = vadd.f32 %v791, %v855
      %857 = vmatmul.f32.gmra.mxu0 %v438
      %v858 = vpop.f32.mrf.mxu0
      %v859 = vadd.f32 %v794, %v858
      %860 = vmatmul.f32.gmra.mxu0 %v445
      %v861 = vpop.f32.mrf.mxu0
      %v862 = vadd.f32 %v797, %v861
      %863 = vmatmul.f32.gmra.mxu0 %v452
      %v864 = vpop.f32.mrf.mxu0
      %v865 = vadd.f32 %v800, %v864
      %866 = vmatmul.f32.gmra.mxu0 %v459
      %v867 = vpop.f32.mrf.mxu0
      %v868 = vadd.f32 %v803, %v867
      %869 = vmatmul.f32.gmra.mxu0 %v466
      %v870 = vpop.f32.mrf.mxu0
      %v871 = vadd.f32 %v806, %v870
      %872 = vmatmul.f32.gmra.mxu0 %v473
      %v873 = vpop.f32.mrf.mxu0
      %v874 = vadd.f32 %v809, %v873
      %875 = vmatmul.f32.gmra.mxu0 %v480
      %v876 = vpop.f32.mrf.mxu0
      %v877 = vadd.f32 %v812, %v876
      %878 = vmatmul.f32.gmra.mxu0 %v487
      %v879 = vpop.f32.mrf.mxu0
      %v880 = vadd.f32 %v815, %v879
      %881 = vmatmul.f32.gmra.mxu0 %v494
      %v882 = vpop.f32.mrf.mxu0
      %v883 = vadd.f32 %v818, %v882
      %884 = vmatmul.f32.gmra.mxu0 %v501
      %v885 = vpop.f32.mrf.mxu0
      %v886 = vadd.f32 %v821, %v885
      %887 = vdwg.mxu0
      %888 = vmatpush.msra.mxu0 %v601
      %889 = vmatpush.msra.mxu0 %v599
      %890 = vmatpush.msra.mxu0 %v597
      %891 = vmatpush.msra.mxu0 %v595
      %892 = vmatpush.msra.mxu0 %v593
      %893 = vmatpush.msra.mxu0 %v591
      %894 = vmatpush.msra.mxu0 %v589
      %895 = vmatpush.msra.mxu0 %v587
      %896 = vmatpush.msra.mxu0 %v585
      %897 = vmatpush.msra.mxu0 %v583
      %898 = vmatpush.msra.mxu0 %v581
      %899 = vmatpush.msra.mxu0 %v579
      %900 = vmatpush.msra.mxu0 %v577
      %901 = vmatpush.msra.mxu0 %v575
      %902 = vmatpush.msra.mxu0 %v573
      %903 = vmatpush.msra.mxu0 %v571
      %904 = vmatmul.f32.gmra.mxu0 %v397
      %v905 = vpop.f32.mrf.mxu0
      %v906 = vadd.f32 %v841, %v905
      %907 = vmatmul.f32.gmra.mxu0 %v404
      %v908 = vpop.f32.mrf.mxu0
      %v909 = vadd.f32 %v844, %v908
      %910 = vmatmul.f32.gmra.mxu0 %v411
      %v911 = vpop.f32.mrf.mxu0
      %v912 = vadd.f32 %v847, %v911
      %913 = vmatmul.f32.gmra.mxu0 %v418
      %v914 = vpop.f32.mrf.mxu0
      %v915 = vadd.f32 %v850, %v914
      %916 = vmatmul.f32.gmra.mxu0 %v425
      %v917 = vpop.f32.mrf.mxu0
      %v918 = vadd.f32 %v853, %v917
      %919 = vmatmul.f32.gmra.mxu0 %v432
      %v920 = vpop.f32.mrf.mxu0
      %v921 = vadd.f32 %v856, %v920
      %922 = vmatmul.f32.gmra.mxu0 %v439
      %v923 = vpop.f32.mrf.mxu0
      %v924 = vadd.f32 %v859, %v923
      %925 = vmatmul.f32.gmra.mxu0 %v446
      %v926 = vpop.f32.mrf.mxu0
      %v927 = vadd.f32 %v862, %v926
      %928 = vmatmul.f32.gmra.mxu0 %v453
      %v929 = vpop.f32.mrf.mxu0
      %v930 = vadd.f32 %v865, %v929
      %931 = vmatmul.f32.gmra.mxu0 %v460
      %v932 = vpop.f32.mrf.mxu0
      %v933 = vadd.f32 %v868, %v932
      %934 = vmatmul.f32.gmra.mxu0 %v467
      %v935 = vpop.f32.mrf.mxu0
      %v936 = vadd.f32 %v871, %v935
      %937 = vmatmul.f32.gmra.mxu0 %v474
      %v938 = vpop.f32.mrf.mxu0
      %v939 = vadd.f32 %v874, %v938
      %940 = vmatmul.f32.gmra.mxu0 %v481
      %v941 = vpop.f32.mrf.mxu0
      %v942 = vadd.f32 %v877, %v941
      %943 = vmatmul.f32.gmra.mxu0 %v488
      %v944 = vpop.f32.mrf.mxu0
      %v945 = vadd.f32 %v880, %v944
      %946 = vmatmul.f32.gmra.mxu0 %v495
      %v947 = vpop.f32.mrf.mxu0
      %v948 = vadd.f32 %v883, %v947
      %949 = vmatmul.f32.gmra.mxu0 %v502
      %v950 = vpop.f32.mrf.mxu0
      %v951 = vadd.f32 %v886, %v950
      %952 = vdwg.mxu0
      %953 = vmatpush.msra.mxu0 %v633
      %954 = vmatpush.msra.mxu0 %v631
      %955 = vmatpush.msra.mxu0 %v629
      %956 = vmatpush.msra.mxu0 %v627
      %957 = vmatpush.msra.mxu0 %v625
      %958 = vmatpush.msra.mxu0 %v623
      %959 = vmatpush.msra.mxu0 %v621
      %960 = vmatpush.msra.mxu0 %v619
      %961 = vmatpush.msra.mxu0 %v617
      %962 = vmatpush.msra.mxu0 %v615
      %963 = vmatpush.msra.mxu0 %v613
      %964 = vmatpush.msra.mxu0 %v611
      %965 = vmatpush.msra.mxu0 %v609
      %966 = vmatpush.msra.mxu0 %v607
      %967 = vmatpush.msra.mxu0 %v605
      %968 = vmatpush.msra.mxu0 %v603
      %969 = vmatmul.f32.gmra.mxu0 %v398
      %v970 = vpop.f32.mrf.mxu0
      %v971 = vadd.f32 %v906, %v970
      %972 = vmatmul.f32.gmra.mxu0 %v405
      %v973 = vpop.f32.mrf.mxu0
      %v974 = vadd.f32 %v909, %v973
      %975 = vmatmul.f32.gmra.mxu0 %v412
      %v976 = vpop.f32.mrf.mxu0
      %v977 = vadd.f32 %v912, %v976
      %978 = vmatmul.f32.gmra.mxu0 %v419
      %v979 = vpop.f32.mrf.mxu0
      %v980 = vadd.f32 %v915, %v979
      %981 = vmatmul.f32.gmra.mxu0 %v426
      %v982 = vpop.f32.mrf.mxu0
      %v983 = vadd.f32 %v918, %v982
      %984 = vmatmul.f32.gmra.mxu0 %v433
      %v985 = vpop.f32.mrf.mxu0
      %v986 = vadd.f32 %v921, %v985
      %987 = vmatmul.f32.gmra.mxu0 %v440
      %v988 = vpop.f32.mrf.mxu0
      %v989 = vadd.f32 %v924, %v988
      %990 = vmatmul.f32.gmra.mxu0 %v447
      %v991 = vpop.f32.mrf.mxu0
      %v992 = vadd.f32 %v927, %v991
      %993 = vmatmul.f32.gmra.mxu0 %v454
      %v994 = vpop.f32.mrf.mxu0
      %v995 = vadd.f32 %v930, %v994
      %996 = vmatmul.f32.gmra.mxu0 %v461
      %v997 = vpop.f32.mrf.mxu0
      %v998 = vadd.f32 %v933, %v997
      %999 = vmatmul.f32.gmra.mxu0 %v468
      %v1000 = vpop.f32.mrf.mxu0
      %v1001 = vadd.f32 %v936, %v1000
      %1002 = vmatmul.f32.gmra.mxu0 %v475
      %v1003 = vpop.f32.mrf.mxu0
      %v1004 = vadd.f32 %v939, %v1003
      %1005 = vmatmul.f32.gmra.mxu0 %v482
      %v1006 = vpop.f32.mrf.mxu0
      %v1007 = vadd.f32 %v942, %v1006
      %1008 = vmatmul.f32.gmra.mxu0 %v489
      %v1009 = vpop.f32.mrf.mxu0
      %v1010 = vadd.f32 %v945, %v1009
      %1011 = vmatmul.f32.gmra.mxu0 %v496
      %v1012 = vpop.f32.mrf.mxu0
      %v1013 = vadd.f32 %v948, %v1012
      %1014 = vmatmul.f32.gmra.mxu0 %v503
      %v1015 = vpop.f32.mrf.mxu0
      %v1016 = vadd.f32 %v951, %v1015
      %1017 = vdwg.mxu0
      %1018 = vmatpush.msra.mxu0 %v665
      %1019 = vmatpush.msra.mxu0 %v663
      %1020 = vmatpush.msra.mxu0 %v661
      %1021 = vmatpush.msra.mxu0 %v659
      %1022 = vmatpush.msra.mxu0 %v657
      %1023 = vmatpush.msra.mxu0 %v655
      %1024 = vmatpush.msra.mxu0 %v653
      %1025 = vmatpush.msra.mxu0 %v651
      %1026 = vmatpush.msra.mxu0 %v649
      %1027 = vmatpush.msra.mxu0 %v647
      %1028 = vmatpush.msra.mxu0 %v645
      %1029 = vmatpush.msra.mxu0 %v643
      %1030 = vmatpush.msra.mxu0 %v641
      %1031 = vmatpush.msra.mxu0 %v639
      %1032 = vmatpush.msra.mxu0 %v637
      %1033 = vmatpush.msra.mxu0 %v635
      %1034 = vmatmul.f32.gmra.mxu0 %v399
      %v1035 = vpop.f32.mrf.mxu0
      %v1036 = vadd.f32 %v971, %v1035
      %1037 = vmatmul.f32.gmra.mxu0 %v406
      %v1038 = vpop.f32.mrf.mxu0
      %v1039 = vadd.f32 %v974, %v1038
      %1040 = vmatmul.f32.gmra.mxu0 %v413
      %v1041 = vpop.f32.mrf.mxu0
      %v1042 = vadd.f32 %v977, %v1041
      %1043 = vmatmul.f32.gmra.mxu0 %v420
      %v1044 = vpop.f32.mrf.mxu0
      %v1045 = vadd.f32 %v980, %v1044
      %1046 = vmatmul.f32.gmra.mxu0 %v427
      %v1047 = vpop.f32.mrf.mxu0
      %v1048 = vadd.f32 %v983, %v1047
      %1049 = vmatmul.f32.gmra.mxu0 %v434
      %v1050 = vpop.f32.mrf.mxu0
      %v1051 = vadd.f32 %v986, %v1050
      %1052 = vmatmul.f32.gmra.mxu0 %v441
      %v1053 = vpop.f32.mrf.mxu0
      %v1054 = vadd.f32 %v989, %v1053
      %1055 = vmatmul.f32.gmra.mxu0 %v448
      %v1056 = vpop.f32.mrf.mxu0
      %v1057 = vadd.f32 %v992, %v1056
      %1058 = vmatmul.f32.gmra.mxu0 %v455
      %v1059 = vpop.f32.mrf.mxu0
      %v1060 = vadd.f32 %v995, %v1059
      %1061 = vmatmul.f32.gmra.mxu0 %v462
      %v1062 = vpop.f32.mrf.mxu0
      %v1063 = vadd.f32 %v998, %v1062
      %1064 = vmatmul.f32.gmra.mxu0 %v469
      %v1065 = vpop.f32.mrf.mxu0
      %v1066 = vadd.f32 %v1001, %v1065
      %1067 = vmatmul.f32.gmra.mxu0 %v476
      %v1068 = vpop.f32.mrf.mxu0
      %v1069 = vadd.f32 %v1004, %v1068
      %1070 = vmatmul.f32.gmra.mxu0 %v483
      %v1071 = vpop.f32.mrf.mxu0
      %v1072 = vadd.f32 %v1007, %v1071
      %1073 = vmatmul.f32.gmra.mxu0 %v490
      %v1074 = vpop.f32.mrf.mxu0
      %v1075 = vadd.f32 %v1010, %v1074
      %1076 = vmatmul.f32.gmra.mxu0 %v497
      %v1077 = vpop.f32.mrf.mxu0
      %v1078 = vadd.f32 %v1013, %v1077
      %1079 = vmatmul.f32.gmra.mxu0 %v504
      %v1080 = vpop.f32.mrf.mxu0
      %v1081 = vadd.f32 %v1016, %v1080
      %1082 = vdwg.mxu0
      %1083 = vmatpush.msra.mxu0 %v697
      %1084 = vmatpush.msra.mxu0 %v695
      %1085 = vmatpush.msra.mxu0 %v693
      %1086 = vmatpush.msra.mxu0 %v691
      %1087 = vmatpush.msra.mxu0 %v689
      %1088 = vmatpush.msra.mxu0 %v687
      %1089 = vmatpush.msra.mxu0 %v685
      %1090 = vmatpush.msra.mxu0 %v683
      %1091 = vmatpush.msra.mxu0 %v681
      %1092 = vmatpush.msra.mxu0 %v679
      %1093 = vmatpush.msra.mxu0 %v677
      %1094 = vmatpush.msra.mxu0 %v675
      %1095 = vmatpush.msra.mxu0 %v673
      %1096 = vmatpush.msra.mxu0 %v671
      %1097 = vmatpush.msra.mxu0 %v669
      %1098 = vmatpush.msra.mxu0 %v667
      %1099 = vmatmul.f32.gmra.mxu0 %v400
      %v1100 = vpop.f32.mrf.mxu0
      %v1101 = vadd.f32 %v1036, %v1100
      %1102 = vmatmul.f32.gmra.mxu0 %v407
      %v1103 = vpop.f32.mrf.mxu0
      %v1104 = vadd.f32 %v1039, %v1103
      %1105 = vmatmul.f32.gmra.mxu0 %v414
      %v1106 = vpop.f32.mrf.mxu0
      %v1107 = vadd.f32 %v1042, %v1106
      %1108 = vmatmul.f32.gmra.mxu0 %v421
      %v1109 = vpop.f32.mrf.mxu0
      %v1110 = vadd.f32 %v1045, %v1109
      %1111 = vmatmul.f32.gmra.mxu0 %v428
      %v1112 = vpop.f32.mrf.mxu0
      %v1113 = vadd.f32 %v1048, %v1112
      %1114 = vmatmul.f32.gmra.mxu0 %v435
      %v1115 = vpop.f32.mrf.mxu0
      %v1116 = vadd.f32 %v1051, %v1115
      %1117 = vmatmul.f32.gmra.mxu0 %v442
      %v1118 = vpop.f32.mrf.mxu0
      %v1119 = vadd.f32 %v1054, %v1118
      %1120 = vmatmul.f32.gmra.mxu0 %v449
      %v1121 = vpop.f32.mrf.mxu0
      %v1122 = vadd.f32 %v1057, %v1121
      %1123 = vmatmul.f32.gmra.mxu0 %v456
      %v1124 = vpop.f32.mrf.mxu0
      %v1125 = vadd.f32 %v1060, %v1124
      %1126 = vmatmul.f32.gmra.mxu0 %v463
      %v1127 = vpop.f32.mrf.mxu0
      %v1128 = vadd.f32 %v1063, %v1127
      %1129 = vmatmul.f32.gmra.mxu0 %v470
      %v1130 = vpop.f32.mrf.mxu0
      %v1131 = vadd.f32 %v1066, %v1130
      %1132 = vmatmul.f32.gmra.mxu0 %v477
      %v1133 = vpop.f32.mrf.mxu0
      %v1134 = vadd.f32 %v1069, %v1133
      %1135 = vmatmul.f32.gmra.mxu0 %v484
      %v1136 = vpop.f32.mrf.mxu0
      %v1137 = vadd.f32 %v1072, %v1136
      %1138 = vmatmul.f32.gmra.mxu0 %v491
      %v1139 = vpop.f32.mrf.mxu0
      %v1140 = vadd.f32 %v1075, %v1139
      %1141 = vmatmul.f32.gmra.mxu0 %v498
      %v1142 = vpop.f32.mrf.mxu0
      %v1143 = vadd.f32 %v1078, %v1142
      %1144 = vmatmul.f32.gmra.mxu0 %v505
      %v1145 = vpop.f32.mrf.mxu0
      %v1146 = vadd.f32 %v1081, %v1145
      %1147 = vdwg.mxu0
      %1148 = vmatpush.msra.mxu0 0.0
      %1149 = vmatpush.msra.mxu0 0.0
      %1150 = vmatpush.msra.mxu0 0.0
      %1151 = vmatpush.msra.mxu0 0.0
      %1152 = vmatpush.msra.mxu0 0.0
      %1153 = vmatpush.msra.mxu0 0.0
      %1154 = vmatpush.msra.mxu0 0.0
      %1155 = vmatpush.msra.mxu0 0.0
      %1156 = vmatpush.msra.mxu0 0.0
      %1157 = vmatpush.msra.mxu0 0.0
      %1158 = vmatpush.msra.mxu0 0.0
      %1159 = vmatpush.msra.mxu0 0.0
      %1160 = vmatpush.msra.mxu0 0.0
      %1161 = vmatpush.msra.mxu0 0.0
      %1162 = vmatpush.msra.mxu0 %v701
      %1163 = vmatpush.msra.mxu0 %v699
      %1164 = vmatmul.f32.gmra.mxu0 %v711
      %v1165 = vpop.f32.mrf.mxu0
      %v1166 = vadd.f32 %v1101, %v1165
      %1167 = vmatmul.f32.gmra.mxu0 %v714
      %v1168 = vpop.f32.mrf.mxu0
      %v1169 = vadd.f32 %v1104, %v1168
      %1170 = vmatmul.f32.gmra.mxu0 %v717
      %v1171 = vpop.f32.mrf.mxu0
      %v1172 = vadd.f32 %v1107, %v1171
      %1173 = vmatmul.f32.gmra.mxu0 %v720
      %v1174 = vpop.f32.mrf.mxu0
      %v1175 = vadd.f32 %v1110, %v1174
      %1176 = vmatmul.f32.gmra.mxu0 %v723
      %v1177 = vpop.f32.mrf.mxu0
      %v1178 = vadd.f32 %v1113, %v1177
      %1179 = vmatmul.f32.gmra.mxu0 %v726
      %v1180 = vpop.f32.mrf.mxu0
      %v1181 = vadd.f32 %v1116, %v1180
      %1182 = vmatmul.f32.gmra.mxu0 %v729
      %v1183 = vpop.f32.mrf.mxu0
      %v1184 = vadd.f32 %v1119, %v1183
      %1185 = vmatmul.f32.gmra.mxu0 %v732
      %v1186 = vpop.f32.mrf.mxu0
      %v1187 = vadd.f32 %v1122, %v1186
      %1188 = vmatmul.f32.gmra.mxu0 %v735
      %v1189 = vpop.f32.mrf.mxu0
      %v1190 = vadd.f32 %v1125, %v1189
      %1191 = vmatmul.f32.gmra.mxu0 %v738
      %v1192 = vpop.f32.mrf.mxu0
      %v1193 = vadd.f32 %v1128, %v1192
      %1194 = vmatmul.f32.gmra.mxu0 %v741
      %v1195 = vpop.f32.mrf.mxu0
      %v1196 = vadd.f32 %v1131, %v1195
      %1197 = vmatmul.f32.gmra.mxu0 %v744
      %v1198 = vpop.f32.mrf.mxu0
      %v1199 = vadd.f32 %v1134, %v1198
      %1200 = vmatmul.f32.gmra.mxu0 %v747
      %v1201 = vpop.f32.mrf.mxu0
      %v1202 = vadd.f32 %v1137, %v1201
      %1203 = vmatmul.f32.gmra.mxu0 %v750
      %v1204 = vpop.f32.mrf.mxu0
      %v1205 = vadd.f32 %v1140, %v1204
      %1206 = vmatmul.f32.gmra.mxu0 %v753
      %v1207 = vpop.f32.mrf.mxu0
      %v1208 = vadd.f32 %v1143, %v1207
      %1209 = vmatmul.f32.gmra.mxu0 %v756
      %v1210 = vpop.f32.mrf.mxu0
      %v1211 = vadd.f32 %v1146, %v1210
      %1212 = vdwg.mxu0
      %1213 = vmatpush.msra.mxu0 %v538
      %1214 = vmatpush.msra.mxu0 %v536
      %1215 = vmatpush.msra.mxu0 %v534
      %1216 = vmatpush.msra.mxu0 %v532
      %1217 = vmatpush.msra.mxu0 %v530
      %1218 = vmatpush.msra.mxu0 %v528
      %1219 = vmatpush.msra.mxu0 %v526
      %1220 = vmatpush.msra.mxu0 %v524
      %1221 = vmatpush.msra.mxu0 %v522
      %1222 = vmatpush.msra.mxu0 %v520
      %1223 = vmatpush.msra.mxu0 %v518
      %1224 = vmatpush.msra.mxu0 %v516
      %1225 = vmatpush.msra.mxu0 %v514
      %1226 = vmatpush.msra.mxu0 %v512
      %1227 = vmatpush.msra.mxu0 %v510
      %1228 = vmatpush.msra.mxu0 %v508
      %1229 = vmatmul.f32.gmra.mxu0 %v395
      %v1230 = vpop.f32.mrf.mxu0
      %v1231 = vadd.f32 %v706, %v1230
      %1232 = vmatmul.f32.gmra.mxu0 %v402
      %v1233 = vpop.f32.mrf.mxu0
      %v1234 = vadd.f32 %v706, %v1233
      %1235 = vmatmul.f32.gmra.mxu0 %v409
      %v1236 = vpop.f32.mrf.mxu0
      %v1237 = vadd.f32 %v706, %v1236
      %1238 = vmatmul.f32.gmra.mxu0 %v416
      %v1239 = vpop.f32.mrf.mxu0
      %v1240 = vadd.f32 %v706, %v1239
      %1241 = vmatmul.f32.gmra.mxu0 %v423
      %v1242 = vpop.f32.mrf.mxu0
      %v1243 = vadd.f32 %v706, %v1242
      %1244 = vmatmul.f32.gmra.mxu0 %v430
      %v1245 = vpop.f32.mrf.mxu0
      %v1246 = vadd.f32 %v706, %v1245
      %1247 = vmatmul.f32.gmra.mxu0 %v437
      %v1248 = vpop.f32.mrf.mxu0
      %v1249 = vadd.f32 %v706, %v1248
      %1250 = vmatmul.f32.gmra.mxu0 %v444
      %v1251 = vpop.f32.mrf.mxu0
      %v1252 = vadd.f32 %v706, %v1251
      %1253 = vmatmul.f32.gmra.mxu0 %v451
      %v1254 = vpop.f32.mrf.mxu0
      %v1255 = vadd.f32 %v706, %v1254
      %1256 = vmatmul.f32.gmra.mxu0 %v458
      %v1257 = vpop.f32.mrf.mxu0
      %v1258 = vadd.f32 %v706, %v1257
      %1259 = vmatmul.f32.gmra.mxu0 %v465
      %v1260 = vpop.f32.mrf.mxu0
      %v1261 = vadd.f32 %v706, %v1260
      %1262 = vmatmul.f32.gmra.mxu0 %v472
      %v1263 = vpop.f32.mrf.mxu0
      %v1264 = vadd.f32 %v706, %v1263
      %1265 = vmatmul.f32.gmra.mxu0 %v479
      %v1266 = vpop.f32.mrf.mxu0
      %v1267 = vadd.f32 %v706, %v1266
      %1268 = vmatmul.f32.gmra.mxu0 %v486
      %v1269 = vpop.f32.mrf.mxu0
      %v1270 = vadd.f32 %v706, %v1269
      %1271 = vmatmul.f32.gmra.mxu0 %v493
      %v1272 = vpop.f32.mrf.mxu0
      %v1273 = vadd.f32 %v706, %v1272
      %1274 = vmatmul.f32.gmra.mxu0 %v500
      %v1275 = vpop.f32.mrf.mxu0
      %v1276 = vadd.f32 %v706, %v1275
      %1277 = vdwg.mxu0
      %1278 = vmatpush.msra.mxu0 %v570
      %1279 = vmatpush.msra.mxu0 %v568
      %1280 = vmatpush.msra.mxu0 %v566
      %1281 = vmatpush.msra.mxu0 %v564
      %1282 = vmatpush.msra.mxu0 %v562
      %1283 = vmatpush.msra.mxu0 %v560
      %1284 = vmatpush.msra.mxu0 %v558
      %1285 = vmatpush.msra.mxu0 %v556
      %1286 = vmatpush.msra.mxu0 %v554
      %1287 = vmatpush.msra.mxu0 %v552
      %1288 = vmatpush.msra.mxu0 %v550
      %1289 = vmatpush.msra.mxu0 %v548
      %1290 = vmatpush.msra.mxu0 %v546
      %1291 = vmatpush.msra.mxu0 %v544
      %1292 = vmatpush.msra.mxu0 %v542
      %1293 = vmatpush.msra.mxu0 %v540
      %1294 = vmatmul.f32.gmra.mxu0 %v396
      %v1295 = vpop.f32.mrf.mxu0
      %v1296 = vadd.f32 %v1231, %v1295
      %1297 = vmatmul.f32.gmra.mxu0 %v403
      %v1298 = vpop.f32.mrf.mxu0
      %v1299 = vadd.f32 %v1234, %v1298
      %1300 = vmatmul.f32.gmra.mxu0 %v410
      %v1301 = vpop.f32.mrf.mxu0
      %v1302 = vadd.f32 %v1237, %v1301
      %1303 = vmatmul.f32.gmra.mxu0 %v417
      %v1304 = vpop.f32.mrf.mxu0
      %v1305 = vadd.f32 %v1240, %v1304
      %1306 = vmatmul.f32.gmra.mxu0 %v424
      %v1307 = vpop.f32.mrf.mxu0
      %v1308 = vadd.f32 %v1243, %v1307
      %1309 = vmatmul.f32.gmra.mxu0 %v431
      %v1310 = vpop.f32.mrf.mxu0
      %v1311 = vadd.f32 %v1246, %v1310
      %1312 = vmatmul.f32.gmra.mxu0 %v438
      %v1313 = vpop.f32.mrf.mxu0
      %v1314 = vadd.f32 %v1249, %v1313
      %1315 = vmatmul.f32.gmra.mxu0 %v445
      %v1316 = vpop.f32.mrf.mxu0
      %v1317 = vadd.f32 %v1252, %v1316
      %1318 = vmatmul.f32.gmra.mxu0 %v452
      %v1319 = vpop.f32.mrf.mxu0
      %v1320 = vadd.f32 %v1255, %v1319
      %1321 = vmatmul.f32.gmra.mxu0 %v459
      %v1322 = vpop.f32.mrf.mxu0
      %v1323 = vadd.f32 %v1258, %v1322
      %1324 = vmatmul.f32.gmra.mxu0 %v466
      %v1325 = vpop.f32.mrf.mxu0
      %v1326 = vadd.f32 %v1261, %v1325
      %1327 = vmatmul.f32.gmra.mxu0 %v473
      %v1328 = vpop.f32.mrf.mxu0
      %v1329 = vadd.f32 %v1264, %v1328
      %1330 = vmatmul.f32.gmra.mxu0 %v480
      %v1331 = vpop.f32.mrf.mxu0
      %v1332 = vadd.f32 %v1267, %v1331
      %1333 = vmatmul.f32.gmra.mxu0 %v487
      %v1334 = vpop.f32.mrf.mxu0
      %v1335 = vadd.f32 %v1270, %v1334
      %1336 = vmatmul.f32.gmra.mxu0 %v494
      %v1337 = vpop.f32.mrf.mxu0
      %v1338 = vadd.f32 %v1273, %v1337
      %1339 = vmatmul.f32.gmra.mxu0 %v501
      %v1340 = vpop.f32.mrf.mxu0
      %v1341 = vadd.f32 %v1276, %v1340
      %1342 = vdwg.mxu0
      %1343 = vmatpush.msra.mxu0 %v602
      %1344 = vmatpush.msra.mxu0 %v600
      %1345 = vmatpush.msra.mxu0 %v598
      %1346 = vmatpush.msra.mxu0 %v596
      %1347 = vmatpush.msra.mxu0 %v594
      %1348 = vmatpush.msra.mxu0 %v592
      %1349 = vmatpush.msra.mxu0 %v590
      %1350 = vmatpush.msra.mxu0 %v588
      %1351 = vmatpush.msra.mxu0 %v586
      %1352 = vmatpush.msra.mxu0 %v584
      %1353 = vmatpush.msra.mxu0 %v582
      %1354 = vmatpush.msra.mxu0 %v580
      %1355 = vmatpush.msra.mxu0 %v578
      %1356 = vmatpush.msra.mxu0 %v576
      %1357 = vmatpush.msra.mxu0 %v574
      %1358 = vmatpush.msra.mxu0 %v572
      %1359 = vmatmul.f32.gmra.mxu0 %v397
      %v1360 = vpop.f32.mrf.mxu0
      %v1361 = vadd.f32 %v1296, %v1360
      %1362 = vmatmul.f32.gmra.mxu0 %v404
      %v1363 = vpop.f32.mrf.mxu0
      %v1364 = vadd.f32 %v1299, %v1363
      %1365 = vmatmul.f32.gmra.mxu0 %v411
      %v1366 = vpop.f32.mrf.mxu0
      %v1367 = vadd.f32 %v1302, %v1366
      %1368 = vmatmul.f32.gmra.mxu0 %v418
      %v1369 = vpop.f32.mrf.mxu0
      %v1370 = vadd.f32 %v1305, %v1369
      %1371 = vmatmul.f32.gmra.mxu0 %v425
      %v1372 = vpop.f32.mrf.mxu0
      %v1373 = vadd.f32 %v1308, %v1372
      %1374 = vmatmul.f32.gmra.mxu0 %v432
      %v1375 = vpop.f32.mrf.mxu0
      %v1376 = vadd.f32 %v1311, %v1375
      %1377 = vmatmul.f32.gmra.mxu0 %v439
      %v1378 = vpop.f32.mrf.mxu0
      %v1379 = vadd.f32 %v1314, %v1378
      %1380 = vmatmul.f32.gmra.mxu0 %v446
      %v1381 = vpop.f32.mrf.mxu0
      %v1382 = vadd.f32 %v1317, %v1381
      %1383 = vmatmul.f32.gmra.mxu0 %v453
      %v1384 = vpop.f32.mrf.mxu0
      %v1385 = vadd.f32 %v1320, %v1384
      %1386 = vmatmul.f32.gmra.mxu0 %v460
      %v1387 = vpop.f32.mrf.mxu0
      %v1388 = vadd.f32 %v1323, %v1387
      %1389 = vmatmul.f32.gmra.mxu0 %v467
      %v1390 = vpop.f32.mrf.mxu0
      %v1391 = vadd.f32 %v1326, %v1390
      %1392 = vmatmul.f32.gmra.mxu0 %v474
      %v1393 = vpop.f32.mrf.mxu0
      %v1394 = vadd.f32 %v1329, %v1393
      %1395 = vmatmul.f32.gmra.mxu0 %v481
      %v1396 = vpop.f32.mrf.mxu0
      %v1397 = vadd.f32 %v1332, %v1396
      %1398 = vmatmul.f32.gmra.mxu0 %v488
      %v1399 = vpop.f32.mrf.mxu0
      %v1400 = vadd.f32 %v1335, %v1399
      %1401 = vmatmul.f32.gmra.mxu0 %v495
      %v1402 = vpop.f32.mrf.mxu0
      %v1403 = vadd.f32 %v1338, %v1402
      %1404 = vmatmul.f32.gmra.mxu0 %v502
      %v1405 = vpop.f32.mrf.mxu0
      %v1406 = vadd.f32 %v1341, %v1405
      %1407 = vdwg.mxu0
      %1408 = vmatpush.msra.mxu0 %v634
      %1409 = vmatpush.msra.mxu0 %v632
      %1410 = vmatpush.msra.mxu0 %v630
      %1411 = vmatpush.msra.mxu0 %v628
      %1412 = vmatpush.msra.mxu0 %v626
      %1413 = vmatpush.msra.mxu0 %v624
      %1414 = vmatpush.msra.mxu0 %v622
      %1415 = vmatpush.msra.mxu0 %v620
      %1416 = vmatpush.msra.mxu0 %v618
      %1417 = vmatpush.msra.mxu0 %v616
      %1418 = vmatpush.msra.mxu0 %v614
      %1419 = vmatpush.msra.mxu0 %v612
      %1420 = vmatpush.msra.mxu0 %v610
      %1421 = vmatpush.msra.mxu0 %v608
      %1422 = vmatpush.msra.mxu0 %v606
      %1423 = vmatpush.msra.mxu0 %v604
      %1424 = vmatmul.f32.gmra.mxu0 %v398
      %v1425 = vpop.f32.mrf.mxu0
      %v1426 = vadd.f32 %v1361, %v1425
      %1427 = vmatmul.f32.gmra.mxu0 %v405
      %v1428 = vpop.f32.mrf.mxu0
      %v1429 = vadd.f32 %v1364, %v1428
      %1430 = vmatmul.f32.gmra.mxu0 %v412
      %v1431 = vpop.f32.mrf.mxu0
      %v1432 = vadd.f32 %v1367, %v1431
      %1433 = vmatmul.f32.gmra.mxu0 %v419
      %v1434 = vpop.f32.mrf.mxu0
      %v1435 = vadd.f32 %v1370, %v1434
      %1436 = vmatmul.f32.gmra.mxu0 %v426
      %v1437 = vpop.f32.mrf.mxu0
      %v1438 = vadd.f32 %v1373, %v1437
      %1439 = vmatmul.f32.gmra.mxu0 %v433
      %v1440 = vpop.f32.mrf.mxu0
      %v1441 = vadd.f32 %v1376, %v1440
      %1442 = vmatmul.f32.gmra.mxu0 %v440
      %v1443 = vpop.f32.mrf.mxu0
      %v1444 = vadd.f32 %v1379, %v1443
      %1445 = vmatmul.f32.gmra.mxu0 %v447
      %v1446 = vpop.f32.mrf.mxu0
      %v1447 = vadd.f32 %v1382, %v1446
      %1448 = vmatmul.f32.gmra.mxu0 %v454
      %v1449 = vpop.f32.mrf.mxu0
      %v1450 = vadd.f32 %v1385, %v1449
      %1451 = vmatmul.f32.gmra.mxu0 %v461
      %v1452 = vpop.f32.mrf.mxu0
      %v1453 = vadd.f32 %v1388, %v1452
      %1454 = vmatmul.f32.gmra.mxu0 %v468
      %v1455 = vpop.f32.mrf.mxu0
      %v1456 = vadd.f32 %v1391, %v1455
      %1457 = vmatmul.f32.gmra.mxu0 %v475
      %v1458 = vpop.f32.mrf.mxu0
      %v1459 = vadd.f32 %v1394, %v1458
      %1460 = vmatmul.f32.gmra.mxu0 %v482
      %v1461 = vpop.f32.mrf.mxu0
      %v1462 = vadd.f32 %v1397, %v1461
      %1463 = vmatmul.f32.gmra.mxu0 %v489
      %v1464 = vpop.f32.mrf.mxu0
      %v1465 = vadd.f32 %v1400, %v1464
      %1466 = vmatmul.f32.gmra.mxu0 %v496
      %v1467 = vpop.f32.mrf.mxu0
      %v1468 = vadd.f32 %v1403, %v1467
      %1469 = vmatmul.f32.gmra.mxu0 %v503
      %v1470 = vpop.f32.mrf.mxu0
      %v1471 = vadd.f32 %v1406, %v1470
      %1472 = vdwg.mxu0
      %1473 = vmatpush.msra.mxu0 %v666
      %1474 = vmatpush.msra.mxu0 %v664
      %1475 = vmatpush.msra.mxu0 %v662
      %1476 = vmatpush.msra.mxu0 %v660
      %1477 = vmatpush.msra.mxu0 %v658
      %1478 = vmatpush.msra.mxu0 %v656
      %1479 = vmatpush.msra.mxu0 %v654
      %1480 = vmatpush.msra.mxu0 %v652
      %1481 = vmatpush.msra.mxu0 %v650
      %1482 = vmatpush.msra.mxu0 %v648
      %1483 = vmatpush.msra.mxu0 %v646
      %1484 = vmatpush.msra.mxu0 %v644
      %1485 = vmatpush.msra.mxu0 %v642
      %1486 = vmatpush.msra.mxu0 %v640
      %1487 = vmatpush.msra.mxu0 %v638
      %1488 = vmatpush.msra.mxu0 %v636
      %1489 = vmatmul.f32.gmra.mxu0 %v399
      %v1490 = vpop.f32.mrf.mxu0
      %v1491 = vadd.f32 %v1426, %v1490
      %1492 = vmatmul.f32.gmra.mxu0 %v406
      %v1493 = vpop.f32.mrf.mxu0
      %v1494 = vadd.f32 %v1429, %v1493
      %1495 = vmatmul.f32.gmra.mxu0 %v413
      %v1496 = vpop.f32.mrf.mxu0
      %v1497 = vadd.f32 %v1432, %v1496
      %1498 = vmatmul.f32.gmra.mxu0 %v420
      %v1499 = vpop.f32.mrf.mxu0
      %v1500 = vadd.f32 %v1435, %v1499
      %1501 = vmatmul.f32.gmra.mxu0 %v427
      %v1502 = vpop.f32.mrf.mxu0
      %v1503 = vadd.f32 %v1438, %v1502
      %1504 = vmatmul.f32.gmra.mxu0 %v434
      %v1505 = vpop.f32.mrf.mxu0
      %v1506 = vadd.f32 %v1441, %v1505
      %1507 = vmatmul.f32.gmra.mxu0 %v441
      %v1508 = vpop.f32.mrf.mxu0
      %v1509 = vadd.f32 %v1444, %v1508
      %1510 = vmatmul.f32.gmra.mxu0 %v448
      %v1511 = vpop.f32.mrf.mxu0
      %v1512 = vadd.f32 %v1447, %v1511
      %1513 = vmatmul.f32.gmra.mxu0 %v455
      %v1514 = vpop.f32.mrf.mxu0
      %v1515 = vadd.f32 %v1450, %v1514
      %1516 = vmatmul.f32.gmra.mxu0 %v462
      %v1517 = vpop.f32.mrf.mxu0
      %v1518 = vadd.f32 %v1453, %v1517
      %1519 = vmatmul.f32.gmra.mxu0 %v469
      %v1520 = vpop.f32.mrf.mxu0
      %v1521 = vadd.f32 %v1456, %v1520
      %1522 = vmatmul.f32.gmra.mxu0 %v476
      %v1523 = vpop.f32.mrf.mxu0
      %v1524 = vadd.f32 %v1459, %v1523
      %1525 = vmatmul.f32.gmra.mxu0 %v483
      %v1526 = vpop.f32.mrf.mxu0
      %v1527 = vadd.f32 %v1462, %v1526
      %1528 = vmatmul.f32.gmra.mxu0 %v490
      %v1529 = vpop.f32.mrf.mxu0
      %v1530 = vadd.f32 %v1465, %v1529
      %1531 = vmatmul.f32.gmra.mxu0 %v497
      %v1532 = vpop.f32.mrf.mxu0
      %v1533 = vadd.f32 %v1468, %v1532
      %1534 = vmatmul.f32.gmra.mxu0 %v504
      %v1535 = vpop.f32.mrf.mxu0
      %v1536 = vadd.f32 %v1471, %v1535
      %1537 = vdwg.mxu0
      %1538 = vmatpush.msra.mxu0 %v698
      %1539 = vmatpush.msra.mxu0 %v696
      %1540 = vmatpush.msra.mxu0 %v694
      %1541 = vmatpush.msra.mxu0 %v692
      %1542 = vmatpush.msra.mxu0 %v690
      %1543 = vmatpush.msra.mxu0 %v688
      %1544 = vmatpush.msra.mxu0 %v686
      %1545 = vmatpush.msra.mxu0 %v684
      %1546 = vmatpush.msra.mxu0 %v682
      %1547 = vmatpush.msra.mxu0 %v680
      %1548 = vmatpush.msra.mxu0 %v678
      %1549 = vmatpush.msra.mxu0 %v676
      %1550 = vmatpush.msra.mxu0 %v674
      %1551 = vmatpush.msra.mxu0 %v672
      %1552 = vmatpush.msra.mxu0 %v670
      %1553 = vmatpush.msra.mxu0 %v668
      %1554 = vmatmul.f32.gmra.mxu0 %v400
      %v1555 = vpop.f32.mrf.mxu0
      %v1556 = vadd.f32 %v1491, %v1555
      %1557 = vmatmul.f32.gmra.mxu0 %v407
      %v1558 = vpop.f32.mrf.mxu0
      %v1559 = vadd.f32 %v1494, %v1558
      %1560 = vmatmul.f32.gmra.mxu0 %v414
      %v1561 = vpop.f32.mrf.mxu0
      %v1562 = vadd.f32 %v1497, %v1561
      %1563 = vmatmul.f32.gmra.mxu0 %v421
      %v1564 = vpop.f32.mrf.mxu0
      %v1565 = vadd.f32 %v1500, %v1564
      %1566 = vmatmul.f32.gmra.mxu0 %v428
      %v1567 = vpop.f32.mrf.mxu0
      %v1568 = vadd.f32 %v1503, %v1567
      %1569 = vmatmul.f32.gmra.mxu0 %v435
      %v1570 = vpop.f32.mrf.mxu0
      %v1571 = vadd.f32 %v1506, %v1570
      %1572 = vmatmul.f32.gmra.mxu0 %v442
      %v1573 = vpop.f32.mrf.mxu0
      %v1574 = vadd.f32 %v1509, %v1573
      %1575 = vmatmul.f32.gmra.mxu0 %v449
      %v1576 = vpop.f32.mrf.mxu0
      %v1577 = vadd.f32 %v1512, %v1576
      %1578 = vmatmul.f32.gmra.mxu0 %v456
      %v1579 = vpop.f32.mrf.mxu0
      %v1580 = vadd.f32 %v1515, %v1579
      %1581 = vmatmul.f32.gmra.mxu0 %v463
      %v1582 = vpop.f32.mrf.mxu0
      %v1583 = vadd.f32 %v1518, %v1582
      %1584 = vmatmul.f32.gmra.mxu0 %v470
      %v1585 = vpop.f32.mrf.mxu0
      %v1586 = vadd.f32 %v1521, %v1585
      %1587 = vmatmul.f32.gmra.mxu0 %v477
      %v1588 = vpop.f32.mrf.mxu0
      %v1589 = vadd.f32 %v1524, %v1588
      %1590 = vmatmul.f32.gmra.mxu0 %v484
      %v1591 = vpop.f32.mrf.mxu0
      %v1592 = vadd.f32 %v1527, %v1591
      %1593 = vmatmul.f32.gmra.mxu0 %v491
      %v1594 = vpop.f32.mrf.mxu0
      %v1595 = vadd.f32 %v1530, %v1594
      %1596 = vmatmul.f32.gmra.mxu0 %v498
      %v1597 = vpop.f32.mrf.mxu0
      %v1598 = vadd.f32 %v1533, %v1597
      %1599 = vmatmul.f32.gmra.mxu0 %v505
      %v1600 = vpop.f32.mrf.mxu0
      %v1601 = vadd.f32 %v1536, %v1600
      %1602 = vdwg.mxu0
      %1603 = vmatpush.msra.mxu0 0.0
      %1604 = vmatpush.msra.mxu0 0.0
      %1605 = vmatpush.msra.mxu0 0.0
      %1606 = vmatpush.msra.mxu0 0.0
      %1607 = vmatpush.msra.mxu0 0.0
      %1608 = vmatpush.msra.mxu0 0.0
      %1609 = vmatpush.msra.mxu0 0.0
      %1610 = vmatpush.msra.mxu0 0.0
      %1611 = vmatpush.msra.mxu0 0.0
      %1612 = vmatpush.msra.mxu0 0.0
      %1613 = vmatpush.msra.mxu0 0.0
      %1614 = vmatpush.msra.mxu0 0.0
      %1615 = vmatpush.msra.mxu0 0.0
      %1616 = vmatpush.msra.mxu0 0.0
      %1617 = vmatpush.msra.mxu0 %v702
      %1618 = vmatpush.msra.mxu0 %v700
      %1619 = vmatmul.f32.gmra.mxu0 %v711
      %v1620 = vpop.f32.mrf.mxu0
      %v1621 = vadd.f32 %v1556, %v1620
      %1622 = vmatmul.f32.gmra.mxu0 %v714
      %v1623 = vpop.f32.mrf.mxu0
      %v1624 = vadd.f32 %v1559, %v1623
      %1625 = vmatmul.f32.gmra.mxu0 %v717
      %v1626 = vpop.f32.mrf.mxu0
      %v1627 = vadd.f32 %v1562, %v1626
      %1628 = vmatmul.f32.gmra.mxu0 %v720
      %v1629 = vpop.f32.mrf.mxu0
      %v1630 = vadd.f32 %v1565, %v1629
      %1631 = vmatmul.f32.gmra.mxu0 %v723
      %v1632 = vpop.f32.mrf.mxu0
      %v1633 = vadd.f32 %v1568, %v1632
      %1634 = vmatmul.f32.gmra.mxu0 %v726
      %v1635 = vpop.f32.mrf.mxu0
      %v1636 = vadd.f32 %v1571, %v1635
      %1637 = vmatmul.f32.gmra.mxu0 %v729
      %v1638 = vpop.f32.mrf.mxu0
      %v1639 = vadd.f32 %v1574, %v1638
      %1640 = vmatmul.f32.gmra.mxu0 %v732
      %v1641 = vpop.f32.mrf.mxu0
      %v1642 = vadd.f32 %v1577, %v1641
      %1643 = vmatmul.f32.gmra.mxu0 %v735
      %v1644 = vpop.f32.mrf.mxu0
      %v1645 = vadd.f32 %v1580, %v1644
      %1646 = vmatmul.f32.gmra.mxu0 %v738
      %v1647 = vpop.f32.mrf.mxu0
      %v1648 = vadd.f32 %v1583, %v1647
      %1649 = vmatmul.f32.gmra.mxu0 %v741
      %v1650 = vpop.f32.mrf.mxu0
      %v1651 = vadd.f32 %v1586, %v1650
      %1652 = vmatmul.f32.gmra.mxu0 %v744
      %v1653 = vpop.f32.mrf.mxu0
      %v1654 = vadd.f32 %v1589, %v1653
      %1655 = vmatmul.f32.gmra.mxu0 %v747
      %v1656 = vpop.f32.mrf.mxu0
      %v1657 = vadd.f32 %v1592, %v1656
      %1658 = vmatmul.f32.gmra.mxu0 %v750
      %v1659 = vpop.f32.mrf.mxu0
      %v1660 = vadd.f32 %v1595, %v1659
      %1661 = vmatmul.f32.gmra.mxu0 %v753
      %v1662 = vpop.f32.mrf.mxu0
      %v1663 = vadd.f32 %v1598, %v1662
      %1664 = vmatmul.f32.gmra.mxu0 %v756
      %v1665 = vpop.f32.mrf.mxu0
      %v1666 = vadd.f32 %v1601, %v1665
      %1667 = vdwg.mxu0
      %v1668 = vmax.f32 %v1166, 0.0
      %v1669 = vmax.f32 %v1621, 0.0
      %v1670 = vmax.f32 %v1169, 0.0
      %v1671 = vmax.f32 %v1624, 0.0
      %v1672 = vmax.f32 %v1172, 0.0
      %v1673 = vmax.f32 %v1627, 0.0
      %v1674 = vmax.f32 %v1175, 0.0
      %v1675 = vmax.f32 %v1630, 0.0
      %v1676 = vmax.f32 %v1178, 0.0
      %v1677 = vmax.f32 %v1633, 0.0
      %v1678 = vmax.f32 %v1181, 0.0
      %v1679 = vmax.f32 %v1636, 0.0
      %v1680 = vmax.f32 %v1184, 0.0
      %v1681 = vmax.f32 %v1639, 0.0
      %v1682 = vmax.f32 %v1187, 0.0
      %v1683 = vmax.f32 %v1642, 0.0
      %v1684 = vmax.f32 %v1190, 0.0
      %v1685 = vmax.f32 %v1645, 0.0
      %v1686 = vmax.f32 %v1193, 0.0
      %v1687 = vmax.f32 %v1648, 0.0
      %v1688 = vmax.f32 %v1196, 0.0
      %v1689 = vmax.f32 %v1651, 0.0
      %v1690 = vmax.f32 %v1199, 0.0
      %v1691 = vmax.f32 %v1654, 0.0
      %v1692 = vmax.f32 %v1202, 0.0
      %v1693 = vmax.f32 %v1657, 0.0
      %v1694 = vmax.f32 %v1205, 0.0
      %v1695 = vmax.f32 %v1660, 0.0
      %v1696 = vmax.f32 %v1208, 0.0
      %v1697 = vmax.f32 %v1663, 0.0
      %v1698 = vmax.f32 %v1211, 0.0
      %v1699 = vmax.f32 %v1666, 0.0
      %v1700 = vld [vmem:[%s3] sm:$0xff]
      %v1701 = vld [vmem:[%s3 + $0x8] sm:$0xff]
      %v1702 = vld [vmem:[%s3 + $0x10] sm:$0xff]
      %v1703 = vld [vmem:[%s3 + $0x18] sm:$0xff]
      %v1704 = vld [vmem:[%s3 + $0x20] sm:$0xff]
      %v1705 = vld [vmem:[%s3 + $0x28] sm:$0xff]
      %v1706 = vld [vmem:[%s3 + $0x30] sm:$0xff]
      %v1707 = vld [vmem:[%s3 + $0x38] sm:$0xff]
      %v1708 = vld [vmem:[%s3 + $0x40] sm:$0xff]
      %v1709 = vld [vmem:[%s3 + $0x48] sm:$0xff]
      %v1710 = vld [vmem:[%s3 + $0x50] sm:$0xff]
      %v1711 = vld [vmem:[%s3 + $0x58] sm:$0xff]
      %v1712 = vld [vmem:[%s3 + $0x60] sm:$0xff]
      %v1713 = vld [vmem:[%s3 + $0x68] sm:$0xff]
      %v1714 = vld [vmem:[%s3 + $0x70] sm:$0xff]
      %v1715 = vld [vmem:[%s3 + $0x78] sm:$0xff]
      %v1716 = vld [vmem:[%s3 + $0x80] sm:$0xff]
      %v1717 = vld [vmem:[%s3 + $0x88] sm:$0xff]
      %v1718 = vld [vmem:[%s3 + $0x90] sm:$0xff]
      %v1719 = vld [vmem:[%s3 + $0x98] sm:$0xff]
      %v1720 = vld [vmem:[%s3 + $0xa0] sm:$0xff]
      %v1721 = vld [vmem:[%s3 + $0xa8] sm:$0xff]
      %v1722 = vld [vmem:[%s3 + $0xb0] sm:$0xff]
      %v1723 = vld [vmem:[%s3 + $0xb8] sm:$0xff]
      %v1724 = vld [vmem:[%s3 + $0xc0] sm:$0xff]
      %v1725 = vld [vmem:[%s3 + $0xc8] sm:$0xff]
      %v1726 = vld [vmem:[%s3 + $0xd0] sm:$0xff]
      %v1727 = vld [vmem:[%s3 + $0xd8] sm:$0xff]
      %v1728 = vld [vmem:[%s3 + $0xe0] sm:$0xff]
      %v1729 = vld [vmem:[%s3 + $0xe8] sm:$0xff]
      %v1730 = vld [vmem:[%s3 + $0xf0] sm:$0xff]
      %v1731 = vld [vmem:[%s3 + $0xf8] sm:$0xff]
      %v1732 = vld [vmem:[%s4] sm:$0x1]
      %v1734 = vperm.slane %v1732, 0
      %1736 = vmatpush.msra.mxu0 %v1715
      %1737 = vmatpush.msra.mxu0 %v1714
      %1738 = vmatpush.msra.mxu0 %v1713
      %1739 = vmatpush.msra.mxu0 %v1712
      %1740 = vmatpush.msra.mxu0 %v1711
      %1741 = vmatpush.msra.mxu0 %v1710
      %1742 = vmatpush.msra.mxu0 %v1709
      %1743 = vmatpush.msra.mxu0 %v1708
      %1744 = vmatpush.msra.mxu0 %v1707
      %1745 = vmatpush.msra.mxu0 %v1706
      %1746 = vmatpush.msra.mxu0 %v1705
      %1747 = vmatpush.msra.mxu0 %v1704
      %1748 = vmatpush.msra.mxu0 %v1703
      %1749 = vmatpush.msra.mxu0 %v1702
      %1750 = vmatpush.msra.mxu0 %v1701
      %1751 = vmatpush.msra.mxu0 %v1700
      %1752 = vmatmul.f32.gmra.mxu0 %v1668
      %v1753 = vpop.f32.mrf.mxu0
      %v1754 = vadd.f32 %v1734, %v1753
      %1755 = vmatmul.f32.gmra.mxu0 %v1670
      %v1756 = vpop.f32.mrf.mxu0
      %v1757 = vadd.f32 %v1734, %v1756
      %1758 = vmatmul.f32.gmra.mxu0 %v1672
      %v1759 = vpop.f32.mrf.mxu0
      %v1760 = vadd.f32 %v1734, %v1759
      %1761 = vmatmul.f32.gmra.mxu0 %v1674
      %v1762 = vpop.f32.mrf.mxu0
      %v1763 = vadd.f32 %v1734, %v1762
      %1764 = vmatmul.f32.gmra.mxu0 %v1676
      %v1765 = vpop.f32.mrf.mxu0
      %v1766 = vadd.f32 %v1734, %v1765
      %1767 = vmatmul.f32.gmra.mxu0 %v1678
      %v1768 = vpop.f32.mrf.mxu0
      %v1769 = vadd.f32 %v1734, %v1768
      %1770 = vmatmul.f32.gmra.mxu0 %v1680
      %v1771 = vpop.f32.mrf.mxu0
      %v1772 = vadd.f32 %v1734, %v1771
      %1773 = vmatmul.f32.gmra.mxu0 %v1682
      %v1774 = vpop.f32.mrf.mxu0
      %v1775 = vadd.f32 %v1734, %v1774
      %1776 = vmatmul.f32.gmra.mxu0 %v1684
      %v1777 = vpop.f32.mrf.mxu0
      %v1778 = vadd.f32 %v1734, %v1777
      %1779 = vmatmul.f32.gmra.mxu0 %v1686
      %v1780 = vpop.f32.mrf.mxu0
      %v1781 = vadd.f32 %v1734, %v1780
      %1782 = vmatmul.f32.gmra.mxu0 %v1688
      %v1783 = vpop.f32.mrf.mxu0
      %v1784 = vadd.f32 %v1734, %v1783
      %1785 = vmatmul.f32.gmra.mxu0 %v1690
      %v1786 = vpop.f32.mrf.mxu0
      %v1787 = vadd.f32 %v1734, %v1786
      %1788 = vmatmul.f32.gmra.mxu0 %v1692
      %v1789 = vpop.f32.mrf.mxu0
      %v1790 = vadd.f32 %v1734, %v1789
      %1791 = vmatmul.f32.gmra.mxu0 %v1694
      %v1792 = vpop.f32.mrf.mxu0
      %v1793 = vadd.f32 %v1734, %v1792
      %1794 = vmatmul.f32.gmra.mxu0 %v1696
      %v1795 = vpop.f32.mrf.mxu0
      %v1796 = vadd.f32 %v1734, %v1795
      %1797 = vmatmul.f32.gmra.mxu0 %v1698
      %v1798 = vpop.f32.mrf.mxu0
      %v1799 = vadd.f32 %v1734, %v1798
      %1800 = vdwg.mxu0
      %1801 = vmatpush.msra.mxu0 %v1731
      %1802 = vmatpush.msra.mxu0 %v1730
      %1803 = vmatpush.msra.mxu0 %v1729
      %1804 = vmatpush.msra.mxu0 %v1728
      %1805 = vmatpush.msra.mxu0 %v1727
      %1806 = vmatpush.msra.mxu0 %v1726
      %1807 = vmatpush.msra.mxu0 %v1725
      %1808 = vmatpush.msra.mxu0 %v1724
      %1809 = vmatpush.msra.mxu0 %v1723
      %1810 = vmatpush.msra.mxu0 %v1722
      %1811 = vmatpush.msra.mxu0 %v1721
      %1812 = vmatpush.msra.mxu0 %v1720
      %1813 = vmatpush.msra.mxu0 %v1719
      %1814 = vmatpush.msra.mxu0 %v1718
      %1815 = vmatpush.msra.mxu0 %v1717
      %1816 = vmatpush.msra.mxu0 %v1716
      %1817 = vmatmul.f32.gmra.mxu0 %v1669
      %v1818 = vpop.f32.mrf.mxu0
      %v1819 = vadd.f32 %v1754, %v1818
      %1820 = vmatmul.f32.gmra.mxu0 %v1671
      %v1821 = vpop.f32.mrf.mxu0
      %v1822 = vadd.f32 %v1757, %v1821
      %1823 = vmatmul.f32.gmra.mxu0 %v1673
      %v1824 = vpop.f32.mrf.mxu0
      %v1825 = vadd.f32 %v1760, %v1824
      %1826 = vmatmul.f32.gmra.mxu0 %v1675
      %v1827 = vpop.f32.mrf.mxu0
      %v1828 = vadd.f32 %v1763, %v1827
      %1829 = vmatmul.f32.gmra.mxu0 %v1677
      %v1830 = vpop.f32.mrf.mxu0
      %v1831 = vadd.f32 %v1766, %v1830
      %1832 = vmatmul.f32.gmra.mxu0 %v1679
      %v1833 = vpop.f32.mrf.mxu0
      %v1834 = vadd.f32 %v1769, %v1833
      %1835 = vmatmul.f32.gmra.mxu0 %v1681
      %v1836 = vpop.f32.mrf.mxu0
      %v1837 = vadd.f32 %v1772, %v1836
      %1838 = vmatmul.f32.gmra.mxu0 %v1683
      %v1839 = vpop.f32.mrf.mxu0
      %v1840 = vadd.f32 %v1775, %v1839
      %1841 = vmatmul.f32.gmra.mxu0 %v1685
      %v1842 = vpop.f32.mrf.mxu0
      %v1843 = vadd.f32 %v1778, %v1842
      %1844 = vmatmul.f32.gmra.mxu0 %v1687
      %v1845 = vpop.f32.mrf.mxu0
      %v1846 = vadd.f32 %v1781, %v1845
      %1847 = vmatmul.f32.gmra.mxu0 %v1689
      %v1848 = vpop.f32.mrf.mxu0
      %v1849 = vadd.f32 %v1784, %v1848
      %1850 = vmatmul.f32.gmra.mxu0 %v1691
      %v1851 = vpop.f32.mrf.mxu0
      %v1852 = vadd.f32 %v1787, %v1851
      %1853 = vmatmul.f32.gmra.mxu0 %v1693
      %v1854 = vpop.f32.mrf.mxu0
      %v1855 = vadd.f32 %v1790, %v1854
      %1856 = vmatmul.f32.gmra.mxu0 %v1695
      %v1857 = vpop.f32.mrf.mxu0
      %v1858 = vadd.f32 %v1793, %v1857
      %1859 = vmatmul.f32.gmra.mxu0 %v1697
      %v1860 = vpop.f32.mrf.mxu0
      %v1861 = vadd.f32 %v1796, %v1860
      %1862 = vmatmul.f32.gmra.mxu0 %v1699
      %v1863 = vpop.f32.mrf.mxu0
      %v1864 = vadd.f32 %v1799, %v1863
      %1865 = vdwg.mxu0
      %v1866 = vmax.f32 %v1819, 0.0
      %v1867 = vmax.f32 %v1822, 0.0
      %v1868 = vmax.f32 %v1825, 0.0
      %v1869 = vmax.f32 %v1828, 0.0
      %v1870 = vmax.f32 %v1831, 0.0
      %v1871 = vmax.f32 %v1834, 0.0
      %v1872 = vmax.f32 %v1837, 0.0
      %v1873 = vmax.f32 %v1840, 0.0
      %v1874 = vmax.f32 %v1843, 0.0
      %v1875 = vmax.f32 %v1846, 0.0
      %v1876 = vmax.f32 %v1849, 0.0
      %v1877 = vmax.f32 %v1852, 0.0
      %v1878 = vmax.f32 %v1855, 0.0
      %v1879 = vmax.f32 %v1858, 0.0
      %v1880 = vmax.f32 %v1861, 0.0
      %v1881 = vmax.f32 %v1864, 0.0
      %v1882 = vld [vmem:[%s5] sm:$0xff]
      %v1883 = vld [vmem:[%s5 + $0x8] sm:$0xff]
      %v1884 = vld [vmem:[%s5 + $0x10] sm:$0xff]
      %v1885 = vld [vmem:[%s5 + $0x18] sm:$0xff]
      %v1886 = vld [vmem:[%s5 + $0x20] sm:$0xff]
      %v1887 = vld [vmem:[%s5 + $0x28] sm:$0xff]
      %v1888 = vld [vmem:[%s5 + $0x30] sm:$0xff]
      %v1889 = vld [vmem:[%s5 + $0x38] sm:$0xff]
      %v1890 = vld [vmem:[%s5 + $0x40] sm:$0xff]
      %v1891 = vld [vmem:[%s5 + $0x48] sm:$0xff]
      %v1892 = vld [vmem:[%s5 + $0x50] sm:$0xff]
      %v1893 = vld [vmem:[%s5 + $0x58] sm:$0xff]
      %v1894 = vld [vmem:[%s5 + $0x60] sm:$0xff]
      %v1895 = vld [vmem:[%s5 + $0x68] sm:$0xff]
      %v1896 = vld [vmem:[%s5 + $0x70] sm:$0xff]
      %v1897 = vld [vmem:[%s5 + $0x78] sm:$0xff]
      %v1898 = vld [vmem:[%s6] sm:$0x1]
      %v1900 = vperm.slane %v1898, 0
      %1902 = vmatpush.msra.mxu0 %v1897
      %1903 = vmatpush.msra.mxu0 %v1896
      %1904 = vmatpush.msra.mxu0 %v1895
      %1905 = vmatpush.msra.mxu0 %v1894
      %1906 = vmatpush.msra.mxu0 %v1893
      %1907 = vmatpush.msra.mxu0 %v1892
      %1908 = vmatpush.msra.mxu0 %v1891
      %1909 = vmatpush.msra.mxu0 %v1890
      %1910 = vmatpush.msra.mxu0 %v1889
      %1911 = vmatpush.msra.mxu0 %v1888
      %1912 = vmatpush.msra.mxu0 %v1887
      %1913 = vmatpush.msra.mxu0 %v1886
      %1914 = vmatpush.msra.mxu0 %v1885
      %1915 = vmatpush.msra.mxu0 %v1884
      %1916 = vmatpush.msra.mxu0 %v1883
      %1917 = vmatpush.msra.mxu0 %v1882
      %1918 = vmatmul.f32.gmra.mxu0 %v1866
      %v1919 = vpop.f32.mrf.mxu0
      %v1920 = vadd.f32 %v1900, %v1919
      %1921 = vmatmul.f32.gmra.mxu0 %v1867
      %v1922 = vpop.f32.mrf.mxu0
      %v1923 = vadd.f32 %v1900, %v1922
      %1924 = vmatmul.f32.gmra.mxu0 %v1868
      %v1925 = vpop.f32.mrf.mxu0
      %v1926 = vadd.f32 %v1900, %v1925
      %1927 = vmatmul.f32.gmra.mxu0 %v1869
      %v1928 = vpop.f32.mrf.mxu0
      %v1929 = vadd.f32 %v1900, %v1928
      %1930 = vmatmul.f32.gmra.mxu0 %v1870
      %v1931 = vpop.f32.mrf.mxu0
      %v1932 = vadd.f32 %v1900, %v1931
      %1933 = vmatmul.f32.gmra.mxu0 %v1871
      %v1934 = vpop.f32.mrf.mxu0
      %v1935 = vadd.f32 %v1900, %v1934
      %1936 = vmatmul.f32.gmra.mxu0 %v1872
      %v1937 = vpop.f32.mrf.mxu0
      %v1938 = vadd.f32 %v1900, %v1937
      %1939 = vmatmul.f32.gmra.mxu0 %v1873
      %v1940 = vpop.f32.mrf.mxu0
      %v1941 = vadd.f32 %v1900, %v1940
      %1942 = vmatmul.f32.gmra.mxu0 %v1874
      %v1943 = vpop.f32.mrf.mxu0
      %v1944 = vadd.f32 %v1900, %v1943
      %1945 = vmatmul.f32.gmra.mxu0 %v1875
      %v1946 = vpop.f32.mrf.mxu0
      %v1947 = vadd.f32 %v1900, %v1946
      %1948 = vmatmul.f32.gmra.mxu0 %v1876
      %v1949 = vpop.f32.mrf.mxu0
      %v1950 = vadd.f32 %v1900, %v1949
      %1951 = vmatmul.f32.gmra.mxu0 %v1877
      %v1952 = vpop.f32.mrf.mxu0
      %v1953 = vadd.f32 %v1900, %v1952
      %1954 = vmatmul.f32.gmra.mxu0 %v1878
      %v1955 = vpop.f32.mrf.mxu0
      %v1956 = vadd.f32 %v1900, %v1955
      %1957 = vmatmul.f32.gmra.mxu0 %v1879
      %v1958 = vpop.f32.mrf.mxu0
      %v1959 = vadd.f32 %v1900, %v1958
      %1960 = vmatmul.f32.gmra.mxu0 %v1880
      %v1961 = vpop.f32.mrf.mxu0
      %v1962 = vadd.f32 %v1900, %v1961
      %1963 = vmatmul.f32.gmra.mxu0 %v1881
      %v1964 = vpop.f32.mrf.mxu0
      %v1965 = vadd.f32 %v1900, %v1964
      %1966 = vdwg.mxu0
      %v1967 = vmax.f32 %v1920, 0.0
      %v1968 = vmax.f32 %v1923, 0.0
      %v1969 = vmax.f32 %v1926, 0.0
      %v1970 = vmax.f32 %v1929, 0.0
      %v1971 = vmax.f32 %v1932, 0.0
      %v1972 = vmax.f32 %v1935, 0.0
      %v1973 = vmax.f32 %v1938, 0.0
      %v1974 = vmax.f32 %v1941, 0.0
      %v1975 = vmax.f32 %v1944, 0.0
      %v1976 = vmax.f32 %v1947, 0.0
      %v1977 = vmax.f32 %v1950, 0.0
      %v1978 = vmax.f32 %v1953, 0.0
      %v1979 = vmax.f32 %v1956, 0.0
      %v1980 = vmax.f32 %v1959, 0.0
      %v1981 = vmax.f32 %v1962, 0.0
      %v1982 = vmax.f32 %v1965, 0.0
      %v1983 = vadd.f32 %v1967, %v1866
      %v1984 = vadd.f32 %v1968, %v1867
      %v1985 = vadd.f32 %v1969, %v1868
      %v1986 = vadd.f32 %v1970, %v1869
      %v1987 = vadd.f32 %v1971, %v1870
      %v1988 = vadd.f32 %v1972, %v1871
      %v1989 = vadd.f32 %v1973, %v1872
      %v1990 = vadd.f32 %v1974, %v1873
      %v1991 = vadd.f32 %v1975, %v1874
      %v1992 = vadd.f32 %v1976, %v1875
      %v1993 = vadd.f32 %v1977, %v1876
      %v1994 = vadd.f32 %v1978, %v1877
      %v1995 = vadd.f32 %v1979, %v1878
      %v1996 = vadd.f32 %v1980, %v1879
      %v1997 = vadd.f32 %v1981, %v1880
      %v1998 = vadd.f32 %v1982, %v1881
      %v1999 = vld [vmem:[%s7] sm:$0xff]
      %v2000 = vld [vmem:[%s7 + $0x8] sm:$0xff]
      %v2001 = vld [vmem:[%s7 + $0x10] sm:$0xff]
      %v2002 = vld [vmem:[%s7 + $0x18] sm:$0xff]
      %v2003 = vld [vmem:[%s7 + $0x20] sm:$0xff]
      %v2004 = vld [vmem:[%s7 + $0x28] sm:$0xff]
      %v2005 = vld [vmem:[%s7 + $0x30] sm:$0xff]
      %v2006 = vld [vmem:[%s7 + $0x38] sm:$0xff]
      %v2007 = vld [vmem:[%s7 + $0x40] sm:$0xff]
      %v2008 = vld [vmem:[%s7 + $0x48] sm:$0xff]
      %v2009 = vld [vmem:[%s7 + $0x50] sm:$0xff]
      %v2010 = vld [vmem:[%s7 + $0x58] sm:$0xff]
      %v2011 = vld [vmem:[%s7 + $0x60] sm:$0xff]
      %v2012 = vld [vmem:[%s7 + $0x68] sm:$0xff]
      %v2013 = vld [vmem:[%s7 + $0x70] sm:$0xff]
      %v2014 = vld [vmem:[%s7 + $0x78] sm:$0xff]
      %v2015 = vld [vmem:[%s7 + $0x80] sm:$0xff]
      %v2016 = vld [vmem:[%s7 + $0x88] sm:$0xff]
      %v2017 = vld [vmem:[%s7 + $0x90] sm:$0xff]
      %v2018 = vld [vmem:[%s7 + $0x98] sm:$0xff]
      %v2019 = vld [vmem:[%s7 + $0xa0] sm:$0xff]
      %v2020 = vld [vmem:[%s7 + $0xa8] sm:$0xff]
      %v2021 = vld [vmem:[%s7 + $0xb0] sm:$0xff]
      %v2022 = vld [vmem:[%s7 + $0xb8] sm:$0xff]
      %v2023 = vld [vmem:[%s7 + $0xc0] sm:$0xff]
      %v2024 = vld [vmem:[%s7 + $0xc8] sm:$0xff]
      %v2025 = vld [vmem:[%s7 + $0xd0] sm:$0xff]
      %v2026 = vld [vmem:[%s7 + $0xd8] sm:$0xff]
      %v2027 = vld [vmem:[%s7 + $0xe0] sm:$0xff]
      %v2028 = vld [vmem:[%s7 + $0xe8] sm:$0xff]
      %v2029 = vld [vmem:[%s7 + $0xf0] sm:$0xff]
      %v2030 = vld [vmem:[%s7 + $0xf8] sm:$0xff]
      %v2031 = vld [vmem:[%s8] sm:$0x3]
      %v2033 = vperm.slane %v2031, 0
      %v2034 = vperm.slane %v2031, 1
      %2037 = vmatpush.msra.mxu0 %v2029
      %2038 = vmatpush.msra.mxu0 %v2027
      %2039 = vmatpush.msra.mxu0 %v2025
      %2040 = vmatpush.msra.mxu0 %v2023
      %2041 = vmatpush.msra.mxu0 %v2021
      %2042 = vmatpush.msra.mxu0 %v2019
      %2043 = vmatpush.msra.mxu0 %v2017
      %2044 = vmatpush.msra.mxu0 %v2015
      %2045 = vmatpush.msra.mxu0 %v2013
      %2046 = vmatpush.msra.mxu0 %v2011
      %2047 = vmatpush.msra.mxu0 %v2009
      %2048 = vmatpush.msra.mxu0 %v2007
      %2049 = vmatpush.msra.mxu0 %v2005
      %2050 = vmatpush.msra.mxu0 %v2003
      %2051 = vmatpush.msra.mxu0 %v2001
      %2052 = vmatpush.msra.mxu0 %v1999
      %2053 = vmatmul.f32.gmra.mxu0 %v1983
      %v2054 = vpop.f32.mrf.mxu0
      %v2055 = vadd.f32 %v2033, %v2054
      %2056 = vmatmul.f32.gmra.mxu0 %v1984
      %v2057 = vpop.f32.mrf.mxu0
      %v2058 = vadd.f32 %v2033, %v2057
      %2059 = vmatmul.f32.gmra.mxu0 %v1985
      %v2060 = vpop.f32.mrf.mxu0
      %v2061 = vadd.f32 %v2033, %v2060
      %2062 = vmatmul.f32.gmra.mxu0 %v1986
      %v2063 = vpop.f32.mrf.mxu0
      %v2064 = vadd.f32 %v2033, %v2063
      %2065 = vmatmul.f32.gmra.mxu0 %v1987
      %v2066 = vpop.f32.mrf.mxu0
      %v2067 = vadd.f32 %v2033, %v2066
      %2068 = vmatmul.f32.gmra.mxu0 %v1988
      %v2069 = vpop.f32.mrf.mxu0
      %v2070 = vadd.f32 %v2033, %v2069
      %2071 = vmatmul.f32.gmra.mxu0 %v1989
      %v2072 = vpop.f32.mrf.mxu0
      %v2073 = vadd.f32 %v2033, %v2072
      %2074 = vmatmul.f32.gmra.mxu0 %v1990
      %v2075 = vpop.f32.mrf.mxu0
      %v2076 = vadd.f32 %v2033, %v2075
      %2077 = vmatmul.f32.gmra.mxu0 %v1991
      %v2078 = vpop.f32.mrf.mxu0
      %v2079 = vadd.f32 %v2033, %v2078
      %2080 = vmatmul.f32.gmra.mxu0 %v1992
      %v2081 = vpop.f32.mrf.mxu0
      %v2082 = vadd.f32 %v2033, %v2081
      %2083 = vmatmul.f32.gmra.mxu0 %v1993
      %v2084 = vpop.f32.mrf.mxu0
      %v2085 = vadd.f32 %v2033, %v2084
      %2086 = vmatmul.f32.gmra.mxu0 %v1994
      %v2087 = vpop.f32.mrf.mxu0
      %v2088 = vadd.f32 %v2033, %v2087
      %2089 = vmatmul.f32.gmra.mxu0 %v1995
      %v2090 = vpop.f32.mrf.mxu0
      %v2091 = vadd.f32 %v2033, %v2090
      %2092 = vmatmul.f32.gmra.mxu0 %v1996
      %v2093 = vpop.f32.mrf.mxu0
      %v2094 = vadd.f32 %v2033, %v2093
      %2095 = vmatmul.f32.gmra.mxu0 %v1997
      %v2096 = vpop.f32.mrf.mxu0
      %v2097 = vadd.f32 %v2033, %v2096
      %2098 = vmatmul.f32.gmra.mxu0 %v1998
      %v2099 = vpop.f32.mrf.mxu0
      %v2100 = vadd.f32 %v2033, %v2099
      %2101 = vdwg.mxu0
      %2102 = vmatpush.msra.mxu0 %v2030
      %2103 = vmatpush.msra.mxu0 %v2028
      %2104 = vmatpush.msra.mxu0 %v2026
      %2105 = vmatpush.msra.mxu0 %v2024
      %2106 = vmatpush.msra.mxu0 %v2022
      %2107 = vmatpush.msra.mxu0 %v2020
      %2108 = vmatpush.msra.mxu0 %v2018
      %2109 = vmatpush.msra.mxu0 %v2016
      %2110 = vmatpush.msra.mxu0 %v2014
      %2111 = vmatpush.msra.mxu0 %v2012
      %2112 = vmatpush.msra.mxu0 %v2010
      %2113 = vmatpush.msra.mxu0 %v2008
      %2114 = vmatpush.msra.mxu0 %v2006
      %2115 = vmatpush.msra.mxu0 %v2004
      %2116 = vmatpush.msra.mxu0 %v2002
      %2117 = vmatpush.msra.mxu0 %v2000
      %2118 = vmatmul.f32.gmra.mxu0 %v1983
      %v2119 = vpop.f32.mrf.mxu0
      %v2120 = vadd.f32 %v2034, %v2119
      %2121 = vmatmul.f32.gmra.mxu0 %v1984
      %v2122 = vpop.f32.mrf.mxu0
      %v2123 = vadd.f32 %v2034, %v2122
      %2124 = vmatmul.f32.gmra.mxu0 %v1985
      %v2125 = vpop.f32.mrf.mxu0
      %v2126 = vadd.f32 %v2034, %v2125
      %2127 = vmatmul.f32.gmra.mxu0 %v1986
      %v2128 = vpop.f32.mrf.mxu0
      %v2129 = vadd.f32 %v2034, %v2128
      %2130 = vmatmul.f32.gmra.mxu0 %v1987
      %v2131 = vpop.f32.mrf.mxu0
      %v2132 = vadd.f32 %v2034, %v2131
      %2133 = vmatmul.f32.gmra.mxu0 %v1988
      %v2134 = vpop.f32.mrf.mxu0
      %v2135 = vadd.f32 %v2034, %v2134
      %2136 = vmatmul.f32.gmra.mxu0 %v1989
      %v2137 = vpop.f32.mrf.mxu0
      %v2138 = vadd.f32 %v2034, %v2137
      %2139 = vmatmul.f32.gmra.mxu0 %v1990
      %v2140 = vpop.f32.mrf.mxu0
      %v2141 = vadd.f32 %v2034, %v2140
      %2142 = vmatmul.f32.gmra.mxu0 %v1991
      %v2143 = vpop.f32.mrf.mxu0
      %v2144 = vadd.f32 %v2034, %v2143
      %2145 = vmatmul.f32.gmra.mxu0 %v1992
      %v2146 = vpop.f32.mrf.mxu0
      %v2147 = vadd.f32 %v2034, %v2146
      %2148 = vmatmul.f32.gmra.mxu0 %v1993
      %v2149 = vpop.f32.mrf.mxu0
      %v2150 = vadd.f32 %v2034, %v2149
      %2151 = vmatmul.f32.gmra.mxu0 %v1994
      %v2152 = vpop.f32.mrf.mxu0
      %v2153 = vadd.f32 %v2034, %v2152
      %2154 = vmatmul.f32.gmra.mxu0 %v1995
      %v2155 = vpop.f32.mrf.mxu0
      %v2156 = vadd.f32 %v2034, %v2155
      %2157 = vmatmul.f32.gmra.mxu0 %v1996
      %v2158 = vpop.f32.mrf.mxu0
      %v2159 = vadd.f32 %v2034, %v2158
      %2160 = vmatmul.f32.gmra.mxu0 %v1997
      %v2161 = vpop.f32.mrf.mxu0
      %v2162 = vadd.f32 %v2034, %v2161
      %2163 = vmatmul.f32.gmra.mxu0 %v1998
      %v2164 = vpop.f32.mrf.mxu0
      %v2165 = vadd.f32 %v2034, %v2164
      %2166 = vdwg.mxu0
      %v2167 = vmax.f32 %v2055, 0.0
      %v2168 = vmax.f32 %v2120, 0.0
      %v2169 = vmax.f32 %v2058, 0.0
      %v2170 = vmax.f32 %v2123, 0.0
      %v2171 = vmax.f32 %v2061, 0.0
      %v2172 = vmax.f32 %v2126, 0.0
      %v2173 = vmax.f32 %v2064, 0.0
      %v2174 = vmax.f32 %v2129, 0.0
      %v2175 = vmax.f32 %v2067, 0.0
      %v2176 = vmax.f32 %v2132, 0.0
      %v2177 = vmax.f32 %v2070, 0.0
      %v2178 = vmax.f32 %v2135, 0.0
      %v2179 = vmax.f32 %v2073, 0.0
      %v2180 = vmax.f32 %v2138, 0.0
      %v2181 = vmax.f32 %v2076, 0.0
      %v2182 = vmax.f32 %v2141, 0.0
      %v2183 = vmax.f32 %v2079, 0.0
      %v2184 = vmax.f32 %v2144, 0.0
      %v2185 = vmax.f32 %v2082, 0.0
      %v2186 = vmax.f32 %v2147, 0.0
      %v2187 = vmax.f32 %v2085, 0.0
      %v2188 = vmax.f32 %v2150, 0.0
      %v2189 = vmax.f32 %v2088, 0.0
      %v2190 = vmax.f32 %v2153, 0.0
      %v2191 = vmax.f32 %v2091, 0.0
      %v2192 = vmax.f32 %v2156, 0.0
      %v2193 = vmax.f32 %v2094, 0.0
      %v2194 = vmax.f32 %v2159, 0.0
      %v2195 = vmax.f32 %v2097, 0.0
      %v2196 = vmax.f32 %v2162, 0.0
      %v2197 = vmax.f32 %v2100, 0.0
      %v2198 = vmax.f32 %v2165, 0.0
      %v2199 = vadd.f32 %v2167, %v1668
      %v2200 = vadd.f32 %v2168, %v1669
      %v2201 = vadd.f32 %v2169, %v1670
      %v2202 = vadd.f32 %v2170, %v1671
      %v2203 = vadd.f32 %v2171, %v1672
      %v2204 = vadd.f32 %v2172, %v1673
      %v2205 = vadd.f32 %v2173, %v1674
      %v2206 = vadd.f32 %v2174, %v1675
      %v2207 = vadd.f32 %v2175, %v1676
      %v2208 = vadd.f32 %v2176, %v1677
      %v2209 = vadd.f32 %v2177, %v1678
      %v2210 = vadd.f32 %v2178, %v1679
      %v2211 = vadd.f32 %v2179, %v1680
      %v2212 = vadd.f32 %v2180, %v1681
      %v2213 = vadd.f32 %v2181, %v1682
      %v2214 = vadd.f32 %v2182, %v1683
      %v2215 = vadd.f32 %v2183, %v1684
      %v2216 = vadd.f32 %v2184, %v1685
      %v2217 = vadd.f32 %v2185, %v1686
      %v2218 = vadd.f32 %v2186, %v1687
      %v2219 = vadd.f32 %v2187, %v1688
      %v2220 = vadd.f32 %v2188, %v1689
      %v2221 = vadd.f32 %v2189, %v1690
      %v2222 = vadd.f32 %v2190, %v1691
      %v2223 = vadd.f32 %v2191, %v1692
      %v2224 = vadd.f32 %v2192, %v1693
      %v2225 = vadd.f32 %v2193, %v1694
      %v2226 = vadd.f32 %v2194, %v1695
      %v2227 = vadd.f32 %v2195, %v1696
      %v2228 = vadd.f32 %v2196, %v1697
      %v2229 = vadd.f32 %v2197, %v1698
      %v2230 = vadd.f32 %v2198, %v1699
      %v2231 = vld [vmem:[%s9] sm:$0xff]
      %v2232 = vld [vmem:[%s9 + $0x8] sm:$0xff]
      %v2233 = vld [vmem:[%s9 + $0x10] sm:$0xff]
      %v2234 = vld [vmem:[%s9 + $0x18] sm:$0xff]
      %v2235 = vld [vmem:[%s9 + $0x20] sm:$0xff]
      %v2236 = vld [vmem:[%s9 + $0x28] sm:$0xff]
      %v2237 = vld [vmem:[%s9 + $0x30] sm:$0xff]
      %v2238 = vld [vmem:[%s9 + $0x38] sm:$0xff]
      %v2239 = vld [vmem:[%s9 + $0x40] sm:$0xff]
      %v2240 = vld [vmem:[%s9 + $0x48] sm:$0xff]
      %v2241 = vld [vmem:[%s9 + $0x50] sm:$0xff]
      %v2242 = vld [vmem:[%s9 + $0x58] sm:$0xff]
      %v2243 = vld [vmem:[%s9 + $0x60] sm:$0xff]
      %v2244 = vld [vmem:[%s9 + $0x68] sm:$0xff]
      %v2245 = vld [vmem:[%s9 + $0x70] sm:$0xff]
      %v2246 = vld [vmem:[%s9 + $0x78] sm:$0xff]
      %v2247 = vld [vmem:[%s9 + $0x80] sm:$0xff]
      %v2248 = vld [vmem:[%s9 + $0x88] sm:$0xff]
      %v2249 = vld [vmem:[%s9 + $0x90] sm:$0xff]
      %v2250 = vld [vmem:[%s9 + $0x98] sm:$0xff]
      %v2251 = vld [vmem:[%s9 + $0xa0] sm:$0xff]
      %v2252 = vld [vmem:[%s9 + $0xa8] sm:$0xff]
      %v2253 = vld [vmem:[%s9 + $0xb0] sm:$0xff]
      %v2254 = vld [vmem:[%s9 + $0xb8] sm:$0xff]
      %v2255 = vld [vmem:[%s9 + $0xc0] sm:$0xff]
      %v2256 = vld [vmem:[%s9 + $0xc8] sm:$0xff]
      %v2257 = vld [vmem:[%s9 + $0xd0] sm:$0xff]
      %v2258 = vld [vmem:[%s9 + $0xd8] sm:$0xff]
      %v2259 = vld [vmem:[%s9 + $0xe0] sm:$0xff]
      %v2260 = vld [vmem:[%s9 + $0xe8] sm:$0xff]
      %v2261 = vld [vmem:[%s9 + $0xf0] sm:$0xff]
      %v2262 = vld [vmem:[%s9 + $0xf8] sm:$0xff]
      %v2263 = vld [vmem:[%s9 + $0x100] sm:$0xff]
      %v2264 = vld [vmem:[%s9 + $0x108] sm:$0xff]
      %v2265 = vld [vmem:[%s9 + $0x110] sm:$0xff]
      %v2266 = vld [vmem:[%s9 + $0x118] sm:$0xff]
      %v2267 = vld [vmem:[%s9 + $0x120] sm:$0xff]
      %v2268 = vld [vmem:[%s9 + $0x128] sm:$0xff]
      %v2269 = vld [vmem:[%s9 + $0x130] sm:$0xff]
      %v2270 = vld [vmem:[%s9 + $0x138] sm:$0xff]
      %v2271 = vld [vmem:[%s9 + $0x140] sm:$0xff]
      %v2272 = vld [vmem:[%s9 + $0x148] sm:$0xff]
      %v2273 = vld [vmem:[%s9 + $0x150] sm:$0xff]
      %v2274 = vld [vmem:[%s9 + $0x158] sm:$0xff]
      %v2275 = vld [vmem:[%s9 + $0x160] sm:$0xff]
      %v2276 = vld [vmem:[%s9 + $0x168] sm:$0xff]
      %v2277 = vld [vmem:[%s9 + $0x170] sm:$0xff]
      %v2278 = vld [vmem:[%s9 + $0x178] sm:$0xff]
      %v2279 = vld [vmem:[%s9 + $0x180] sm:$0xff]
      %v2280 = vld [vmem:[%s9 + $0x188] sm:$0xff]
      %v2281 = vld [vmem:[%s9 + $0x190] sm:$0xff]
      %v2282 = vld [vmem:[%s9 + $0x198] sm:$0xff]
      %v2283 = vld [vmem:[%s9 + $0x1a0] sm:$0xff]
      %v2284 = vld [vmem:[%s9 + $0x1a8] sm:$0xff]
      %v2285 = vld [vmem:[%s9 + $0x1b0] sm:$0xff]
      %v2286 = vld [vmem:[%s9 + $0x1b8] sm:$0xff]
      %v2287 = vld [vmem:[%s9 + $0x1c0] sm:$0xff]
      %v2288 = vld [vmem:[%s9 + $0x1c8] sm:$0xff]
      %v2289 = vld [vmem:[%s9 + $0x1d0] sm:$0xff]
      %v2290 = vld [vmem:[%s9 + $0x1d8] sm:$0xff]
      %v2291 = vld [vmem:[%s9 + $0x1e0] sm:$0xff]
      %v2292 = vld [vmem:[%s9 + $0x1e8] sm:$0xff]
      %v2293 = vld [vmem:[%s9 + $0x1f0] sm:$0xff]
      %v2294 = vld [vmem:[%s9 + $0x1f8] sm:$0xff]
      %v2295 = vld [vmem:[%s9 + $0x200] sm:$0xff]
      %v2296 = vld [vmem:[%s9 + $0x208] sm:$0xff]
      %v2297 = vld [vmem:[%s9 + $0x210] sm:$0xff]
      %v2298 = vld [vmem:[%s9 + $0x218] sm:$0xff]
      %v2299 = vld [vmem:[%s9 + $0x220] sm:$0xff]
      %v2300 = vld [vmem:[%s9 + $0x228] sm:$0xff]
      %v2301 = vld [vmem:[%s9 + $0x230] sm:$0xff]
      %v2302 = vld [vmem:[%s9 + $0x238] sm:$0xff]
      %v2303 = vld [vmem:[%s9 + $0x240] sm:$0xff]
      %v2304 = vld [vmem:[%s9 + $0x248] sm:$0xff]
      %v2305 = vld [vmem:[%s9 + $0x250] sm:$0xff]
      %v2306 = vld [vmem:[%s9 + $0x258] sm:$0xff]
      %v2307 = vld [vmem:[%s9 + $0x260] sm:$0xff]
      %v2308 = vld [vmem:[%s9 + $0x268] sm:$0xff]
      %v2309 = vld [vmem:[%s9 + $0x270] sm:$0xff]
      %v2310 = vld [vmem:[%s9 + $0x278] sm:$0xff]
      %v2311 = vld [vmem:[%s9 + $0x280] sm:$0xff]
      %v2312 = vld [vmem:[%s9 + $0x288] sm:$0xff]
      %v2313 = vld [vmem:[%s9 + $0x290] sm:$0xff]
      %v2314 = vld [vmem:[%s9 + $0x298] sm:$0xff]
      %v2315 = vld [vmem:[%s9 + $0x2a0] sm:$0xff]
      %v2316 = vld [vmem:[%s9 + $0x2a8] sm:$0xff]
      %v2317 = vld [vmem:[%s9 + $0x2b0] sm:$0xff]
      %v2318 = vld [vmem:[%s9 + $0x2b8] sm:$0xff]
      %v2319 = vld [vmem:[%s9 + $0x2c0] sm:$0xff]
      %v2320 = vld [vmem:[%s9 + $0x2c8] sm:$0xff]
      %v2321 = vld [vmem:[%s9 + $0x2d0] sm:$0xff]
      %v2322 = vld [vmem:[%s9 + $0x2d8] sm:$0xff]
      %v2323 = vld [vmem:[%s9 + $0x2e0] sm:$0xff]
      %v2324 = vld [vmem:[%s9 + $0x2e8] sm:$0xff]
      %v2325 = vld [vmem:[%s9 + $0x2f0] sm:$0xff]
      %v2326 = vld [vmem:[%s9 + $0x2f8] sm:$0xff]
      %v2327 = vld [vmem:[%s9 + $0x300] sm:$0xff]
      %v2328 = vld [vmem:[%s9 + $0x308] sm:$0xff]
      %v2329 = vld [vmem:[%s9 + $0x310] sm:$0xff]
      %v2330 = vld [vmem:[%s9 + $0x318] sm:$0xff]
      %v2331 = vld [vmem:[%s9 + $0x320] sm:$0xff]
      %v2332 = vld [vmem:[%s9 + $0x328] sm:$0xff]
      %v2333 = vld [vmem:[%s9 + $0x330] sm:$0xff]
      %v2334 = vld [vmem:[%s9 + $0x338] sm:$0xff]
      %v2335 = vld [vmem:[%s9 + $0x340] sm:$0xff]
      %v2336 = vld [vmem:[%s9 + $0x348] sm:$0xff]
      %v2337 = vld [vmem:[%s9 + $0x350] sm:$0xff]
      %v2338 = vld [vmem:[%s9 + $0x358] sm:$0xff]
      %v2339 = vld [vmem:[%s9 + $0x360] sm:$0xff]
      %v2340 = vld [vmem:[%s9 + $0x368] sm:$0xff]
      %v2341 = vld [vmem:[%s9 + $0x370] sm:$0xff]
      %v2342 = vld [vmem:[%s9 + $0x378] sm:$0xff]
      %v2343 = vld [vmem:[%s9 + $0x380] sm:$0xff]
      %v2344 = vld [vmem:[%s9 + $0x388] sm:$0xff]
      %v2345 = vld [vmem:[%s9 + $0x390] sm:$0xff]
      %v2346 = vld [vmem:[%s9 + $0x398] sm:$0xff]
      %v2347 = vld [vmem:[%s9 + $0x3a0] sm:$0xff]
      %v2348 = vld [vmem:[%s9 + $0x3a8] sm:$0xff]
      %v2349 = vld [vmem:[%s9 + $0x3b0] sm:$0xff]
      %v2350 = vld [vmem:[%s9 + $0x3b8] sm:$0xff]
      %v2351 = vld [vmem:[%s9 + $0x3c0] sm:$0xff]
      %v2352 = vld [vmem:[%s9 + $0x3c8] sm:$0xff]
      %v2353 = vld [vmem:[%s9 + $0x3d0] sm:$0xff]
      %v2354 = vld [vmem:[%s9 + $0x3d8] sm:$0xff]
      %v2355 = vld [vmem:[%s9 + $0x3e0] sm:$0xff]
      %v2356 = vld [vmem:[%s9 + $0x3e8] sm:$0xff]
      %v2357 = vld [vmem:[%s9 + $0x3f0] sm:$0xff]
      %v2358 = vld [vmem:[%s9 + $0x3f8] sm:$0xff]
      %v2359 = vld [vmem:[%s9 + $0x400] sm:$0xff]
      %v2360 = vld [vmem:[%s9 + $0x408] sm:$0xff]
      %v2361 = vld [vmem:[%s9 + $0x410] sm:$0xff]
      %v2362 = vld [vmem:[%s9 + $0x418] sm:$0xff]
      %v2363 = vld [vmem:[%s9 + $0x420] sm:$0xff]
      %v2364 = vld [vmem:[%s9 + $0x428] sm:$0xff]
      %v2365 = vld [vmem:[%s9 + $0x430] sm:$0xff]
      %v2366 = vld [vmem:[%s9 + $0x438] sm:$0xff]
      %v2367 = vld [vmem:[%s9 + $0x440] sm:$0xff]
      %v2368 = vld [vmem:[%s9 + $0x448] sm:$0xff]
      %v2369 = vld [vmem:[%s9 + $0x450] sm:$0xff]
      %v2370 = vld [vmem:[%s9 + $0x458] sm:$0xff]
      %v2371 = vld [vmem:[%s9 + $0x460] sm:$0xff]
      %v2372 = vld [vmem:[%s9 + $0x468] sm:$0xff]
      %v2373 = vld [vmem:[%s9 + $0x470] sm:$0xff]
      %v2374 = vld [vmem:[%s9 + $0x478] sm:$0xff]
      %v2375 = vld [vmem:[%s9 + $0x480] sm:$0xff]
      %v2376 = vld [vmem:[%s9 + $0x488] sm:$0xff]
      %v2377 = vld [vmem:[%s9 + $0x490] sm:$0xff]
      %v2378 = vld [vmem:[%s9 + $0x498] sm:$0xff]
      %v2379 = vld [vmem:[%s9 + $0x4a0] sm:$0xff]
      %v2380 = vld [vmem:[%s9 + $0x4a8] sm:$0xff]
      %v2381 = vld [vmem:[%s9 + $0x4b0] sm:$0xff]
      %v2382 = vld [vmem:[%s9 + $0x4b8] sm:$0xff]
      %v2383 = vld [vmem:[%s9 + $0x4c0] sm:$0xff]
      %v2384 = vld [vmem:[%s9 + $0x4c8] sm:$0xff]
      %v2385 = vld [vmem:[%s9 + $0x4d0] sm:$0xff]
      %v2386 = vld [vmem:[%s9 + $0x4d8] sm:$0xff]
      %v2387 = vld [vmem:[%s9 + $0x4e0] sm:$0xff]
      %v2388 = vld [vmem:[%s9 + $0x4e8] sm:$0xff]
      %v2389 = vld [vmem:[%s9 + $0x4f0] sm:$0xff]
      %v2390 = vld [vmem:[%s9 + $0x4f8] sm:$0xff]
      %v2391 = vld [vmem:[%s9 + $0x500] sm:$0xff]
      %v2392 = vld [vmem:[%s9 + $0x508] sm:$0xff]
      %v2393 = vld [vmem:[%s9 + $0x510] sm:$0xff]
      %v2394 = vld [vmem:[%s9 + $0x518] sm:$0xff]
      %v2395 = vld [vmem:[%s9 + $0x520] sm:$0xff]
      %v2396 = vld [vmem:[%s9 + $0x528] sm:$0xff]
      %v2397 = vld [vmem:[%s9 + $0x530] sm:$0xff]
      %v2398 = vld [vmem:[%s9 + $0x538] sm:$0xff]
      %v2399 = vld [vmem:[%s9 + $0x540] sm:$0xff]
      %v2400 = vld [vmem:[%s9 + $0x548] sm:$0xff]
      %v2401 = vld [vmem:[%s9 + $0x550] sm:$0xff]
      %v2402 = vld [vmem:[%s9 + $0x558] sm:$0xff]
      %v2403 = vld [vmem:[%s9 + $0x560] sm:$0xff]
      %v2404 = vld [vmem:[%s9 + $0x568] sm:$0xff]
      %v2405 = vld [vmem:[%s9 + $0x570] sm:$0xff]
      %v2406 = vld [vmem:[%s9 + $0x578] sm:$0xff]
      %v2407 = vld [vmem:[%s9 + $0x580] sm:$0xff]
      %v2408 = vld [vmem:[%s9 + $0x588] sm:$0xff]
      %v2409 = vld [vmem:[%s9 + $0x590] sm:$0xff]
      %v2410 = vld [vmem:[%s9 + $0x598] sm:$0xff]
      %v2411 = vld [vmem:[%s9 + $0x5a0] sm:$0xff]
      %v2412 = vld [vmem:[%s9 + $0x5a8] sm:$0xff]
      %v2413 = vld [vmem:[%s9 + $0x5b0] sm:$0xff]
      %v2414 = vld [vmem:[%s9 + $0x5b8] sm:$0xff]
      %v2415 = vld [vmem:[%s9 + $0x5c0] sm:$0xff]
      %v2416 = vld [vmem:[%s9 + $0x5c8] sm:$0xff]
      %v2417 = vld [vmem:[%s9 + $0x5d0] sm:$0xff]
      %v2418 = vld [vmem:[%s9 + $0x5d8] sm:$0xff]
      %v2419 = vld [vmem:[%s9 + $0x5e0] sm:$0xff]
      %v2420 = vld [vmem:[%s9 + $0x5e8] sm:$0xff]
      %v2421 = vld [vmem:[%s9 + $0x5f0] sm:$0xff]
      %v2422 = vld [vmem:[%s9 + $0x5f8] sm:$0xff]
      %v2423 = vld [vmem:[%s9 + $0x600] sm:$0xff]
      %v2424 = vld [vmem:[%s9 + $0x608] sm:$0xff]
      %v2425 = vld [vmem:[%s9 + $0x610] sm:$0xff]
      %v2426 = vld [vmem:[%s9 + $0x618] sm:$0xff]
      %v2427 = vld [vmem:[%s9 + $0x620] sm:$0xff]
      %v2428 = vld [vmem:[%s9 + $0x628] sm:$0xff]
      %v2429 = vld [vmem:[%s9 + $0x630] sm:$0xff]
      %v2430 = vld [vmem:[%s9 + $0x638] sm:$0xff]
      %v2431 = vld [vmem:[%s9 + $0x640] sm:$0xff]
      %v2432 = vld [vmem:[%s9 + $0x648] sm:$0xff]
      %v2433 = vld [vmem:[%s9 + $0x650] sm:$0xff]
      %v2434 = vld [vmem:[%s9 + $0x658] sm:$0xff]
      %v2435 = vld [vmem:[%s9 + $0x660] sm:$0xff]
      %v2436 = vld [vmem:[%s9 + $0x668] sm:$0xff]
      %v2437 = vld [vmem:[%s9 + $0x670] sm:$0xff]
      %v2438 = vld [vmem:[%s9 + $0x678] sm:$0xff]
      %v2439 = vld [vmem:[%s9 + $0x680] sm:$0xff]
      %v2440 = vld [vmem:[%s9 + $0x688] sm:$0xff]
      %v2441 = vld [vmem:[%s9 + $0x690] sm:$0xff]
      %v2442 = vld [vmem:[%s9 + $0x698] sm:$0xff]
      %v2443 = vld [vmem:[%s9 + $0x6a0] sm:$0xff]
      %v2444 = vld [vmem:[%s9 + $0x6a8] sm:$0xff]
      %v2445 = vld [vmem:[%s9 + $0x6b0] sm:$0xff]
      %v2446 = vld [vmem:[%s9 + $0x6b8] sm:$0xff]
      %v2447 = vld [vmem:[%s9 + $0x6c0] sm:$0xff]
      %v2448 = vld [vmem:[%s9 + $0x6c8] sm:$0xff]
      %v2449 = vld [vmem:[%s9 + $0x6d0] sm:$0xff]
      %v2450 = vld [vmem:[%s9 + $0x6d8] sm:$0xff]
      %v2451 = vld [vmem:[%s9 + $0x6e0] sm:$0xff]
      %v2452 = vld [vmem:[%s9 + $0x6e8] sm:$0xff]
      %v2453 = vld [vmem:[%s9 + $0x6f0] sm:$0xff]
      %v2454 = vld [vmem:[%s9 + $0x6f8] sm:$0xff]
      %v2455 = vld [vmem:[%s10] sm:$0x7f]
      %v2457 = vperm.slane %v2455, 0
      %v2458 = vperm.slane %v2455, 1
      %v2459 = vperm.slane %v2455, 2
      %v2460 = vperm.slane %v2455, 3
      %v2461 = vperm.slane %v2455, 4
      %v2462 = vperm.slane %v2455, 5
      %v2463 = vperm.slane %v2455, 6
      %2471 = vmatpush.msra.mxu0 %v2336
      %2472 = vmatpush.msra.mxu0 %v2329
      %2473 = vmatpush.msra.mxu0 %v2322
      %2474 = vmatpush.msra.mxu0 %v2315
      %2475 = vmatpush.msra.mxu0 %v2308
      %2476 = vmatpush.msra.mxu0 %v2301
      %2477 = vmatpush.msra.mxu0 %v2294
      %2478 = vmatpush.msra.mxu0 %v2287
      %2479 = vmatpush.msra.mxu0 %v2280
      %2480 = vmatpush.msra.mxu0 %v2273
      %2481 = vmatpush.msra.mxu0 %v2266
      %2482 = vmatpush.msra.mxu0 %v2259
      %2483 = vmatpush.msra.mxu0 %v2252
      %2484 = vmatpush.msra.mxu0 %v2245
      %2485 = vmatpush.msra.mxu0 %v2238
      %2486 = vmatpush.msra.mxu0 %v2231
      %2487 = vmatmul.f32.gmra.mxu0 %v2199
      %v2488 = vpop.f32.mrf.mxu0
      %v2489 = vadd.f32 %v2457, %v2488
      %2490 = vmatmul.f32.gmra.mxu0 %v2201
      %v2491 = vpop.f32.mrf.mxu0
      %v2492 = vadd.f32 %v2457, %v2491
      %2493 = vmatmul.f32.gmra.mxu0 %v2203
      %v2494 = vpop.f32.mrf.mxu0
      %v2495 = vadd.f32 %v2457, %v2494
      %2496 = vmatmul.f32.gmra.mxu0 %v2205
      %v2497 = vpop.f32.mrf.mxu0
      %v2498 = vadd.f32 %v2457, %v2497
      %2499 = vmatmul.f32.gmra.mxu0 %v2207
      %v2500 = vpop.f32.mrf.mxu0
      %v2501 = vadd.f32 %v2457, %v2500
      %2502 = vmatmul.f32.gmra.mxu0 %v2209
      %v2503 = vpop.f32.mrf.mxu0
      %v2504 = vadd.f32 %v2457, %v2503
      %2505 = vmatmul.f32.gmra.mxu0 %v2211
      %v2506 = vpop.f32.mrf.mxu0
      %v2507 = vadd.f32 %v2457, %v2506
      %2508 = vmatmul.f32.gmra.mxu0 %v2213
      %v2509 = vpop.f32.mrf.mxu0
      %v2510 = vadd.f32 %v2457, %v2509
      %2511 = vmatmul.f32.gmra.mxu0 %v2215
      %v2512 = vpop.f32.mrf.mxu0
      %v2513 = vadd.f32 %v2457, %v2512
      %2514 = vmatmul.f32.gmra.mxu0 %v2217
      %v2515 = vpop.f32.mrf.mxu0
      %v2516 = vadd.f32 %v2457, %v2515
      %2517 = vmatmul.f32.gmra.mxu0 %v2219
      %v2518 = vpop.f32.mrf.mxu0
      %v2519 = vadd.f32 %v2457, %v2518
      %2520 = vmatmul.f32.gmra.mxu0 %v2221
      %v2521 = vpop.f32.mrf.mxu0
      %v2522 = vadd.f32 %v2457, %v2521
      %2523 = vmatmul.f32.gmra.mxu0 %v2223
      %v2524 = vpop.f32.mrf.mxu0
      %v2525 = vadd.f32 %v2457, %v2524
      %2526 = vmatmul.f32.gmra.mxu0 %v2225
      %v2527 = vpop.f32.mrf.mxu0
      %v2528 = vadd.f32 %v2457, %v2527
      %2529 = vmatmul.f32.gmra.mxu0 %v2227
      %v2530 = vpop.f32.mrf.mxu0
      %v2531 = vadd.f32 %v2457, %v2530
      %2532 = vmatmul.f32.gmra.mxu0 %v2229
      %v2533 = vpop.f32.mrf.mxu0
      %v2534 = vadd.f32 %v2457, %v2533
      %2535 = vdwg.mxu0
      %2536 = vmatpush.msra.mxu0 %v2448
      %2537 = vmatpush.msra.mxu0 %v2441
      %2538 = vmatpush.msra.mxu0 %v2434
      %2539 = vmatpush.msra.mxu0 %v2427
      %2540 = vmatpush.msra.mxu0 %v2420
      %2541 = vmatpush.msra.mxu0 %v2413
      %2542 = vmatpush.msra.mxu0 %v2406
      %2543 = vmatpush.msra.mxu0 %v2399
      %2544 = vmatpush.msra.mxu0 %v2392
      %2545 = vmatpush.msra.mxu0 %v2385
      %2546 = vmatpush.msra.mxu0 %v2378
      %2547 = vmatpush.msra.mxu0 %v2371
      %2548 = vmatpush.msra.mxu0 %v2364
      %2549 = vmatpush.msra.mxu0 %v2357
      %2550 = vmatpush.msra.mxu0 %v2350
      %2551 = vmatpush.msra.mxu0 %v2343
      %2552 = vmatmul.f32.gmra.mxu0 %v2200
      %v2553 = vpop.f32.mrf.mxu0
      %v2554 = vadd.f32 %v2489, %v2553
      %2555 = vmatmul.f32.gmra.mxu0 %v2202
      %v2556 = vpop.f32.mrf.mxu0
      %v2557 = vadd.f32 %v2492, %v2556
      %2558 = vmatmul.f32.gmra.mxu0 %v2204
      %v2559 = vpop.f32.mrf.mxu0
      %v2560 = vadd.f32 %v2495, %v2559
      %2561 = vmatmul.f32.gmra.mxu0 %v2206
      %v2562 = vpop.f32.mrf.mxu0
      %v2563 = vadd.f32 %v2498, %v2562
      %2564 = vmatmul.f32.gmra.mxu0 %v2208
      %v2565 = vpop.f32.mrf.mxu0
      %v2566 = vadd.f32 %v2501, %v2565
      %2567 = vmatmul.f32.gmra.mxu0 %v2210
      %v2568 = vpop.f32.mrf.mxu0
      %v2569 = vadd.f32 %v2504, %v2568
      %2570 = vmatmul.f32.gmra.mxu0 %v2212
      %v2571 = vpop.f32.mrf.mxu0
      %v2572 = vadd.f32 %v2507, %v2571
      %2573 = vmatmul.f32.gmra.mxu0 %v2214
      %v2574 = vpop.f32.mrf.mxu0
      %v2575 = vadd.f32 %v2510, %v2574
      %2576 = vmatmul.f32.gmra.mxu0 %v2216
      %v2577 = vpop.f32.mrf.mxu0
      %v2578 = vadd.f32 %v2513, %v2577
      %2579 = vmatmul.f32.gmra.mxu0 %v2218
      %v2580 = vpop.f32.mrf.mxu0
      %v2581 = vadd.f32 %v2516, %v2580
      %2582 = vmatmul.f32.gmra.mxu0 %v2220
      %v2583 = vpop.f32.mrf.mxu0
      %v2584 = vadd.f32 %v2519, %v2583
      %2585 = vmatmul.f32.gmra.mxu0 %v2222
      %v2586 = vpop.f32.mrf.mxu0
      %v2587 = vadd.f32 %v2522, %v2586
      %2588 = vmatmul.f32.gmra.mxu0 %v2224
      %v2589 = vpop.f32.mrf.mxu0
      %v2590 = vadd.f32 %v2525, %v2589
      %2591 = vmatmul.f32.gmra.mxu0 %v2226
      %v2592 = vpop.f32.mrf.mxu0
      %v2593 = vadd.f32 %v2528, %v2592
      %2594 = vmatmul.f32.gmra.mxu0 %v2228
      %v2595 = vpop.f32.mrf.mxu0
      %v2596 = vadd.f32 %v2531, %v2595
      %2597 = vmatmul.f32.gmra.mxu0 %v2230
      %v2598 = vpop.f32.mrf.mxu0
      %v2599 = vadd.f32 %v2534, %v2598
      %2600 = vdwg.mxu0
      %2601 = vmatpush.msra.mxu0 %v2337
      %2602 = vmatpush.msra.mxu0 %v2330
      %2603 = vmatpush.msra.mxu0 %v2323
      %2604 = vmatpush.msra.mxu0 %v2316
      %2605 = vmatpush.msra.mxu0 %v2309
      %2606 = vmatpush.msra.mxu0 %v2302
      %2607 = vmatpush.msra.mxu0 %v2295
      %2608 = vmatpush.msra.mxu0 %v2288
      %2609 = vmatpush.msra.mxu0 %v2281
      %2610 = vmatpush.msra.mxu0 %v2274
      %2611 = vmatpush.msra.mxu0 %v2267
      %2612 = vmatpush.msra.mxu0 %v2260
      %2613 = vmatpush.msra.mxu0 %v2253
      %2614 = vmatpush.msra.mxu0 %v2246
      %2615 = vmatpush.msra.mxu0 %v2239
      %2616 = vmatpush.msra.mxu0 %v2232
      %2617 = vmatmul.f32.gmra.mxu0 %v2199
      %v2618 = vpop.f32.mrf.mxu0
      %v2619 = vadd.f32 %v2458, %v2618
      %2620 = vmatmul.f32.gmra.mxu0 %v2201
      %v2621 = vpop.f32.mrf.mxu0
      %v2622 = vadd.f32 %v2458, %v2621
      %2623 = vmatmul.f32.gmra.mxu0 %v2203
      %v2624 = vpop.f32.mrf.mxu0
      %v2625 = vadd.f32 %v2458, %v2624
      %2626 = vmatmul.f32.gmra.mxu0 %v2205
      %v2627 = vpop.f32.mrf.mxu0
      %v2628 = vadd.f32 %v2458, %v2627
      %2629 = vmatmul.f32.gmra.mxu0 %v2207
      %v2630 = vpop.f32.mrf.mxu0
      %v2631 = vadd.f32 %v2458, %v2630
      %2632 = vmatmul.f32.gmra.mxu0 %v2209
      %v2633 = vpop.f32.mrf.mxu0
      %v2634 = vadd.f32 %v2458, %v2633
      %2635 = vmatmul.f32.gmra.mxu0 %v2211
      %v2636 = vpop.f32.mrf.mxu0
      %v2637 = vadd.f32 %v2458, %v2636
      %2638 = vmatmul.f32.gmra.mxu0 %v2213
      %v2639 = vpop.f32.mrf.mxu0
      %v2640 = vadd.f32 %v2458, %v2639
      %2641 = vmatmul.f32.gmra.mxu0 %v2215
      %v2642 = vpop.f32.mrf.mxu0
      %v2643 = vadd.f32 %v2458, %v2642
      %2644 = vmatmul.f32.gmra.mxu0 %v2217
      %v2645 = vpop.f32.mrf.mxu0
      %v2646 = vadd.f32 %v2458, %v2645
      %2647 = vmatmul.f32.gmra.mxu0 %v2219
      %v2648 = vpop.f32.mrf.mxu0
      %v2649 = vadd.f32 %v2458, %v2648
      %2650 = vmatmul.f32.gmra.mxu0 %v2221
      %v2651 = vpop.f32.mrf.mxu0
      %v2652 = vadd.f32 %v2458, %v2651
      %2653 = vmatmul.f32.gmra.mxu0 %v2223
      %v2654 = vpop.f32.mrf.mxu0
      %v2655 = vadd.f32 %v2458, %v2654
      %2656 = vmatmul.f32.gmra.mxu0 %v2225
      %v2657 = vpop.f32.mrf.mxu0
      %v2658 = vadd.f32 %v2458, %v2657
      %2659 = vmatmul.f32.gmra.mxu0 %v2227
      %v2660 = vpop.f32.mrf.mxu0
      %v2661 = vadd.f32 %v2458, %v2660
      %2662 = vmatmul.f32.gmra.mxu0 %v2229
      %v2663 = vpop.f32.mrf.mxu0
      %v2664 = vadd.f32 %v2458, %v2663
      %2665 = vdwg.mxu0
      %2666 = vmatpush.msra.mxu0 %v2449
      %2667 = vmatpush.msra.mxu0 %v2442
      %2668 = vmatpush.msra.mxu0 %v2435
      %2669 = vmatpush.msra.mxu0 %v2428
      %2670 = vmatpush.msra.mxu0 %v2421
      %2671 = vmatpush.msra.mxu0 %v2414
      %2672 = vmatpush.msra.mxu0 %v2407
      %2673 = vmatpush.msra.mxu0 %v2400
      %2674 = vmatpush.msra.mxu0 %v2393
      %2675 = vmatpush.msra.mxu0 %v2386
      %2676 = vmatpush.msra.mxu0 %v2379
      %2677 = vmatpush.msra.mxu0 %v2372
      %2678 = vmatpush.msra.mxu0 %v2365
      %2679 = vmatpush.msra.mxu0 %v2358
      %2680 = vmatpush.msra.mxu0 %v2351
      %2681 = vmatpush.msra.mxu0 %v2344
      %2682 = vmatmul.f32.gmra.mxu0 %v2200
      %v2683 = vpop.f32.mrf.mxu0
      %v2684 = vadd.f32 %v2619, %v2683
      %2685 = vmatmul.f32.gmra.mxu0 %v2202
      %v2686 = vpop.f32.mrf.mxu0
      %v2687 = vadd.f32 %v2622, %v2686
      %2688 = vmatmul.f32.gmra.mxu0 %v2204
      %v2689 = vpop.f32.mrf.mxu0
      %v2690 = vadd.f32 %v2625, %v2689
      %2691 = vmatmul.f32.gmra.mxu0 %v2206
      %v2692 = vpop.f32.mrf.mxu0
      %v2693 = vadd.f32 %v2628, %v2692
      %2694 = vmatmul.f32.gmra.mxu0 %v2208
      %v2695 = vpop.f32.mrf.mxu0
      %v2696 = vadd.f32 %v2631, %v2695
      %2697 = vmatmul.f32.gmra.mxu0 %v2210
      %v2698 = vpop.f32.mrf.mxu0
      %v2699 = vadd.f32 %v2634, %v2698
      %2700 = vmatmul.f32.gmra.mxu0 %v2212
      %v2701 = vpop.f32.mrf.mxu0
      %v2702 = vadd.f32 %v2637, %v2701
      %2703 = vmatmul.f32.gmra.mxu0 %v2214
      %v2704 = vpop.f32.mrf.mxu0
      %v2705 = vadd.f32 %v2640, %v2704
      %2706 = vmatmul.f32.gmra.mxu0 %v2216
      %v2707 = vpop.f32.mrf.mxu0
      %v2708 = vadd.f32 %v2643, %v2707
      %2709 = vmatmul.f32.gmra.mxu0 %v2218
      %v2710 = vpop.f32.mrf.mxu0
      %v2711 = vadd.f32 %v2646, %v2710
      %2712 = vmatmul.f32.gmra.mxu0 %v2220
      %v2713 = vpop.f32.mrf.mxu0
      %v2714 = vadd.f32 %v2649, %v2713
      %2715 = vmatmul.f32.gmra.mxu0 %v2222
      %v2716 = vpop.f32.mrf.mxu0
      %v2717 = vadd.f32 %v2652, %v2716
      %2718 = vmatmul.f32.gmra.mxu0 %v2224
      %v2719 = vpop.f32.mrf.mxu0
      %v2720 = vadd.f32 %v2655, %v2719
      %2721 = vmatmul.f32.gmra.mxu0 %v2226
      %v2722 = vpop.f32.mrf.mxu0
      %v2723 = vadd.f32 %v2658, %v2722
      %2724 = vmatmul.f32.gmra.mxu0 %v2228
      %v2725 = vpop.f32.mrf.mxu0
      %v2726 = vadd.f32 %v2661, %v2725
      %2727 = vmatmul.f32.gmra.mxu0 %v2230
      %v2728 = vpop.f32.mrf.mxu0
      %v2729 = vadd.f32 %v2664, %v2728
      %2730 = vdwg.mxu0
      %2731 = vmatpush.msra.mxu0 %v2338
      %2732 = vmatpush.msra.mxu0 %v2331
      %2733 = vmatpush.msra.mxu0 %v2324
      %2734 = vmatpush.msra.mxu0 %v2317
      %2735 = vmatpush.msra.mxu0 %v2310
      %2736 = vmatpush.msra.mxu0 %v2303
      %2737 = vmatpush.msra.mxu0 %v2296
      %2738 = vmatpush.msra.mxu0 %v2289
      %2739 = vmatpush.msra.mxu0 %v2282
      %2740 = vmatpush.msra.mxu0 %v2275
      %2741 = vmatpush.msra.mxu0 %v2268
      %2742 = vmatpush.msra.mxu0 %v2261
      %2743 = vmatpush.msra.mxu0 %v2254
      %2744 = vmatpush.msra.mxu0 %v2247
      %2745 = vmatpush.msra.mxu0 %v2240
      %2746 = vmatpush.msra.mxu0 %v2233
      %2747 = vmatmul.f32.gmra.mxu0 %v2199
      %v2748 = vpop.f32.mrf.mxu0
      %v2749 = vadd.f32 %v2459, %v2748
      %2750 = vmatmul.f32.gmra.mxu0 %v2201
      %v2751 = vpop.f32.mrf.mxu0
      %v2752 = vadd.f32 %v2459, %v2751
      %2753 = vmatmul.f32.gmra.mxu0 %v2203
      %v2754 = vpop.f32.mrf.mxu0
      %v2755 = vadd.f32 %v2459, %v2754
      %2756 = vmatmul.f32.gmra.mxu0 %v2205
      %v2757 = vpop.f32.mrf.mxu0
      %v2758 = vadd.f32 %v2459, %v2757
      %2759 = vmatmul.f32.gmra.mxu0 %v2207
      %v2760 = vpop.f32.mrf.mxu0
      %v2761 = vadd.f32 %v2459, %v2760
      %2762 = vmatmul.f32.gmra.mxu0 %v2209
      %v2763 = vpop.f32.mrf.mxu0
      %v2764 = vadd.f32 %v2459, %v2763
      %2765 = vmatmul.f32.gmra.mxu0 %v2211
      %v2766 = vpop.f32.mrf.mxu0
      %v2767 = vadd.f32 %v2459, %v2766
      %2768 = vmatmul.f32.gmra.mxu0 %v2213
      %v2769 = vpop.f32.mrf.mxu0
      %v2770 = vadd.f32 %v2459, %v2769
      %2771 = vmatmul.f32.gmra.mxu0 %v2215
      %v2772 = vpop.f32.mrf.mxu0
      %v2773 = vadd.f32 %v2459, %v2772
      %2774 = vmatmul.f32.gmra.mxu0 %v2217
      %v2775 = vpop.f32.mrf.mxu0
      %v2776 = vadd.f32 %v2459, %v2775
      %2777 = vmatmul.f32.gmra.mxu0 %v2219
      %v2778 = vpop.f32.mrf.mxu0
      %v2779 = vadd.f32 %v2459, %v2778
      %2780 = vmatmul.f32.gmra.mxu0 %v2221
      %v2781 = vpop.f32.mrf.mxu0
      %v2782 = vadd.f32 %v2459, %v2781
      %2783 = vmatmul.f32.gmra.mxu0 %v2223
      %v2784 = vpop.f32.mrf.mxu0
      %v2785 = vadd.f32 %v2459, %v2784
      %2786 = vmatmul.f32.gmra.mxu0 %v2225
      %v2787 = vpop.f32.mrf.mxu0
      %v2788 = vadd.f32 %v2459, %v2787
      %2789 = vmatmul.f32.gmra.mxu0 %v2227
      %v2790 = vpop.f32.mrf.mxu0
      %v2791 = vadd.f32 %v2459, %v2790
      %2792 = vmatmul.f32.gmra.mxu0 %v2229
      %v2793 = vpop.f32.mrf.mxu0
      %v2794 = vadd.f32 %v2459, %v2793
      %2795 = vdwg.mxu0
      %2796 = vmatpush.msra.mxu0 %v2450
      %2797 = vmatpush.msra.mxu0 %v2443
      %2798 = vmatpush.msra.mxu0 %v2436
      %2799 = vmatpush.msra.mxu0 %v2429
      %2800 = vmatpush.msra.mxu0 %v2422
      %2801 = vmatpush.msra.mxu0 %v2415
      %2802 = vmatpush.msra.mxu0 %v2408
      %2803 = vmatpush.msra.mxu0 %v2401
      %2804 = vmatpush.msra.mxu0 %v2394
      %2805 = vmatpush.msra.mxu0 %v2387
      %2806 = vmatpush.msra.mxu0 %v2380
      %2807 = vmatpush.msra.mxu0 %v2373
      %2808 = vmatpush.msra.mxu0 %v2366
      %2809 = vmatpush.msra.mxu0 %v2359
      %2810 = vmatpush.msra.mxu0 %v2352
      %2811 = vmatpush.msra.mxu0 %v2345
      %2812 = vmatmul.f32.gmra.mxu0 %v2200
      %v2813 = vpop.f32.mrf.mxu0
      %v2814 = vadd.f32 %v2749, %v2813
      %2815 = vmatmul.f32.gmra.mxu0 %v2202
      %v2816 = vpop.f32.mrf.mxu0
      %v2817 = vadd.f32 %v2752, %v2816
      %2818 = vmatmul.f32.gmra.mxu0 %v2204
      %v2819 = vpop.f32.mrf.mxu0
      %v2820 = vadd.f32 %v2755, %v2819
      %2821 = vmatmul.f32.gmra.mxu0 %v2206
      %v2822 = vpop.f32.mrf.mxu0
      %v2823 = vadd.f32 %v2758, %v2822
      %2824 = vmatmul.f32.gmra.mxu0 %v2208
      %v2825 = vpop.f32.mrf.mxu0
      %v2826 = vadd.f32 %v2761, %v2825
      %2827 = vmatmul.f32.gmra.mxu0 %v2210
      %v2828 = vpop.f32.mrf.mxu0
      %v2829 = vadd.f32 %v2764, %v2828
      %2830 = vmatmul.f32.gmra.mxu0 %v2212
      %v2831 = vpop.f32.mrf.mxu0
      %v2832 = vadd.f32 %v2767, %v2831
      %2833 = vmatmul.f32.gmra.mxu0 %v2214
      %v2834 = vpop.f32.mrf.mxu0
      %v2835 = vadd.f32 %v2770, %v2834
      %2836 = vmatmul.f32.gmra.mxu0 %v2216
      %v2837 = vpop.f32.mrf.mxu0
      %v2838 = vadd.f32 %v2773, %v2837
      %2839 = vmatmul.f32.gmra.mxu0 %v2218
      %v2840 = vpop.f32.mrf.mxu0
      %v2841 = vadd.f32 %v2776, %v2840
      %2842 = vmatmul.f32.gmra.mxu0 %v2220
      %v2843 = vpop.f32.mrf.mxu0
      %v2844 = vadd.f32 %v2779, %v2843
      %2845 = vmatmul.f32.gmra.mxu0 %v2222
      %v2846 = vpop.f32.mrf.mxu0
      %v2847 = vadd.f32 %v2782, %v2846
      %2848 = vmatmul.f32.gmra.mxu0 %v2224
      %v2849 = vpop.f32.mrf.mxu0
      %v2850 = vadd.f32 %v2785, %v2849
      %2851 = vmatmul.f32.gmra.mxu0 %v2226
      %v2852 = vpop.f32.mrf.mxu0
      %v2853 = vadd.f32 %v2788, %v2852
      %2854 = vmatmul.f32.gmra.mxu0 %v2228
      %v2855 = vpop.f32.mrf.mxu0
      %v2856 = vadd.f32 %v2791, %v2855
      %2857 = vmatmul.f32.gmra.mxu0 %v2230
      %v2858 = vpop.f32.mrf.mxu0
      %v2859 = vadd.f32 %v2794, %v2858
      %2860 = vdwg.mxu0
      %2861 = vmatpush.msra.mxu0 %v2339
      %2862 = vmatpush.msra.mxu0 %v2332
      %2863 = vmatpush.msra.mxu0 %v2325
      %2864 = vmatpush.msra.mxu0 %v2318
      %2865 = vmatpush.msra.mxu0 %v2311
      %2866 = vmatpush.msra.mxu0 %v2304
      %2867 = vmatpush.msra.mxu0 %v2297
      %2868 = vmatpush.msra.mxu0 %v2290
      %2869 = vmatpush.msra.mxu0 %v2283
      %2870 = vmatpush.msra.mxu0 %v2276
      %2871 = vmatpush.msra.mxu0 %v2269
      %2872 = vmatpush.msra.mxu0 %v2262
      %2873 = vmatpush.msra.mxu0 %v2255
      %2874 = vmatpush.msra.mxu0 %v2248
      %2875 = vmatpush.msra.mxu0 %v2241
      %2876 = vmatpush.msra.mxu0 %v2234
      %2877 = vmatmul.f32.gmra.mxu0 %v2199
      %v2878 = vpop.f32.mrf.mxu0
      %v2879 = vadd.f32 %v2460, %v2878
      %2880 = vmatmul.f32.gmra.mxu0 %v2201
      %v2881 = vpop.f32.mrf.mxu0
      %v2882 = vadd.f32 %v2460, %v2881
      %2883 = vmatmul.f32.gmra.mxu0 %v2203
      %v2884 = vpop.f32.mrf.mxu0
      %v2885 = vadd.f32 %v2460, %v2884
      %2886 = vmatmul.f32.gmra.mxu0 %v2205
      %v2887 = vpop.f32.mrf.mxu0
      %v2888 = vadd.f32 %v2460, %v2887
      %2889 = vmatmul.f32.gmra.mxu0 %v2207
      %v2890 = vpop.f32.mrf.mxu0
      %v2891 = vadd.f32 %v2460, %v2890
      %2892 = vmatmul.f32.gmra.mxu0 %v2209
      %v2893 = vpop.f32.mrf.mxu0
      %v2894 = vadd.f32 %v2460, %v2893
      %2895 = vmatmul.f32.gmra.mxu0 %v2211
      %v2896 = vpop.f32.mrf.mxu0
      %v2897 = vadd.f32 %v2460, %v2896
      %2898 = vmatmul.f32.gmra.mxu0 %v2213
      %v2899 = vpop.f32.mrf.mxu0
      %v2900 = vadd.f32 %v2460, %v2899
      %2901 = vmatmul.f32.gmra.mxu0 %v2215
      %v2902 = vpop.f32.mrf.mxu0
      %v2903 = vadd.f32 %v2460, %v2902
      %2904 = vmatmul.f32.gmra.mxu0 %v2217
      %v2905 = vpop.f32.mrf.mxu0
      %v2906 = vadd.f32 %v2460, %v2905
      %2907 = vmatmul.f32.gmra.mxu0 %v2219
      %v2908 = vpop.f32.mrf.mxu0
      %v2909 = vadd.f32 %v2460, %v2908
      %2910 = vmatmul.f32.gmra.mxu0 %v2221
      %v2911 = vpop.f32.mrf.mxu0
      %v2912 = vadd.f32 %v2460, %v2911
      %2913 = vmatmul.f32.gmra.mxu0 %v2223
      %v2914 = vpop.f32.mrf.mxu0
      %v2915 = vadd.f32 %v2460, %v2914
      %2916 = vmatmul.f32.gmra.mxu0 %v2225
      %v2917 = vpop.f32.mrf.mxu0
      %v2918 = vadd.f32 %v2460, %v2917
      %2919 = vmatmul.f32.gmra.mxu0 %v2227
      %v2920 = vpop.f32.mrf.mxu0
      %v2921 = vadd.f32 %v2460, %v2920
      %2922 = vmatmul.f32.gmra.mxu0 %v2229
      %v2923 = vpop.f32.mrf.mxu0
      %v2924 = vadd.f32 %v2460, %v2923
      %2925 = vdwg.mxu0
      %2926 = vmatpush.msra.mxu0 %v2451
      %2927 = vmatpush.msra.mxu0 %v2444
      %2928 = vmatpush.msra.mxu0 %v2437
      %2929 = vmatpush.msra.mxu0 %v2430
      %2930 = vmatpush.msra.mxu0 %v2423
      %2931 = vmatpush.msra.mxu0 %v2416
      %2932 = vmatpush.msra.mxu0 %v2409
      %2933 = vmatpush.msra.mxu0 %v2402
      %2934 = vmatpush.msra.mxu0 %v2395
      %2935 = vmatpush.msra.mxu0 %v2388
      %2936 = vmatpush.msra.mxu0 %v2381
      %2937 = vmatpush.msra.mxu0 %v2374
      %2938 = vmatpush.msra.mxu0 %v2367
      %2939 = vmatpush.msra.mxu0 %v2360
      %2940 = vmatpush.msra.mxu0 %v2353
      %2941 = vmatpush.msra.mxu0 %v2346
      %2942 = vmatmul.f32.gmra.mxu0 %v2200
      %v2943 = vpop.f32.mrf.mxu0
      %v2944 = vadd.f32 %v2879, %v2943
      %2945 = vmatmul.f32.gmra.mxu0 %v2202
      %v2946 = vpop.f32.mrf.mxu0
      %v2947 = vadd.f32 %v2882, %v2946
      %2948 = vmatmul.f32.gmra.mxu0 %v2204
      %v2949 = vpop.f32.mrf.mxu0
      %v2950 = vadd.f32 %v2885, %v2949
      %2951 = vmatmul.f32.gmra.mxu0 %v2206
      %v2952 = vpop.f32.mrf.mxu0
      %v2953 = vadd.f32 %v2888, %v2952
      %2954 = vmatmul.f32.gmra.mxu0 %v2208
      %v2955 = vpop.f32.mrf.mxu0
      %v2956 = vadd.f32 %v2891, %v2955
      %2957 = vmatmul.f32.gmra.mxu0 %v2210
      %v2958 = vpop.f32.mrf.mxu0
      %v2959 = vadd.f32 %v2894, %v2958
      %2960 = vmatmul.f32.gmra.mxu0 %v2212
      %v2961 = vpop.f32.mrf.mxu0
      %v2962 = vadd.f32 %v2897, %v2961
      %2963 = vmatmul.f32.gmra.mxu0 %v2214
      %v2964 = vpop.f32.mrf.mxu0
      %v2965 = vadd.f32 %v2900, %v2964
      %2966 = vmatmul.f32.gmra.mxu0 %v2216
      %v2967 = vpop.f32.mrf.mxu0
      %v2968 = vadd.f32 %v2903, %v2967
      %2969 = vmatmul.f32.gmra.mxu0 %v2218
      %v2970 = vpop.f32.mrf.mxu0
      %v2971 = vadd.f32 %v2906, %v2970
      %2972 = vmatmul.f32.gmra.mxu0 %v2220
      %v2973 = vpop.f32.mrf.mxu0
      %v2974 = vadd.f32 %v2909, %v2973
      %2975 = vmatmul.f32.gmra.mxu0 %v2222
      %v2976 = vpop.f32.mrf.mxu0
      %v2977 = vadd.f32 %v2912, %v2976
      %2978 = vmatmul.f32.gmra.mxu0 %v2224
      %v2979 = vpop.f32.mrf.mxu0
      %v2980 = vadd.f32 %v2915, %v2979
      %2981 = vmatmul.f32.gmra.mxu0 %v2226
      %v2982 = vpop.f32.mrf.mxu0
      %v2983 = vadd.f32 %v2918, %v2982
      %2984 = vmatmul.f32.gmra.mxu0 %v2228
      %v2985 = vpop.f32.mrf.mxu0
      %v2986 = vadd.f32 %v2921, %v2985
      %2987 = vmatmul.f32.gmra.mxu0 %v2230
      %v2988 = vpop.f32.mrf.mxu0
      %v2989 = vadd.f32 %v2924, %v2988
      %2990 = vdwg.mxu0
      %2991 = vmatpush.msra.mxu0 %v2340
      %2992 = vmatpush.msra.mxu0 %v2333
      %2993 = vmatpush.msra.mxu0 %v2326
      %2994 = vmatpush.msra.mxu0 %v2319
      %2995 = vmatpush.msra.mxu0 %v2312
      %2996 = vmatpush.msra.mxu0 %v2305
      %2997 = vmatpush.msra.mxu0 %v2298
      %2998 = vmatpush.msra.mxu0 %v2291
      %2999 = vmatpush.msra.mxu0 %v2284
      %3000 = vmatpush.msra.mxu0 %v2277
      %3001 = vmatpush.msra.mxu0 %v2270
      %3002 = vmatpush.msra.mxu0 %v2263
      %3003 = vmatpush.msra.mxu0 %v2256
      %3004 = vmatpush.msra.mxu0 %v2249
      %3005 = vmatpush.msra.mxu0 %v2242
      %3006 = vmatpush.msra.mxu0 %v2235
      %3007 = vmatmul.f32.gmra.mxu0 %v2199
      %v3008 = vpop.f32.mrf.mxu0
      %v3009 = vadd.f32 %v2461, %v3008
      %3010 = vmatmul.f32.gmra.mxu0 %v2201
      %v3011 = vpop.f32.mrf.mxu0
      %v3012 = vadd.f32 %v2461, %v3011
      %3013 = vmatmul.f32.gmra.mxu0 %v2203
      %v3014 = vpop.f32.mrf.mxu0
      %v3015 = vadd.f32 %v2461, %v3014
      %3016 = vmatmul.f32.gmra.mxu0 %v2205
      %v3017 = vpop.f32.mrf.mxu0
      %v3018 = vadd.f32 %v2461, %v3017
      %3019 = vmatmul.f32.gmra.mxu0 %v2207
      %v3020 = vpop.f32.mrf.mxu0
      %v3021 = vadd.f32 %v2461, %v3020
      %3022 = vmatmul.f32.gmra.mxu0 %v2209
      %v3023 = vpop.f32.mrf.mxu0
      %v3024 = vadd.f32 %v2461, %v3023
      %3025 = vmatmul.f32.gmra.mxu0 %v2211
      %v3026 = vpop.f32.mrf.mxu0
      %v3027 = vadd.f32 %v2461, %v3026
      %3028 = vmatmul.f32.gmra.mxu0 %v2213
      %v3029 = vpop.f32.mrf.mxu0
      %v3030 = vadd.f32 %v2461, %v3029
      %3031 = vmatmul.f32.gmra.mxu0 %v2215
      %v3032 = vpop.f32.mrf.mxu0
      %v3033 = vadd.f32 %v2461, %v3032
      %3034 = vmatmul.f32.gmra.mxu0 %v2217
      %v3035 = vpop.f32.mrf.mxu0
      %v3036 = vadd.f32 %v2461, %v3035
      %3037 = vmatmul.f32.gmra.mxu0 %v2219
      %v3038 = vpop.f32.mrf.mxu0
      %v3039 = vadd.f32 %v2461, %v3038
      %3040 = vmatmul.f32.gmra.mxu0 %v2221
      %v3041 = vpop.f32.mrf.mxu0
      %v3042 = vadd.f32 %v2461, %v3041
      %3043 = vmatmul.f32.gmra.mxu0 %v2223
      %v3044 = vpop.f32.mrf.mxu0
      %v3045 = vadd.f32 %v2461, %v3044
      %3046 = vmatmul.f32.gmra.mxu0 %v2225
      %v3047 = vpop.f32.mrf.mxu0
      %v3048 = vadd.f32 %v2461, %v3047
      %3049 = vmatmul.f32.gmra.mxu0 %v2227
      %v3050 = vpop.f32.mrf.mxu0
      %v3051 = vadd.f32 %v2461, %v3050
      %3052 = vmatmul.f32.gmra.mxu0 %v2229
      %v3053 = vpop.f32.mrf.mxu0
      %v3054 = vadd.f32 %v2461, %v3053
      %3055 = vdwg.mxu0
      %3056 = vmatpush.msra.mxu0 %v2452
      %3057 = vmatpush.msra.mxu0 %v2445
      %3058 = vmatpush.msra.mxu0 %v2438
      %3059 = vmatpush.msra.mxu0 %v2431
      %3060 = vmatpush.msra.mxu0 %v2424
      %3061 = vmatpush.msra.mxu0 %v2417
      %3062 = vmatpush.msra.mxu0 %v2410
      %3063 = vmatpush.msra.mxu0 %v2403
      %3064 = vmatpush.msra.mxu0 %v2396
      %3065 = vmatpush.msra.mxu0 %v2389
      %3066 = vmatpush.msra.mxu0 %v2382
      %3067 = vmatpush.msra.mxu0 %v2375
      %3068 = vmatpush.msra.mxu0 %v2368
      %3069 = vmatpush.msra.mxu0 %v2361
      %3070 = vmatpush.msra.mxu0 %v2354
      %3071 = vmatpush.msra.mxu0 %v2347
      %3072 = vmatmul.f32.gmra.mxu0 %v2200
      %v3073 = vpop.f32.mrf.mxu0
      %v3074 = vadd.f32 %v3009, %v3073
      %3075 = vmatmul.f32.gmra.mxu0 %v2202
      %v3076 = vpop.f32.mrf.mxu0
      %v3077 = vadd.f32 %v3012, %v3076
      %3078 = vmatmul.f32.gmra.mxu0 %v2204
      %v3079 = vpop.f32.mrf.mxu0
      %v3080 = vadd.f32 %v3015, %v3079
      %3081 = vmatmul.f32.gmra.mxu0 %v2206
      %v3082 = vpop.f32.mrf.mxu0
      %v3083 = vadd.f32 %v3018, %v3082
      %3084 = vmatmul.f32.gmra.mxu0 %v2208
      %v3085 = vpop.f32.mrf.mxu0
      %v3086 = vadd.f32 %v3021, %v3085
      %3087 = vmatmul.f32.gmra.mxu0 %v2210
      %v3088 = vpop.f32.mrf.mxu0
      %v3089 = vadd.f32 %v3024, %v3088
      %3090 = vmatmul.f32.gmra.mxu0 %v2212
      %v3091 = vpop.f32.mrf.mxu0
      %v3092 = vadd.f32 %v3027, %v3091
      %3093 = vmatmul.f32.gmra.mxu0 %v2214
      %v3094 = vpop.f32.mrf.mxu0
      %v3095 = vadd.f32 %v3030, %v3094
      %3096 = vmatmul.f32.gmra.mxu0 %v2216
      %v3097 = vpop.f32.mrf.mxu0
      %v3098 = vadd.f32 %v3033, %v3097
      %3099 = vmatmul.f32.gmra.mxu0 %v2218
      %v3100 = vpop.f32.mrf.mxu0
      %v3101 = vadd.f32 %v3036, %v3100
      %3102 = vmatmul.f32.gmra.mxu0 %v2220
      %v3103 = vpop.f32.mrf.mxu0
      %v3104 = vadd.f32 %v3039, %v3103
      %3105 = vmatmul.f32.gmra.mxu0 %v2222
      %v3106 = vpop.f32.mrf.mxu0
      %v3107 = vadd.f32 %v3042, %v3106
      %3108 = vmatmul.f32.gmra.mxu0 %v2224
      %v3109 = vpop.f32.mrf.mxu0
      %v3110 = vadd.f32 %v3045, %v3109
      %3111 = vmatmul.f32.gmra.mxu0 %v2226
      %v3112 = vpop.f32.mrf.mxu0
      %v3113 = vadd.f32 %v3048, %v3112
      %3114 = vmatmul.f32.gmra.mxu0 %v2228
      %v3115 = vpop.f32.mrf.mxu0
      %v3116 = vadd.f32 %v3051, %v3115
      %3117 = vmatmul.f32.gmra.mxu0 %v2230
      %v3118 = vpop.f32.mrf.mxu0
      %v3119 = vadd.f32 %v3054, %v3118
      %3120 = vdwg.mxu0
      %3121 = vmatpush.msra.mxu0 %v2341
      %3122 = vmatpush.msra.mxu0 %v2334
      %3123 = vmatpush.msra.mxu0 %v2327
      %3124 = vmatpush.msra.mxu0 %v2320
      %3125 = vmatpush.msra.mxu0 %v2313
      %3126 = vmatpush.msra.mxu0 %v2306
      %3127 = vmatpush.msra.mxu0 %v2299
      %3128 = vmatpush.msra.mxu0 %v2292
      %3129 = vmatpush.msra.mxu0 %v2285
      %3130 = vmatpush.msra.mxu0 %v2278
      %3131 = vmatpush.msra.mxu0 %v2271
      %3132 = vmatpush.msra.mxu0 %v2264
      %3133 = vmatpush.msra.mxu0 %v2257
      %3134 = vmatpush.msra.mxu0 %v2250
      %3135 = vmatpush.msra.mxu0 %v2243
      %3136 = vmatpush.msra.mxu0 %v2236
      %3137 = vmatmul.f32.gmra.mxu0 %v2199
      %v3138 = vpop.f32.mrf.mxu0
      %v3139 = vadd.f32 %v2462, %v3138
      %3140 = vmatmul.f32.gmra.mxu0 %v2201
      %v3141 = vpop.f32.mrf.mxu0
      %v3142 = vadd.f32 %v2462, %v3141
      %3143 = vmatmul.f32.gmra.mxu0 %v2203
      %v3144 = vpop.f32.mrf.mxu0
      %v3145 = vadd.f32 %v2462, %v3144
      %3146 = vmatmul.f32.gmra.mxu0 %v2205
      %v3147 = vpop.f32.mrf.mxu0
      %v3148 = vadd.f32 %v2462, %v3147
      %3149 = vmatmul.f32.gmra.mxu0 %v2207
      %v3150 = vpop.f32.mrf.mxu0
      %v3151 = vadd.f32 %v2462, %v3150
      %3152 = vmatmul.f32.gmra.mxu0 %v2209
      %v3153 = vpop.f32.mrf.mxu0
      %v3154 = vadd.f32 %v2462, %v3153
      %3155 = vmatmul.f32.gmra.mxu0 %v2211
      %v3156 = vpop.f32.mrf.mxu0
      %v3157 = vadd.f32 %v2462, %v3156
      %3158 = vmatmul.f32.gmra.mxu0 %v2213
      %v3159 = vpop.f32.mrf.mxu0
      %v3160 = vadd.f32 %v2462, %v3159
      %3161 = vmatmul.f32.gmra.mxu0 %v2215
      %v3162 = vpop.f32.mrf.mxu0
      %v3163 = vadd.f32 %v2462, %v3162
      %3164 = vmatmul.f32.gmra.mxu0 %v2217
      %v3165 = vpop.f32.mrf.mxu0
      %v3166 = vadd.f32 %v2462, %v3165
      %3167 = vmatmul.f32.gmra.mxu0 %v2219
      %v3168 = vpop.f32.mrf.mxu0
      %v3169 = vadd.f32 %v2462, %v3168
      %3170 = vmatmul.f32.gmra.mxu0 %v2221
      %v3171 = vpop.f32.mrf.mxu0
      %v3172 = vadd.f32 %v2462, %v3171
      %3173 = vmatmul.f32.gmra.mxu0 %v2223
      %v3174 = vpop.f32.mrf.mxu0
      %v3175 = vadd.f32 %v2462, %v3174
      %3176 = vmatmul.f32.gmra.mxu0 %v2225
      %v3177 = vpop.f32.mrf.mxu0
      %v3178 = vadd.f32 %v2462, %v3177
      %3179 = vmatmul.f32.gmra.mxu0 %v2227
      %v3180 = vpop.f32.mrf.mxu0
      %v3181 = vadd.f32 %v2462, %v3180
      %3182 = vmatmul.f32.gmra.mxu0 %v2229
      %v3183 = vpop.f32.mrf.mxu0
      %v3184 = vadd.f32 %v2462, %v3183
      %3185 = vdwg.mxu0
      %3186 = vmatpush.msra.mxu0 %v2453
      %3187 = vmatpush.msra.mxu0 %v2446
      %3188 = vmatpush.msra.mxu0 %v2439
      %3189 = vmatpush.msra.mxu0 %v2432
      %3190 = vmatpush.msra.mxu0 %v2425
      %3191 = vmatpush.msra.mxu0 %v2418
      %3192 = vmatpush.msra.mxu0 %v2411
      %3193 = vmatpush.msra.mxu0 %v2404
      %3194 = vmatpush.msra.mxu0 %v2397
      %3195 = vmatpush.msra.mxu0 %v2390
      %3196 = vmatpush.msra.mxu0 %v2383
      %3197 = vmatpush.msra.mxu0 %v2376
      %3198 = vmatpush.msra.mxu0 %v2369
      %3199 = vmatpush.msra.mxu0 %v2362
      %3200 = vmatpush.msra.mxu0 %v2355
      %3201 = vmatpush.msra.mxu0 %v2348
      %3202 = vmatmul.f32.gmra.mxu0 %v2200
      %v3203 = vpop.f32.mrf.mxu0
      %v3204 = vadd.f32 %v3139, %v3203
      %3205 = vmatmul.f32.gmra.mxu0 %v2202
      %v3206 = vpop.f32.mrf.mxu0
      %v3207 = vadd.f32 %v3142, %v3206
      %3208 = vmatmul.f32.gmra.mxu0 %v2204
      %v3209 = vpop.f32.mrf.mxu0
      %v3210 = vadd.f32 %v3145, %v3209
      %3211 = vmatmul.f32.gmra.mxu0 %v2206
      %v3212 = vpop.f32.mrf.mxu0
      %v3213 = vadd.f32 %v3148, %v3212
      %3214 = vmatmul.f32.gmra.mxu0 %v2208
      %v3215 = vpop.f32.mrf.mxu0
      %v3216 = vadd.f32 %v3151, %v3215
      %3217 = vmatmul.f32.gmra.mxu0 %v2210
      %v3218 = vpop.f32.mrf.mxu0
      %v3219 = vadd.f32 %v3154, %v3218
      %3220 = vmatmul.f32.gmra.mxu0 %v2212
      %v3221 = vpop.f32.mrf.mxu0
      %v3222 = vadd.f32 %v3157, %v3221
      %3223 = vmatmul.f32.gmra.mxu0 %v2214
      %v3224 = vpop.f32.mrf.mxu0
      %v3225 = vadd.f32 %v3160, %v3224
      %3226 = vmatmul.f32.gmra.mxu0 %v2216
      %v3227 = vpop.f32.mrf.mxu0
      %v3228 = vadd.f32 %v3163, %v3227
      %3229 = vmatmul.f32.gmra.mxu0 %v2218
      %v3230 = vpop.f32.mrf.mxu0
      %v3231 = vadd.f32 %v3166, %v3230
      %3232 = vmatmul.f32.gmra.mxu0 %v2220
      %v3233 = vpop.f32.mrf.mxu0
      %v3234 = vadd.f32 %v3169, %v3233
      %3235 = vmatmul.f32.gmra.mxu0 %v2222
      %v3236 = vpop.f32.mrf.mxu0
      %v3237 = vadd.f32 %v3172, %v3236
      %3238 = vmatmul.f32.gmra.mxu0 %v2224
      %v3239 = vpop.f32.mrf.mxu0
      %v3240 = vadd.f32 %v3175, %v3239
      %3241 = vmatmul.f32.gmra.mxu0 %v2226
      %v3242 = vpop.f32.mrf.mxu0
      %v3243 = vadd.f32 %v3178, %v3242
      %3244 = vmatmul.f32.gmra.mxu0 %v2228
      %v3245 = vpop.f32.mrf.mxu0
      %v3246 = vadd.f32 %v3181, %v3245
      %3247 = vmatmul.f32.gmra.mxu0 %v2230
      %v3248 = vpop.f32.mrf.mxu0
      %v3249 = vadd.f32 %v3184, %v3248
      %3250 = vdwg.mxu0
      %3251 = vmatpush.msra.mxu0 %v2342
      %3252 = vmatpush.msra.mxu0 %v2335
      %3253 = vmatpush.msra.mxu0 %v2328
      %3254 = vmatpush.msra.mxu0 %v2321
      %3255 = vmatpush.msra.mxu0 %v2314
      %3256 = vmatpush.msra.mxu0 %v2307
      %3257 = vmatpush.msra.mxu0 %v2300
      %3258 = vmatpush.msra.mxu0 %v2293
      %3259 = vmatpush.msra.mxu0 %v2286
      %3260 = vmatpush.msra.mxu0 %v2279
      %3261 = vmatpush.msra.mxu0 %v2272
      %3262 = vmatpush.msra.mxu0 %v2265
      %3263 = vmatpush.msra.mxu0 %v2258
      %3264 = vmatpush.msra.mxu0 %v2251
      %3265 = vmatpush.msra.mxu0 %v2244
      %3266 = vmatpush.msra.mxu0 %v2237
      %3267 = vmatmul.f32.gmra.mxu0 %v2199
      %v3268 = vpop.f32.mrf.mxu0
      %v3269 = vadd.f32 %v2463, %v3268
      %3270 = vmatmul.f32.gmra.mxu0 %v2201
      %v3271 = vpop.f32.mrf.mxu0
      %v3272 = vadd.f32 %v2463, %v3271
      %3273 = vmatmul.f32.gmra.mxu0 %v2203
      %v3274 = vpop.f32.mrf.mxu0
      %v3275 = vadd.f32 %v2463, %v3274
      %3276 = vmatmul.f32.gmra.mxu0 %v2205
      %v3277 = vpop.f32.mrf.mxu0
      %v3278 = vadd.f32 %v2463, %v3277
      %3279 = vmatmul.f32.gmra.mxu0 %v2207
      %v3280 = vpop.f32.mrf.mxu0
      %v3281 = vadd.f32 %v2463, %v3280
      %3282 = vmatmul.f32.gmra.mxu0 %v2209
      %v3283 = vpop.f32.mrf.mxu0
      %v3284 = vadd.f32 %v2463, %v3283
      %3285 = vmatmul.f32.gmra.mxu0 %v2211
      %v3286 = vpop.f32.mrf.mxu0
      %v3287 = vadd.f32 %v2463, %v3286
      %3288 = vmatmul.f32.gmra.mxu0 %v2213
      %v3289 = vpop.f32.mrf.mxu0
      %v3290 = vadd.f32 %v2463, %v3289
      %3291 = vmatmul.f32.gmra.mxu0 %v2215
      %v3292 = vpop.f32.mrf.mxu0
      %v3293 = vadd.f32 %v2463, %v3292
      %3294 = vmatmul.f32.gmra.mxu0 %v2217
      %v3295 = vpop.f32.mrf.mxu0
      %v3296 = vadd.f32 %v2463, %v3295
      %3297 = vmatmul.f32.gmra.mxu0 %v2219
      %v3298 = vpop.f32.mrf.mxu0
      %v3299 = vadd.f32 %v2463, %v3298
      %3300 = vmatmul.f32.gmra.mxu0 %v2221
      %v3301 = vpop.f32.mrf.mxu0
      %v3302 = vadd.f32 %v2463, %v3301
      %3303 = vmatmul.f32.gmra.mxu0 %v2223
      %v3304 = vpop.f32.mrf.mxu0
      %v3305 = vadd.f32 %v2463, %v3304
      %3306 = vmatmul.f32.gmra.mxu0 %v2225
      %v3307 = vpop.f32.mrf.mxu0
      %v3308 = vadd.f32 %v2463, %v3307
      %3309 = vmatmul.f32.gmra.mxu0 %v2227
      %v3310 = vpop.f32.mrf.mxu0
      %v3311 = vadd.f32 %v2463, %v3310
      %3312 = vmatmul.f32.gmra.mxu0 %v2229
      %v3313 = vpop.f32.mrf.mxu0
      %v3314 = vadd.f32 %v2463, %v3313
      %3315 = vdwg.mxu0
      %3316 = vmatpush.msra.mxu0 %v2454
      %3317 = vmatpush.msra.mxu0 %v2447
      %3318 = vmatpush.msra.mxu0 %v2440
      %3319 = vmatpush.msra.mxu0 %v2433
      %3320 = vmatpush.msra.mxu0 %v2426
      %3321 = vmatpush.msra.mxu0 %v2419
      %3322 = vmatpush.msra.mxu0 %v2412
      %3323 = vmatpush.msra.mxu0 %v2405
      %3324 = vmatpush.msra.mxu0 %v2398
      %3325 = vmatpush.msra.mxu0 %v2391
      %3326 = vmatpush.msra.mxu0 %v2384
      %3327 = vmatpush.msra.mxu0 %v2377
      %3328 = vmatpush.msra.mxu0 %v2370
      %3329 = vmatpush.msra.mxu0 %v2363
      %3330 = vmatpush.msra.mxu0 %v2356
      %3331 = vmatpush.msra.mxu0 %v2349
      %3332 = vmatmul.f32.gmra.mxu0 %v2200
      %v3333 = vpop.f32.mrf.mxu0
      %v3334 = vadd.f32 %v3269, %v3333
      %3335 = vmatmul.f32.gmra.mxu0 %v2202
      %v3336 = vpop.f32.mrf.mxu0
      %v3337 = vadd.f32 %v3272, %v3336
      %3338 = vmatmul.f32.gmra.mxu0 %v2204
      %v3339 = vpop.f32.mrf.mxu0
      %v3340 = vadd.f32 %v3275, %v3339
      %3341 = vmatmul.f32.gmra.mxu0 %v2206
      %v3342 = vpop.f32.mrf.mxu0
      %v3343 = vadd.f32 %v3278, %v3342
      %3344 = vmatmul.f32.gmra.mxu0 %v2208
      %v3345 = vpop.f32.mrf.mxu0
      %v3346 = vadd.f32 %v3281, %v3345
      %3347 = vmatmul.f32.gmra.mxu0 %v2210
      %v3348 = vpop.f32.mrf.mxu0
      %v3349 = vadd.f32 %v3284, %v3348
      %3350 = vmatmul.f32.gmra.mxu0 %v2212
      %v3351 = vpop.f32.mrf.mxu0
      %v3352 = vadd.f32 %v3287, %v3351
      %3353 = vmatmul.f32.gmra.mxu0 %v2214
      %v3354 = vpop.f32.mrf.mxu0
      %v3355 = vadd.f32 %v3290, %v3354
      %3356 = vmatmul.f32.gmra.mxu0 %v2216
      %v3357 = vpop.f32.mrf.mxu0
      %v3358 = vadd.f32 %v3293, %v3357
      %3359 = vmatmul.f32.gmra.mxu0 %v2218
      %v3360 = vpop.f32.mrf.mxu0
      %v3361 = vadd.f32 %v3296, %v3360
      %3362 = vmatmul.f32.gmra.mxu0 %v2220
      %v3363 = vpop.f32.mrf.mxu0
      %v3364 = vadd.f32 %v3299, %v3363
      %3365 = vmatmul.f32.gmra.mxu0 %v2222
      %v3366 = vpop.f32.mrf.mxu0
      %v3367 = vadd.f32 %v3302, %v3366
      %3368 = vmatmul.f32.gmra.mxu0 %v2224
      %v3369 = vpop.f32.mrf.mxu0
      %v3370 = vadd.f32 %v3305, %v3369
      %3371 = vmatmul.f32.gmra.mxu0 %v2226
      %v3372 = vpop.f32.mrf.mxu0
      %v3373 = vadd.f32 %v3308, %v3372
      %3374 = vmatmul.f32.gmra.mxu0 %v2228
      %v3375 = vpop.f32.mrf.mxu0
      %v3376 = vadd.f32 %v3311, %v3375
      %3377 = vmatmul.f32.gmra.mxu0 %v2230
      %v3378 = vpop.f32.mrf.mxu0
      %v3379 = vadd.f32 %v3314, %v3378
      %3380 = vdwg.mxu0
      %v3381 = vmul.f32 %v2554, 0.5
      %v3382 = vmul.f32 %v2684, 0.5
      %v3383 = vmul.f32 %v2814, 0.5
      %v3384 = vmul.f32 %v2944, 0.5
      %v3385 = vmul.f32 %v3074, 0.5
      %v3386 = vmul.f32 %v3204, 0.5
      %v3387 = vmul.f32 %v3334, 0.5
      %v3388 = vmul.f32 %v2557, 0.5
      %v3389 = vmul.f32 %v2687, 0.5
      %v3390 = vmul.f32 %v2817, 0.5
      %v3391 = vmul.f32 %v2947, 0.5
      %v3392 = vmul.f32 %v3077, 0.5
      %v3393 = vmul.f32 %v3207, 0.5
      %v3394 = vmul.f32 %v3337, 0.5
      %v3395 = vmul.f32 %v2560, 0.5
      %v3396 = vmul.f32 %v2690, 0.5
      %v3397 = vmul.f32 %v2820, 0.5
      %v3398 = vmul.f32 %v2950, 0.5
      %v3399 = vmul.f32 %v3080, 0.5
      %v3400 = vmul.f32 %v3210, 0.5
      %v3401 = vmul.f32 %v3340, 0.5
      %v3402 = vmul.f32 %v2563, 0.5
      %v3403 = vmul.f32 %v2693, 0.5
      %v3404 = vmul.f32 %v2823, 0.5
      %v3405 = vmul.f32 %v2953, 0.5
      %v3406 = vmul.f32 %v3083, 0.5
      %v3407 = vmul.f32 %v3213, 0.5
      %v3408 = vmul.f32 %v3343, 0.5
      %v3409 = vmul.f32 %v2566, 0.5
      %v3410 = vmul.f32 %v2696, 0.5
      %v3411 = vmul.f32 %v2826, 0.5
      %v3412 = vmul.f32 %v2956, 0.5
      %v3413 = vmul.f32 %v3086, 0.5
      %v3414 = vmul.f32 %v3216, 0.5
      %v3415 = vmul.f32 %v3346, 0.5
      %v3416 = vmul.f32 %v2569, 0.5
      %v3417 = vmul.f32 %v2699, 0.5
      %v3418 = vmul.f32 %v2829, 0.5
      %v3419 = vmul.f32 %v2959, 0.5
      %v3420 = vmul.f32 %v3089, 0.5
      %v3421 = vmul.f32 %v3219, 0.5
      %v3422 = vmul.f32 %v3349, 0.5
      %v3423 = vmul.f32 %v2572, 0.5
      %v3424 = vmul.f32 %v2702, 0.5
      %v3425 = vmul.f32 %v2832, 0.5
      %v3426 = vmul.f32 %v2962, 0.5
      %v3427 = vmul.f32 %v3092, 0.5
      %v3428 = vmul.f32 %v3222, 0.5
      %v3429 = vmul.f32 %v3352, 0.5
      %v3430 = vmul.f32 %v2575, 0.5
      %v3431 = vmul.f32 %v2705, 0.5
      %v3432 = vmul.f32 %v2835, 0.5
      %v3433 = vmul.f32 %v2965, 0.5
      %v3434 = vmul.f32 %v3095, 0.5
      %v3435 = vmul.f32 %v3225, 0.5
      %v3436 = vmul.f32 %v3355, 0.5
      %v3437 = vmul.f32 %v2578, 0.5
      %v3438 = vmul.f32 %v2708, 0.5
      %v3439 = vmul.f32 %v2838, 0.5
      %v3440 = vmul.f32 %v2968, 0.5
      %v3441 = vmul.f32 %v3098, 0.5
      %v3442 = vmul.f32 %v3228, 0.5
      %v3443 = vmul.f32 %v3358, 0.5
      %v3444 = vmul.f32 %v2581, 0.5
      %v3445 = vmul.f32 %v2711, 0.5
      %v3446 = vmul.f32 %v2841, 0.5
      %v3447 = vmul.f32 %v2971, 0.5
      %v3448 = vmul.f32 %v3101, 0.5
      %v3449 = vmul.f32 %v3231, 0.5
      %v3450 = vmul.f32 %v3361, 0.5
      %v3451 = vmul.f32 %v2584, 0.5
      %v3452 = vmul.f32 %v2714, 0.5
      %v3453 = vmul.f32 %v2844, 0.5
      %v3454 = vmul.f32 %v2974, 0.5
      %v3455 = vmul.f32 %v3104, 0.5
      %v3456 = vmul.f32 %v3234, 0.5
      %v3457 = vmul.f32 %v3364, 0.5
      %v3458 = vmul.f32 %v2587, 0.5
      %v3459 = vmul.f32 %v2717, 0.5
      %v3460 = vmul.f32 %v2847, 0.5
      %v3461 = vmul.f32 %v2977, 0.5
      %v3462 = vmul.f32 %v3107, 0.5
      %v3463 = vmul.f32 %v3237, 0.5
      %v3464 = vmul.f32 %v3367, 0.5
      %v3465 = vmul.f32 %v2590, 0.5
      %v3466 = vmul.f32 %v2720, 0.5
      %v3467 = vmul.f32 %v2850, 0.5
      %v3468 = vmul.f32 %v2980, 0.5
      %v3469 = vmul.f32 %v3110, 0.5
      %v3470 = vmul.f32 %v3240, 0.5
      %v3471 = vmul.f32 %v3370, 0.5
      %v3472 = vmul.f32 %v2593, 0.5
      %v3473 = vmul.f32 %v2723, 0.5
      %v3474 = vmul.f32 %v2853, 0.5
      %v3475 = vmul.f32 %v2983, 0.5
      %v3476 = vmul.f32 %v3113, 0.5
      %v3477 = vmul.f32 %v3243, 0.5
      %v3478 = vmul.f32 %v3373, 0.5
      %v3479 = vmul.f32 %v2596, 0.5
      %v3480 = vmul.f32 %v2726, 0.5
      %v3481 = vmul.f32 %v2856, 0.5
      %v3482 = vmul.f32 %v2986, 0.5
      %v3483 = vmul.f32 %v3116, 0.5
      %v3484 = vmul.f32 %v3246, 0.5
      %v3485 = vmul.f32 %v3376, 0.5
      %v3486 = vmul.f32 %v2599, 0.5
      %v3487 = vmul.f32 %v2729, 0.5
      %v3488 = vmul.f32 %v2859, 0.5
      %v3489 = vmul.f32 %v2989, 0.5
      %v3490 = vmul.f32 %v3119, 0.5
      %v3491 = vmul.f32 %v3249, 0.5
      %v3492 = vmul.f32 %v3379, 0.5
      %v3493 = vtanh.pop %v3381
      %v3494 = vtanh.pop %v3382
      %v3495 = vtanh.pop %v3383
      %v3496 = vtanh.pop %v3384
      %v3497 = vtanh.pop %v3385
      %v3498 = vtanh.pop %v3386
      %v3499 = vtanh.pop %v3387
      %v3500 = vtanh.pop %v3388
      %v3501 = vtanh.pop %v3389
      %v3502 = vtanh.pop %v3390
      %v3503 = vtanh.pop %v3391
      %v3504 = vtanh.pop %v3392
      %v3505 = vtanh.pop %v3393
      %v3506 = vtanh.pop %v3394
      %v3507 = vtanh.pop %v3395
      %v3508 = vtanh.pop %v3396
      %v3509 = vtanh.pop %v3397
      %v3510 = vtanh.pop %v3398
      %v3511 = vtanh.pop %v3399
      %v3512 = vtanh.pop %v3400
      %v3513 = vtanh.pop %v3401
      %v3514 = vtanh.pop %v3402
      %v3515 = vtanh.pop %v3403
      %v3516 = vtanh.pop %v3404
      %v3517 = vtanh.pop %v3405
      %v3518 = vtanh.pop %v3406
      %v3519 = vtanh.pop %v3407
      %v3520 = vtanh.pop %v3408
      %v3521 = vtanh.pop %v3409
      %v3522 = vtanh.pop %v3410
      %v3523 = vtanh.pop %v3411
      %v3524 = vtanh.pop %v3412
      %v3525 = vtanh.pop %v3413
      %v3526 = vtanh.pop %v3414
      %v3527 = vtanh.pop %v3415
      %v3528 = vtanh.pop %v3416
      %v3529 = vtanh.pop %v3417
      %v3530 = vtanh.pop %v3418
      %v3531 = vtanh.pop %v3419
      %v3532 = vtanh.pop %v3420
      %v3533 = vtanh.pop %v3421
      %v3534 = vtanh.pop %v3422
      %v3535 = vtanh.pop %v3423
      %v3536 = vtanh.pop %v3424
      %v3537 = vtanh.pop %v3425
      %v3538 = vtanh.pop %v3426
      %v3539 = vtanh.pop %v3427
      %v3540 = vtanh.pop %v3428
      %v3541 = vtanh.pop %v3429
      %v3542 = vtanh.pop %v3430
      %v3543 = vtanh.pop %v3431
      %v3544 = vtanh.pop %v3432
      %v3545 = vtanh.pop %v3433
      %v3546 = vtanh.pop %v3434
      %v3547 = vtanh.pop %v3435
      %v3548 = vtanh.pop %v3436
      %v3549 = vtanh.pop %v3437
      %v3550 = vtanh.pop %v3438
      %v3551 = vtanh.pop %v3439
      %v3552 = vtanh.pop %v3440
      %v3553 = vtanh.pop %v3441
      %v3554 = vtanh.pop %v3442
      %v3555 = vtanh.pop %v3443
      %v3556 = vtanh.pop %v3444
      %v3557 = vtanh.pop %v3445
      %v3558 = vtanh.pop %v3446
      %v3559 = vtanh.pop %v3447
      %v3560 = vtanh.pop %v3448
      %v3561 = vtanh.pop %v3449
      %v3562 = vtanh.pop %v3450
      %v3563 = vtanh.pop %v3451
      %v3564 = vtanh.pop %v3452
      %v3565 = vtanh.pop %v3453
      %v3566 = vtanh.pop %v3454
      %v3567 = vtanh.pop %v3455
      %v3568 = vtanh.pop %v3456
      %v3569 = vtanh.pop %v3457
      %v3570 = vtanh.pop %v3458
      %v3571 = vtanh.pop %v3459
      %v3572 = vtanh.pop %v3460
      %v3573 = vtanh.pop %v3461
      %v3574 = vtanh.pop %v3462
      %v3575 = vtanh.pop %v3463
      %v3576 = vtanh.pop %v3464
      %v3577 = vtanh.pop %v3465
      %v3578 = vtanh.pop %v3466
      %v3579 = vtanh.pop %v3467
      %v3580 = vtanh.pop %v3468
      %v3581 = vtanh.pop %v3469
      %v3582 = vtanh.pop %v3470
      %v3583 = vtanh.pop %v3471
      %v3584 = vtanh.pop %v3472
      %v3585 = vtanh.pop %v3473
      %v3586 = vtanh.pop %v3474
      %v3587 = vtanh.pop %v3475
      %v3588 = vtanh.pop %v3476
      %v3589 = vtanh.pop %v3477
      %v3590 = vtanh.pop %v3478
      %v3591 = vtanh.pop %v3479
      %v3592 = vtanh.pop %v3480
      %v3593 = vtanh.pop %v3481
      %v3594 = vtanh.pop %v3482
      %v3595 = vtanh.pop %v3483
      %v3596 = vtanh.pop %v3484
      %v3597 = vtanh.pop %v3485
      %v3598 = vtanh.pop %v3486
      %v3599 = vtanh.pop %v3487
      %v3600 = vtanh.pop %v3488
      %v3601 = vtanh.pop %v3489
      %v3602 = vtanh.pop %v3490
      %v3603 = vtanh.pop %v3491
      %v3604 = vtanh.pop %v3492
      %v3605 = vadd.f32 %v3493, 1.0
      %v3606 = vadd.f32 %v3494, 1.0
      %v3607 = vadd.f32 %v3495, 1.0
      %v3608 = vadd.f32 %v3496, 1.0
      %v3609 = vadd.f32 %v3497, 1.0
      %v3610 = vadd.f32 %v3498, 1.0
      %v3611 = vadd.f32 %v3499, 1.0
      %v3612 = vadd.f32 %v3500, 1.0
      %v3613 = vadd.f32 %v3501, 1.0
      %v3614 = vadd.f32 %v3502, 1.0
      %v3615 = vadd.f32 %v3503, 1.0
      %v3616 = vadd.f32 %v3504, 1.0
      %v3617 = vadd.f32 %v3505, 1.0
      %v3618 = vadd.f32 %v3506, 1.0
      %v3619 = vadd.f32 %v3507, 1.0
      %v3620 = vadd.f32 %v3508, 1.0
      %v3621 = vadd.f32 %v3509, 1.0
      %v3622 = vadd.f32 %v3510, 1.0
      %v3623 = vadd.f32 %v3511, 1.0
      %v3624 = vadd.f32 %v3512, 1.0
      %v3625 = vadd.f32 %v3513, 1.0
      %v3626 = vadd.f32 %v3514, 1.0
      %v3627 = vadd.f32 %v3515, 1.0
      %v3628 = vadd.f32 %v3516, 1.0
      %v3629 = vadd.f32 %v3517, 1.0
      %v3630 = vadd.f32 %v3518, 1.0
      %v3631 = vadd.f32 %v3519, 1.0
      %v3632 = vadd.f32 %v3520, 1.0
      %v3633 = vadd.f32 %v3521, 1.0
      %v3634 = vadd.f32 %v3522, 1.0
      %v3635 = vadd.f32 %v3523, 1.0
      %v3636 = vadd.f32 %v3524, 1.0
      %v3637 = vadd.f32 %v3525, 1.0
      %v3638 = vadd.f32 %v3526, 1.0
      %v3639 = vadd.f32 %v3527, 1.0
      %v3640 = vadd.f32 %v3528, 1.0
      %v3641 = vadd.f32 %v3529, 1.0
      %v3642 = vadd.f32 %v3530, 1.0
      %v3643 = vadd.f32 %v3531, 1.0
      %v3644 = vadd.f32 %v3532, 1.0
      %v3645 = vadd.f32 %v3533, 1.0
      %v3646 = vadd.f32 %v3534, 1.0
      %v3647 = vadd.f32 %v3535, 1.0
      %v3648 = vadd.f32 %v3536, 1.0
      %v3649 = vadd.f32 %v3537, 1.0
      %v3650 = vadd.f32 %v3538, 1.0
      %v3651 = vadd.f32 %v3539, 1.0
      %v3652 = vadd.f32 %v3540, 1.0
      %v3653 = vadd.f32 %v3541, 1.0
      %v3654 = vadd.f32 %v3542, 1.0
      %v3655 = vadd.f32 %v3543, 1.0
      %v3656 = vadd.f32 %v3544, 1.0
      %v3657 = vadd.f32 %v3545, 1.0
      %v3658 = vadd.f32 %v3546, 1.0
      %v3659 = vadd.f32 %v3547, 1.0
      %v3660 = vadd.f32 %v3548, 1.0
      %v3661 = vadd.f32 %v3549, 1.0
      %v3662 = vadd.f32 %v3550, 1.0
      %v3663 = vadd.f32 %v3551, 1.0
      %v3664 = vadd.f32 %v3552, 1.0
      %v3665 = vadd.f32 %v3553, 1.0
      %v3666 = vadd.f32 %v3554, 1.0
      %v3667 = vadd.f32 %v3555, 1.0
      %v3668 = vadd.f32 %v3556, 1.0
      %v3669 = vadd.f32 %v3557, 1.0
      %v3670 = vadd.f32 %v3558, 1.0
      %v3671 = vadd.f32 %v3559, 1.0
      %v3672 = vadd.f32 %v3560, 1.0
      %v3673 = vadd.f32 %v3561, 1.0
      %v3674 = vadd.f32 %v3562, 1.0
      %v3675 = vadd.f32 %v3563, 1.0
      %v3676 = vadd.f32 %v3564, 1.0
      %v3677 = vadd.f32 %v3565, 1.0
      %v3678 = vadd.f32 %v3566, 1.0
      %v3679 = vadd.f32 %v3567, 1.0
      %v3680 = vadd.f32 %v3568, 1.0
      %v3681 = vadd.f32 %v3569, 1.0
      %v3682 = vadd.f32 %v3570, 1.0
      %v3683 = vadd.f32 %v3571, 1.0
      %v3684 = vadd.f32 %v3572, 1.0
      %v3685 = vadd.f32 %v3573, 1.0
      %v3686 = vadd.f32 %v3574, 1.0
      %v3687 = vadd.f32 %v3575, 1.0
      %v3688 = vadd.f32 %v3576, 1.0
      %v3689 = vadd.f32 %v3577, 1.0
      %v3690 = vadd.f32 %v3578, 1.0
      %v3691 = vadd.f32 %v3579, 1.0
      %v3692 = vadd.f32 %v3580, 1.0
      %v3693 = vadd.f32 %v3581, 1.0
      %v3694 = vadd.f32 %v3582, 1.0
      %v3695 = vadd.f32 %v3583, 1.0
      %v3696 = vadd.f32 %v3584, 1.0
      %v3697 = vadd.f32 %v3585, 1.0
      %v3698 = vadd.f32 %v3586, 1.0
      %v3699 = vadd.f32 %v3587, 1.0
      %v3700 = vadd.f32 %v3588, 1.0
      %v3701 = vadd.f32 %v3589, 1.0
      %v3702 = vadd.f32 %v3590, 1.0
      %v3703 = vadd.f32 %v3591, 1.0
      %v3704 = vadd.f32 %v3592, 1.0
      %v3705 = vadd.f32 %v3593, 1.0
      %v3706 = vadd.f32 %v3594, 1.0
      %v3707 = vadd.f32 %v3595, 1.0
      %v3708 = vadd.f32 %v3596, 1.0
      %v3709 = vadd.f32 %v3597, 1.0
      %v3710 = vadd.f32 %v3598, 1.0
      %v3711 = vadd.f32 %v3599, 1.0
      %v3712 = vadd.f32 %v3600, 1.0
      %v3713 = vadd.f32 %v3601, 1.0
      %v3714 = vadd.f32 %v3602, 1.0
      %v3715 = vadd.f32 %v3603, 1.0
      %v3716 = vadd.f32 %v3604, 1.0
      %v3717 = vmul.f32 %v3605, 0.5
      %v3718 = vmul.f32 %v3606, 0.5
      %v3719 = vmul.f32 %v3607, 0.5
      %v3720 = vmul.f32 %v3608, 0.5
      %v3721 = vmul.f32 %v3609, 0.5
      %v3722 = vmul.f32 %v3610, 0.5
      %v3723 = vmul.f32 %v3611, 0.5
      %v3724 = vmul.f32 %v3612, 0.5
      %v3725 = vmul.f32 %v3613, 0.5
      %v3726 = vmul.f32 %v3614, 0.5
      %v3727 = vmul.f32 %v3615, 0.5
      %v3728 = vmul.f32 %v3616, 0.5
      %v3729 = vmul.f32 %v3617, 0.5
      %v3730 = vmul.f32 %v3618, 0.5
      %v3731 = vmul.f32 %v3619, 0.5
      %v3732 = vmul.f32 %v3620, 0.5
      %v3733 = vmul.f32 %v3621, 0.5
      %v3734 = vmul.f32 %v3622, 0.5
      %v3735 = vmul.f32 %v3623, 0.5
      %v3736 = vmul.f32 %v3624, 0.5
      %v3737 = vmul.f32 %v3625, 0.5
      %v3738 = vmul.f32 %v3626, 0.5
      %v3739 = vmul.f32 %v3627, 0.5
      %v3740 = vmul.f32 %v3628, 0.5
      %v3741 = vmul.f32 %v3629, 0.5
      %v3742 = vmul.f32 %v3630, 0.5
      %v3743 = vmul.f32 %v3631, 0.5
      %v3744 = vmul.f32 %v3632, 0.5
      %v3745 = vmul.f32 %v3633, 0.5
      %v3746 = vmul.f32 %v3634, 0.5
      %v3747 = vmul.f32 %v3635, 0.5
      %v3748 = vmul.f32 %v3636, 0.5
      %v3749 = vmul.f32 %v3637, 0.5
      %v3750 = vmul.f32 %v3638, 0.5
      %v3751 = vmul.f32 %v3639, 0.5
      %v3752 = vmul.f32 %v3640, 0.5
      %v3753 = vmul.f32 %v3641, 0.5
      %v3754 = vmul.f32 %v3642, 0.5
      %v3755 = vmul.f32 %v3643, 0.5
      %v3756 = vmul.f32 %v3644, 0.5
      %v3757 = vmul.f32 %v3645, 0.5
      %v3758 = vmul.f32 %v3646, 0.5
      %v3759 = vmul.f32 %v3647, 0.5
      %v3760 = vmul.f32 %v3648, 0.5
      %v3761 = vmul.f32 %v3649, 0.5
      %v3762 = vmul.f32 %v3650, 0.5
      %v3763 = vmul.f32 %v3651, 0.5
      %v3764 = vmul.f32 %v3652, 0.5
      %v3765 = vmul.f32 %v3653, 0.5
      %v3766 = vmul.f32 %v3654, 0.5
      %v3767 = vmul.f32 %v3655, 0.5
      %v3768 = vmul.f32 %v3656, 0.5
      %v3769 = vmul.f32 %v3657, 0.5
      %v3770 = vmul.f32 %v3658, 0.5
      %v3771 = vmul.f32 %v3659, 0.5
      %v3772 = vmul.f32 %v3660, 0.5
      %v3773 = vmul.f32 %v3661, 0.5
      %v3774 = vmul.f32 %v3662, 0.5
      %v3775 = vmul.f32 %v3663, 0.5
      %v3776 = vmul.f32 %v3664, 0.5
      %v3777 = vmul.f32 %v3665, 0.5
      %v3778 = vmul.f32 %v3666, 0.5
      %v3779 = vmul.f32 %v3667, 0.5
      %v3780 = vmul.f32 %v3668, 0.5
      %v3781 = vmul.f32 %v3669, 0.5
      %v3782 = vmul.f32 %v3670, 0.5
      %v3783 = vmul.f32 %v3671, 0.5
      %v3784 = vmul.f32 %v3672, 0.5
      %v3785 = vmul.f32 %v3673, 0.5
      %v3786 = vmul.f32 %v3674, 0.5
      %v3787 = vmul.f32 %v3675, 0.5
      %v3788 = vmul.f32 %v3676, 0.5
      %v3789 = vmul.f32 %v3677, 0.5
      %v3790 = vmul.f32 %v3678, 0.5
      %v3791 = vmul.f32 %v3679, 0.5
      %v3792 = vmul.f32 %v3680, 0.5
      %v3793 = vmul.f32 %v3681, 0.5
      %v3794 = vmul.f32 %v3682, 0.5
      %v3795 = vmul.f32 %v3683, 0.5
      %v3796 = vmul.f32 %v3684, 0.5
      %v3797 = vmul.f32 %v3685, 0.5
      %v3798 = vmul.f32 %v3686, 0.5
      %v3799 = vmul.f32 %v3687, 0.5
      %v3800 = vmul.f32 %v3688, 0.5
      %v3801 = vmul.f32 %v3689, 0.5
      %v3802 = vmul.f32 %v3690, 0.5
      %v3803 = vmul.f32 %v3691, 0.5
      %v3804 = vmul.f32 %v3692, 0.5
      %v3805 = vmul.f32 %v3693, 0.5
      %v3806 = vmul.f32 %v3694, 0.5
      %v3807 = vmul.f32 %v3695, 0.5
      %v3808 = vmul.f32 %v3696, 0.5
      %v3809 = vmul.f32 %v3697, 0.5
      %v3810 = vmul.f32 %v3698, 0.5
      %v3811 = vmul.f32 %v3699, 0.5
      %v3812 = vmul.f32 %v3700, 0.5
      %v3813 = vmul.f32 %v3701, 0.5
      %v3814 = vmul.f32 %v3702, 0.5
      %v3815 = vmul.f32 %v3703, 0.5
      %v3816 = vmul.f32 %v3704, 0.5
      %v3817 = vmul.f32 %v3705, 0.5
      %v3818 = vmul.f32 %v3706, 0.5
      %v3819 = vmul.f32 %v3707, 0.5
      %v3820 = vmul.f32 %v3708, 0.5
      %v3821 = vmul.f32 %v3709, 0.5
      %v3822 = vmul.f32 %v3710, 0.5
      %v3823 = vmul.f32 %v3711, 0.5
      %v3824 = vmul.f32 %v3712, 0.5
      %v3825 = vmul.f32 %v3713, 0.5
      %v3826 = vmul.f32 %v3714, 0.5
      %v3827 = vmul.f32 %v3715, 0.5
      %v3828 = vmul.f32 %v3716, 0.5
      %3829 = vst [vmem:[%s393] sm:$0xff] %v3717
      %3830 = vst [vmem:[%s393 + $0x8] sm:$0xff] %v3718
      %3831 = vst [vmem:[%s393 + $0x10] sm:$0xff] %v3719
      %3832 = vst [vmem:[%s393 + $0x18] sm:$0xff] %v3720
      %3833 = vst [vmem:[%s393 + $0x20] sm:$0xff] %v3721
      %3834 = vst [vmem:[%s393 + $0x28] sm:$0xff] %v3722
      %3835 = vst.msk [vmem:[%s393 + $0x30] sm:$0xff] %vm709, %v3723
      %3836 = vst [vmem:[%s393 + $0x38] sm:$0xff] %v3724
      %3837 = vst [vmem:[%s393 + $0x40] sm:$0xff] %v3725
      %3838 = vst [vmem:[%s393 + $0x48] sm:$0xff] %v3726
      %3839 = vst [vmem:[%s393 + $0x50] sm:$0xff] %v3727
      %3840 = vst [vmem:[%s393 + $0x58] sm:$0xff] %v3728
      %3841 = vst [vmem:[%s393 + $0x60] sm:$0xff] %v3729
      %3842 = vst.msk [vmem:[%s393 + $0x68] sm:$0xff] %vm709, %v3730
      %3843 = vst [vmem:[%s393 + $0x70] sm:$0xff] %v3731
      %3844 = vst [vmem:[%s393 + $0x78] sm:$0xff] %v3732
      %3845 = vst [vmem:[%s393 + $0x80] sm:$0xff] %v3733
      %3846 = vst [vmem:[%s393 + $0x88] sm:$0xff] %v3734
      %3847 = vst [vmem:[%s393 + $0x90] sm:$0xff] %v3735
      %3848 = vst [vmem:[%s393 + $0x98] sm:$0xff] %v3736
      %3849 = vst.msk [vmem:[%s393 + $0xa0] sm:$0xff] %vm709, %v3737
      %3850 = vst [vmem:[%s393 + $0xa8] sm:$0xff] %v3738
      %3851 = vst [vmem:[%s393 + $0xb0] sm:$0xff] %v3739
      %3852 = vst [vmem:[%s393 + $0xb8] sm:$0xff] %v3740
      %3853 = vst [vmem:[%s393 + $0xc0] sm:$0xff] %v3741
      %3854 = vst [vmem:[%s393 + $0xc8] sm:$0xff] %v3742
      %3855 = vst [vmem:[%s393 + $0xd0] sm:$0xff] %v3743
      %3856 = vst.msk [vmem:[%s393 + $0xd8] sm:$0xff] %vm709, %v3744
      %3857 = vst [vmem:[%s393 + $0xe0] sm:$0xff] %v3745
      %3858 = vst [vmem:[%s393 + $0xe8] sm:$0xff] %v3746
      %3859 = vst [vmem:[%s393 + $0xf0] sm:$0xff] %v3747
      %3860 = vst [vmem:[%s393 + $0xf8] sm:$0xff] %v3748
      %3861 = vst [vmem:[%s393 + $0x100] sm:$0xff] %v3749
      %3862 = vst [vmem:[%s393 + $0x108] sm:$0xff] %v3750
      %3863 = vst.msk [vmem:[%s393 + $0x110] sm:$0xff] %vm709, %v3751
      %3864 = vst [vmem:[%s393 + $0x118] sm:$0xff] %v3752
      %3865 = vst [vmem:[%s393 + $0x120] sm:$0xff] %v3753
      %3866 = vst [vmem:[%s393 + $0x128] sm:$0xff] %v3754
      %3867 = vst [vmem:[%s393 + $0x130] sm:$0xff] %v3755
      %3868 = vst [vmem:[%s393 + $0x138] sm:$0xff] %v3756
      %3869 = vst [vmem:[%s393 + $0x140] sm:$0xff] %v3757
      %3870 = vst.msk [vmem:[%s393 + $0x148] sm:$0xff] %vm709, %v3758
      %3871 = vst [vmem:[%s393 + $0x150] sm:$0xff] %v3759
      %3872 = vst [vmem:[%s393 + $0x158] sm:$0xff] %v3760
      %3873 = vst [vmem:[%s393 + $0x160] sm:$0xff] %v3761
      %3874 = vst [vmem:[%s393 + $0x168] sm:$0xff] %v3762
      %3875 = vst [vmem:[%s393 + $0x170] sm:$0xff] %v3763
      %3876 = vst [vmem:[%s393 + $0x178] sm:$0xff] %v3764
      %3877 = vst.msk [vmem:[%s393 + $0x180] sm:$0xff] %vm709, %v3765
      %3878 = vst [vmem:[%s393 + $0x188] sm:$0xff] %v3766
      %3879 = vst [vmem:[%s393 + $0x190] sm:$0xff] %v3767
      %3880 = vst [vmem:[%s393 + $0x198] sm:$0xff] %v3768
      %3881 = vst [vmem:[%s393 + $0x1a0] sm:$0xff] %v3769
      %3882 = vst [vmem:[%s393 + $0x1a8] sm:$0xff] %v3770
      %3883 = vst [vmem:[%s393 + $0x1b0] sm:$0xff] %v3771
      %3884 = vst.msk [vmem:[%s393 + $0x1b8] sm:$0xff] %vm709, %v3772
      %3885 = vst [vmem:[%s393 + $0x1c0] sm:$0xff] %v3773
      %3886 = vst [vmem:[%s393 + $0x1c8] sm:$0xff] %v3774
      %3887 = vst [vmem:[%s393 + $0x1d0] sm:$0xff] %v3775
      %3888 = vst [vmem:[%s393 + $0x1d8] sm:$0xff] %v3776
      %3889 = vst [vmem:[%s393 + $0x1e0] sm:$0xff] %v3777
      %3890 = vst [vmem:[%s393 + $0x1e8] sm:$0xff] %v3778
      %3891 = vst.msk [vmem:[%s393 + $0x1f0] sm:$0xff] %vm709, %v3779
      %3892 = vst [vmem:[%s393 + $0x1f8] sm:$0xff] %v3780
      %3893 = vst [vmem:[%s393 + $0x200] sm:$0xff] %v3781
      %3894 = vst [vmem:[%s393 + $0x208] sm:$0xff] %v3782
      %3895 = vst [vmem:[%s393 + $0x210] sm:$0xff] %v3783
      %3896 = vst [vmem:[%s393 + $0x218] sm:$0xff] %v3784
      %3897 = vst [vmem:[%s393 + $0x220] sm:$0xff] %v3785
      %3898 = vst.msk [vmem:[%s393 + $0x228] sm:$0xff] %vm709, %v3786
      %3899 = vst [vmem:[%s393 + $0x230] sm:$0xff] %v3787
      %3900 = vst [vmem:[%s393 + $0x238] sm:$0xff] %v3788
      %3901 = vst [vmem:[%s393 + $0x240] sm:$0xff] %v3789
      %3902 = vst [vmem:[%s393 + $0x248] sm:$0xff] %v3790
      %3903 = vst [vmem:[%s393 + $0x250] sm:$0xff] %v3791
      %3904 = vst [vmem:[%s393 + $0x258] sm:$0xff] %v3792
      %3905 = vst.msk [vmem:[%s393 + $0x260] sm:$0xff] %vm709, %v3793
      %3906 = vst [vmem:[%s393 + $0x268] sm:$0xff] %v3794
      %3907 = vst [vmem:[%s393 + $0x270] sm:$0xff] %v3795
      %3908 = vst [vmem:[%s393 + $0x278] sm:$0xff] %v3796
      %3909 = vst [vmem:[%s393 + $0x280] sm:$0xff] %v3797
      %3910 = vst [vmem:[%s393 + $0x288] sm:$0xff] %v3798
      %3911 = vst [vmem:[%s393 + $0x290] sm:$0xff] %v3799
      %3912 = vst.msk [vmem:[%s393 + $0x298] sm:$0xff] %vm709, %v3800
      %3913 = vst [vmem:[%s393 + $0x2a0] sm:$0xff] %v3801
      %3914 = vst [vmem:[%s393 + $0x2a8] sm:$0xff] %v3802
      %3915 = vst [vmem:[%s393 + $0x2b0] sm:$0xff] %v3803
      %3916 = vst [vmem:[%s393 + $0x2b8] sm:$0xff] %v3804
      %3917 = vst [vmem:[%s393 + $0x2c0] sm:$0xff] %v3805
      %3918 = vst [vmem:[%s393 + $0x2c8] sm:$0xff] %v3806
      %3919 = vst.msk [vmem:[%s393 + $0x2d0] sm:$0xff] %vm709, %v3807
      %3920 = vst [vmem:[%s393 + $0x2d8] sm:$0xff] %v3808
      %3921 = vst [vmem:[%s393 + $0x2e0] sm:$0xff] %v3809
      %3922 = vst [vmem:[%s393 + $0x2e8] sm:$0xff] %v3810
      %3923 = vst [vmem:[%s393 + $0x2f0] sm:$0xff] %v3811
      %3924 = vst [vmem:[%s393 + $0x2f8] sm:$0xff] %v3812
      %3925 = vst [vmem:[%s393 + $0x300] sm:$0xff] %v3813
      %3926 = vst.msk [vmem:[%s393 + $0x308] sm:$0xff] %vm709, %v3814
      %3927 = vst [vmem:[%s393 + $0x310] sm:$0xff] %v3815
      %3928 = vst [vmem:[%s393 + $0x318] sm:$0xff] %v3816
      %3929 = vst [vmem:[%s393 + $0x320] sm:$0xff] %v3817
      %3930 = vst [vmem:[%s393 + $0x328] sm:$0xff] %v3818
      %3931 = vst [vmem:[%s393 + $0x330] sm:$0xff] %v3819
      %3932 = vst [vmem:[%s393 + $0x338] sm:$0xff] %v3820
      %3933 = vst.msk [vmem:[%s393 + $0x340] sm:$0xff] %vm709, %v3821
      %3934 = vst [vmem:[%s393 + $0x348] sm:$0xff] %v3822
      %3935 = vst [vmem:[%s393 + $0x350] sm:$0xff] %v3823
      %3936 = vst [vmem:[%s393 + $0x358] sm:$0xff] %v3824
      %3937 = vst [vmem:[%s393 + $0x360] sm:$0xff] %v3825
      %3938 = vst [vmem:[%s393 + $0x368] sm:$0xff] %v3826
      %3939 = vst [vmem:[%s393 + $0x370] sm:$0xff] %v3827
      %3940 = vst.msk [vmem:[%s393 + $0x378] sm:$0xff] %vm709, %v3828
      %s3941 = smul.u32 16, %s22
      %p3942 = scmp.lt.s32.totalorder %s3941, 31
      %s3943 = scalar_select %p3942, %s3941, 31
      %s3944 = smul.addr %s3943, 7
      %s3945 = smul.addr %s3944, 8
      %s3946 = scalar_lea.vmem %s11, %s3945
      // Predicated region
      $region65: #{tpu_custom_call.1} parent=63 // pred_check
        %p3947 = pneg %p276
      $region66: #{tpu_custom_call.1} parent=63 // pred_check_branch
        %3949 = sbr.rel (%p3947) target = $region68
      $region67: #{tpu_custom_call.1} parent=63 // pred_region
        %s3950 = smul.u32 16, %s22
      $region68: #{tpu_custom_call.1} parent=63 // pred_fallthru
        _
    $region64: #{tpu_custom_call.1} parent=5 // pred_fallthru
      _
    %p3951 = scmp.le.s32.totalorder 2, %s17
    // Predicated region
    $region69: #{tpu_custom_call.1} parent=5 // pred_check
      %p3952 = pneg %p3951
    $region70: #{tpu_custom_call.1} parent=5 // pred_check_branch
      %3954 = sbr.rel (%p3952) target = $region72
    $region71: #{tpu_custom_call.1} parent=5 // pred_region
      %s3955 = ssub.s32 %s17, 2
      // Predicated region
      $region73: #{tpu_custom_call.1} parent=71 // pred_check
        %p3956 = pneg %p282
      $region74: #{tpu_custom_call.1} parent=71 // pred_check_branch
        %3958 = sbr.rel (%p3956) target = $region76
      $region75: #{tpu_custom_call.1} parent=71 // pred_region
        %s3959 = smul.u32 16, %s23
        %p3960 = scmp.lt.s32.totalorder %s3959, 31
        %s3961 = scalar_select %p3960, %s3959, 31
        %s3962 = smul.addr %s3961, 7
        %s3963 = smul.addr %s3962, 8
        %s3964 = scalar_lea.vmem %s11, %s3963
      $region76: #{tpu_custom_call.1} parent=71 // pred_fallthru
        _
    $region72: #{tpu_custom_call.1} parent=5 // pred_fallthru
      _
  $region6: #{tpu_custom_call.1} parent=0 // loop_footer
    %s21 = sadd.s32 1, %s17
  $region7: #{tpu_custom_call.1} parent=0 // loop_footer_branch
    %16 = sbr.rel target = $region3
  $region8: #{tpu_custom_call.1} parent=0 // loop_exit
    _

</llo_original>
